<compile_context>
chip_gen: v7x
topology: tpu7x:2x2x1
jax: 0.10.0
libtpu: 0.0.40
codegen_flags: <defaults>
</compile_context>

<pallas_src>
import functools
import math

import jax
import jax.numpy as jnp
from jax import lax
from jax.experimental import pallas as pl
from jax.experimental.pallas import tpu as pltpu


def _vmem_capacity_bytes():
    """Best-effort physical VMEM capacity; falls back to the v7x 64 MiB floor."""
    try:
        info = pltpu.get_tpu_info()
        return int(getattr(info, "vmem_capacity_bytes", 64 * 1024 * 1024))
    except Exception:
        return 64 * 1024 * 1024


def _mha_fused_kernel(h, d_k,
                      q_ref, k_ref, v_ref,
                      wq_ref, wk_ref, wv_ref, wo_ref,
                      bq_ref, bk_ref, bv_ref, bo_ref,
                      o_ref,
                      k_scr, v_scr, ctx_scr):
    """One (batch, q-tile) grid step.

    q_ref          : (1, TQ, D)  query activations (compute dtype, e.g. bf16)
    k_ref, v_ref   : (1, S, D)   raw key / value activations (only used at qi == 0)
    wq/wk/wv/wo_ref: (D, D)      pre-transposed weights (y = x @ W); wq carries 1/sqrt(d_k)
    b*_ref         : (1, D)      f32 biases (bq carries the scale)
    o_ref          : (1, TQ, D)  lane-dense output block (out dtype, default bf16)
    k_scr, v_scr   : (S, D)      persistent bf16 VMEM cache of projected K / V (per batch)
    ctx_scr        : (TQ, D)     bf16 staging for per-head contexts (out-projection input)
    """
    cdt = k_scr.dtype

    # ---- K/V projection: computed ONCE per batch (qi == 0), cached in VMEM scratch.
    # Correct because the qi axis is "arbitrary": all q-tiles of a batch run in
    # order on one core after the cache is filled.
    @pl.when(pl.program_id(1) == 0)
    def _():
        K = jnp.dot(k_ref[0], wk_ref[...], preferred_element_type=jnp.float32) + bk_ref[...]
        V = jnp.dot(v_ref[0], wv_ref[...], preferred_element_type=jnp.float32) + bv_ref[...]
        # Single bf16 cast right after the bias add (no per-head f32 slice + cast).
        k_scr[...] = K.astype(cdt)
        v_scr[...] = V.astype(cdt)

    # ---- Q projection for this q-tile (scale already folded into wq / bq).
    Q = (jnp.dot(q_ref[0], wq_ref[...], preferred_element_type=jnp.float32)
         + bq_ref[...]).astype(cdt)                                    # (TQ, D)
    Kc = k_scr[...]                                                    # (S, D)  bf16
    Vc = v_scr[...]                                                    # (S, D)  bf16

    # ---- Per-head scaled-dot-product attention (h is small -> static unroll).
    # NOTE: for d_k < 128 the per-head column slices cross lane-tile boundaries
    # (XLU relayouts); acceptable at small d_k, revisit layout for d_k >= 128.
    for hi in range(h):
        sl = slice(hi * d_k, (hi + 1) * d_k)
        q_h = Q[:, sl]                     # (TQ, d_k) bf16
        k_h = Kc[:, sl]                    # (S,  d_k) bf16
        v_h = Vc[:, sl]                    # (S,  d_k) bf16

        # scores = q_h . k_h^T, contracting d_k of both operands (no K.T copy)
        s = lax.dot_general(q_h, k_h, (((1,), (1,)), ((), ())),
                            preferred_element_type=jnp.float32)       # (TQ, S) f32

        # max-stabilized softmax in f32; denominator via EUP approximate reciprocal
        m = jnp.max(s, axis=-1, keepdims=True)
        e = jnp.exp(s - m)
        l = jnp.sum(e, axis=-1, keepdims=True)
        p = (e * pl.reciprocal(l, approx=True)).astype(cdt)           # (TQ, S) bf16

        # Stage this head's context into its lane-contiguous column slot.
        ctx_scr[:, sl] = jnp.dot(p, v_h,
                                 preferred_element_type=jnp.float32).astype(cdt)

    # ---- ONE wide output projection: full-depth D contraction on the MXU.
    out = jnp.dot(ctx_scr[...], wo_ref[...],
                  preferred_element_type=jnp.float32) + bo_ref[...]
    o_ref[0] = out.astype(o_ref.dtype)


def multi_head_attention(query, key, value, params, *, h, q_tile=None,
                         compute_dtype=jnp.bfloat16, out_dtype=None):
    """Pallas implementation of MultiHeadAttention.forward (mask=None, eval dropout)."""
    B, S, D = query.shape
    assert D % h == 0
    d_k = D // h
    scale = 1.0 / math.sqrt(d_k)
    out_dtype = compute_dtype if out_dtype is None else out_dtype

    vmem_cap = _vmem_capacity_bytes()
    if q_tile is None:
        # 128 MiB parts (v5e/v6e) have headroom for 512-row Q tiles; keep 256 on v7x.
        base = 512 if vmem_cap >= 100 * 1024 * 1024 else 256
        q_tile = S if S <= base else base
    assert S % q_tile == 0, "TODO(synk): pad/mask ragged S to a multiple of the q tile"
    n_q = S // q_tile

    # PyTorch nn.Linear: y = x @ W.T + b with W of shape (out, in).
    # Pre-transpose to (in, out) so the kernel does lane-dense x @ W.
    # Fold 1/sqrt(d_k) into Wq / bq in f32, then cast weights to the MXU dtype.
    wq = (params["Wq"].T * scale).astype(compute_dtype)
    wk = params["Wk"].T.astype(compute_dtype)
    wv = params["Wv"].T.astype(compute_dtype)
    wo = params["Wo"].T.astype(compute_dtype)           # rows ordered [head, d_k]
    bq = (params["bq"] * scale).reshape(1, D).astype(jnp.float32)
    bk = params["bk"].reshape(1, D).astype(jnp.float32)
    bv = params["bv"].reshape(1, D).astype(jnp.float32)
    bo = params["bo"].reshape(1, D).astype(jnp.float32)

    q_in = query.astype(compute_dtype)
    k_in = key.astype(compute_dtype)
    v_in = value.astype(compute_dtype)

    kernel = functools.partial(_mha_fused_kernel, h, d_k)

    def build(single_buffer):
        def spec(shape, index_map, single):
            # Blocks whose index never (weights/biases) or rarely (K/V, per batch)
            # changes do not need double-buffering -> halves their VMEM footprint.
            if single and hasattr(pl, "Buffered"):
                try:
                    return pl.BlockSpec(shape, index_map, pipeline_mode=pl.Buffered(1))
                except TypeError:
                    pass
            return pl.BlockSpec(shape, index_map)

        cbytes = jnp.dtype(compute_dtype).itemsize
        obytes = jnp.dtype(out_dtype).itemsize
        nbuf = 1 if single_buffer else 2
        vmem_needed = (
            4 * D * D * cbytes * nbuf                 # weights
            + 4 * D * 4 * nbuf                        # biases (f32)
            + 2 * S * D * cbytes * nbuf               # key/value input blocks
            + q_tile * D * cbytes * 2                 # query tile (double buffered)
            + q_tile * D * obytes * 2                 # output tile (double buffered)
            + (2 * S * D + q_tile * D) * cbytes       # K/V cache + ctx scratch
        )
        # Per-generation VMEM limit: need + headroom, capped at 75% of physical VMEM,
        # never below the 32 MiB default scoped limit.
        vmem_limit = vmem_needed + 16 * 1024 * 1024
        vmem_limit = min(vmem_limit, int(0.75 * vmem_cap))
        vmem_limit = max(vmem_limit, 32 * 1024 * 1024)

        return pl.pallas_call(
            kernel,
            out_shape=jax.ShapeDtypeStruct((B, S, D), out_dtype),
            grid_spec=pltpu.PrefetchScalarGridSpec(
                num_scalar_prefetch=0,
                grid=(B, n_q),
                in_specs=[
                    pl.BlockSpec((1, q_tile, D), lambda b, qi: (b, qi, 0)),   # query tile
                    spec((1, S, D), lambda b, qi: (b, 0, 0), single_buffer),  # key (per batch)
                    spec((1, S, D), lambda b, qi: (b, 0, 0), single_buffer),  # value (per batch)
                    spec((D, D), lambda b, qi: (0, 0), single_buffer),        # Wq^T * scale
                    spec((D, D), lambda b, qi: (0, 0), single_buffer),        # Wk^T
                    spec((D, D), lambda b, qi: (0, 0), single_buffer),        # Wv^T
                    spec((D, D), lambda b, qi: (0, 0), single_buffer),        # Wo^T
                    spec((1, D), lambda b, qi: (0, 0), single_buffer),        # bq * scale
                    spec((1, D), lambda b, qi: (0, 0), single_buffer),        # bk
                    spec((1, D), lambda b, qi: (0, 0), single_buffer),        # bv
                    spec((1, D), lambda b, qi: (0, 0), single_buffer),        # bo
                ],
                out_specs=pl.BlockSpec((1, q_tile, D), lambda b, qi: (b, qi, 0)),
                scratch_shapes=[
                    pltpu.VMEM((S, D), compute_dtype),        # projected K cache
                    pltpu.VMEM((S, D), compute_dtype),        # projected V cache
                    pltpu.VMEM((q_tile, D), compute_dtype),   # per-head ctx staging
                ],
            ),
            compiler_params=pltpu.CompilerParams(
                # batch axis parallel (megacore shards whole batches; each core owns
                # its own K/V cache); qi axis arbitrary (cache carried across q-tiles).
                dimension_semantics=("parallel", "arbitrary"),
                vmem_limit_bytes=int(vmem_limit),
            ),
        )

    args = (q_in, k_in, v_in, wq, wk, wv, wo, bq, bk, bv, bo)
    try:
        return build(single_buffer=True)(*args)
    except Exception:
        # pl.Buffered(1) rejected by this jax/Mosaic version -> default buffering.
        return build(single_buffer=False)(*args)


def _reference_mha(query, key, value, params, *, h):
    """Plain-JAX f32 reference mirroring the PyTorch forward (mask=None, eval dropout)."""
    B, S, D = query.shape
    d_k = D // h

    def lin(x, W, b):
        return x @ W.T + b

    def split_heads(x):
        return x.reshape(B, S, h, d_k).transpose(0, 2, 1, 3)      # (B, h, S, d_k)

    Q = split_heads(lin(query, params["Wq"], params["bq"]))
    K = split_heads(lin(key, params["Wk"], params["bk"]))
    V = split_heads(lin(value, params["Wv"], params["bv"]))

    scores = jnp.einsum("bhqd,bhkd->bhqk", Q, K) / math.sqrt(d_k)
    p = jax.nn.softmax(scores, axis=-1)
    ctx = jnp.einsum("bhqk,bhkd->bhqd", p, V)
    x = ctx.transpose(0, 2, 1, 3).reshape(B, S, D)
    return lin(x, params["Wo"], params["bo"])


if __name__ == "__main__":
    B, S, d_model, h = 2, 8, 32, 4

    key0 = jax.random.PRNGKey(0)
    keys = jax.random.split(key0, 12)

    bound = 1.0 / math.sqrt(d_model)   # matches nn.Linear default init scale
    def w(k):
        return jax.random.uniform(k, (d_model, d_model), jnp.float32, -bound, bound)
    def b(k):
        return jax.random.uniform(k, (d_model,), jnp.float32, -bound, bound)

    params = {
        "Wq": w(keys[0]), "bq": b(keys[1]),
        "Wk": w(keys[2]), "bk": b(keys[3]),
        "Wv": w(keys[4]), "bv": b(keys[5]),
        "Wo": w(keys[6]), "bo": b(keys[7]),
    }

    query = jax.random.normal(keys[8], (B, S, d_model), jnp.float32)
    key_in = jax.random.normal(keys[9], (B, S, d_model), jnp.float32)
    value = jax.random.normal(keys[10], (B, S, d_model), jnp.float32)

    out = multi_head_attention(query, key_in, value, params, h=h)
    out = jax.block_until_ready(out)

    ref = _reference_mha(query, key_in, value, params, h=h)
    assert out.shape == (B, S, d_model)

    # bf16 compute path, f32 accumulation, bf16 output -> bf16-appropriate tolerance.
    out_f32 = out.astype(jnp.float32)
    err = float(jnp.max(jnp.abs(out_f32 - ref)))
    assert jnp.allclose(out_f32, ref, atol=4e-2, rtol=4e-2), \
        f"mismatch vs reference (max abs err {err})"

    print("KERNEL_OK")
</pallas_src>

<mosaic_0001>
module attributes {stable_mosaic.version = 11 : i64} {
  func.func @_mha_fused_kernel(%arg0: i32, %arg1: i32, %arg2: memref<1x8x32xbf16, #tpu.memory_space<vmem>>, %arg3: memref<1x8x32xbf16, #tpu.memory_space<vmem>>, %arg4: memref<1x8x32xbf16, #tpu.memory_space<vmem>>, %arg5: memref<32x32xbf16, #tpu.memory_space<vmem>>, %arg6: memref<32x32xbf16, #tpu.memory_space<vmem>>, %arg7: memref<32x32xbf16, #tpu.memory_space<vmem>>, %arg8: memref<32x32xbf16, #tpu.memory_space<vmem>>, %arg9: memref<1x32xf32, #tpu.memory_space<vmem>>, %arg10: memref<1x32xf32, #tpu.memory_space<vmem>>, %arg11: memref<1x32xf32, #tpu.memory_space<vmem>>, %arg12: memref<1x32xf32, #tpu.memory_space<vmem>>, %arg13: memref<1x8x32xbf16, #tpu.memory_space<vmem>>, %arg14: memref<8x32xbf16, #tpu.memory_space<vmem>>, %arg15: memref<8x32xbf16, #tpu.memory_space<vmem>>, %arg16: memref<8x32xbf16, #tpu.memory_space<vmem>>) attributes {dimension_semantics = [#tpu.dimension_semantics<parallel>, #tpu.dimension_semantics<arbitrary>], iteration_bounds = array<i64: 2, 1>, scalar_prefetch = 0 : i64, scratch_operands = 3 : i64, tpu.core_type = #tpu.core_type<tc>, window_params = [{transform_indices = @transform_0, window_bounds = array<i64: 1, 8, 32>}, {pipeline_mode = #tpu.pipeline_mode<synchronous>, transform_indices = @transform_1, window_bounds = array<i64: 1, 8, 32>}, {pipeline_mode = #tpu.pipeline_mode<synchronous>, transform_indices = @transform_2, window_bounds = array<i64: 1, 8, 32>}, {pipeline_mode = #tpu.pipeline_mode<synchronous>, transform_indices = @transform_3, window_bounds = array<i64: 32, 32>}, {pipeline_mode = #tpu.pipeline_mode<synchronous>, transform_indices = @transform_4, window_bounds = array<i64: 32, 32>}, {pipeline_mode = #tpu.pipeline_mode<synchronous>, transform_indices = @transform_5, window_bounds = array<i64: 32, 32>}, {pipeline_mode = #tpu.pipeline_mode<synchronous>, transform_indices = @transform_6, window_bounds = array<i64: 32, 32>}, {pipeline_mode = #tpu.pipeline_mode<synchronous>, transform_indices = @transform_7, window_bounds = array<i64: 1, 32>}, {pipeline_mode = #tpu.pipeline_mode<synchronous>, transform_indices = @transform_8, window_bounds = array<i64: 1, 32>}, {pipeline_mode = #tpu.pipeline_mode<synchronous>, transform_indices = @transform_9, window_bounds = array<i64: 1, 32>}, {pipeline_mode = #tpu.pipeline_mode<synchronous>, transform_indices = @transform_10, window_bounds = array<i64: 1, 32>}, {transform_indices = @transform_11, window_bounds = array<i64: 1, 8, 32>}]} {
    %c0_i32 = arith.constant 0 : i32
    %0 = arith.cmpi eq, %arg1, %c0_i32 : i32
    %1 = arith.extui %0 : i1 to i32
    %c0_i32_0 = arith.constant 0 : i32
    %2 = arith.cmpi ne, %1, %c0_i32_0 : i32
    scf.if %2 {
      %c0_42 = arith.constant 0 : index
      %c0_43 = arith.constant 0 : index
      %c0_44 = arith.constant 0 : index
      %95 = vector.load %arg3[%c0_42, %c0_43, %c0_44] : memref<1x8x32xbf16, #tpu.memory_space<vmem>>, vector<1x8x32xbf16>
      %96 = vector.shape_cast %95 : vector<1x8x32xbf16> to vector<8x32xbf16>
      %c0_45 = arith.constant 0 : index
      %c0_46 = arith.constant 0 : index
      %97 = vector.load %arg6[%c0_45, %c0_46] : memref<32x32xbf16, #tpu.memory_space<vmem>>, vector<32x32xbf16>
      %cst_47 = arith.constant dense<0.000000e+00> : vector<8x32xf32>
      %98 = tpu.matmul %96, %97, %cst_47 {dimension_numbers = #tpu.dot_dimension_numbers<[1], [0], [0], [1], [0, 0, 1, 1], [], []>} : vector<8x32xbf16>, vector<32x32xbf16>, vector<8x32xf32> -> vector<8x32xf32>
      %c0_48 = arith.constant 0 : index
      %c0_49 = arith.constant 0 : index
      %99 = vector.load %arg10[%c0_48, %c0_49] : memref<1x32xf32, #tpu.memory_space<vmem>>, vector<1x32xf32>
      %100 = vector.broadcast %99 : vector<1x32xf32> to vector<8x32xf32>
      %101 = arith.addf %98, %100 : vector<8x32xf32>
      %c0_50 = arith.constant 0 : index
      %c0_51 = arith.constant 0 : index
      %c0_52 = arith.constant 0 : index
      %102 = vector.load %arg4[%c0_50, %c0_51, %c0_52] : memref<1x8x32xbf16, #tpu.memory_space<vmem>>, vector<1x8x32xbf16>
      %103 = vector.shape_cast %102 : vector<1x8x32xbf16> to vector<8x32xbf16>
      %c0_53 = arith.constant 0 : index
      %c0_54 = arith.constant 0 : index
      %104 = vector.load %arg7[%c0_53, %c0_54] : memref<32x32xbf16, #tpu.memory_space<vmem>>, vector<32x32xbf16>
      %cst_55 = arith.constant dense<0.000000e+00> : vector<8x32xf32>
      %105 = tpu.matmul %103, %104, %cst_55 {dimension_numbers = #tpu.dot_dimension_numbers<[1], [0], [0], [1], [0, 0, 1, 1], [], []>} : vector<8x32xbf16>, vector<32x32xbf16>, vector<8x32xf32> -> vector<8x32xf32>
      %c0_56 = arith.constant 0 : index
      %c0_57 = arith.constant 0 : index
      %106 = vector.load %arg11[%c0_56, %c0_57] : memref<1x32xf32, #tpu.memory_space<vmem>>, vector<1x32xf32>
      %107 = vector.broadcast %106 : vector<1x32xf32> to vector<8x32xf32>
      %108 = arith.addf %105, %107 : vector<8x32xf32>
      %109 = arith.truncf %101 : vector<8x32xf32> to vector<8x32xbf16>
      %c0_58 = arith.constant 0 : index
      %c0_59 = arith.constant 0 : index
      %110 = vector.load %arg14[%c0_58, %c0_59] : memref<8x32xbf16, #tpu.memory_space<vmem>>, vector<8x32xbf16>
      tpu.vector_store %arg14[%c0_58, %c0_59], %109 {strides = array<i32>} : memref<8x32xbf16, #tpu.memory_space<vmem>>, vector<8x32xbf16>,
      %111 = arith.truncf %108 : vector<8x32xf32> to vector<8x32xbf16>
      %c0_60 = arith.constant 0 : index
      %c0_61 = arith.constant 0 : index
      %112 = vector.load %arg15[%c0_60, %c0_61] : memref<8x32xbf16, #tpu.memory_space<vmem>>, vector<8x32xbf16>
      tpu.vector_store %arg15[%c0_60, %c0_61], %111 {strides = array<i32>} : memref<8x32xbf16, #tpu.memory_space<vmem>>, vector<8x32xbf16>,
    } else {
    }
    %c0 = arith.constant 0 : index
    %c0_1 = arith.constant 0 : index
    %c0_2 = arith.constant 0 : index
    %3 = vector.load %arg2[%c0, %c0_1, %c0_2] : memref<1x8x32xbf16, #tpu.memory_space<vmem>>, vector<1x8x32xbf16>
    %4 = vector.shape_cast %3 : vector<1x8x32xbf16> to vector<8x32xbf16>
    %c0_3 = arith.constant 0 : index
    %c0_4 = arith.constant 0 : index
    %5 = vector.load %arg5[%c0_3, %c0_4] : memref<32x32xbf16, #tpu.memory_space<vmem>>, vector<32x32xbf16>
    %cst = arith.constant dense<0.000000e+00> : vector<8x32xf32>
    %6 = tpu.matmul %4, %5, %cst {dimension_numbers = #tpu.dot_dimension_numbers<[1], [0], [0], [1], [0, 0, 1, 1], [], []>} : vector<8x32xbf16>, vector<32x32xbf16>, vector<8x32xf32> -> vector<8x32xf32>
    %c0_5 = arith.constant 0 : index
    %c0_6 = arith.constant 0 : index
    %7 = vector.load %arg9[%c0_5, %c0_6] : memref<1x32xf32, #tpu.memory_space<vmem>>, vector<1x32xf32>
    %8 = vector.broadcast %7 : vector<1x32xf32> to vector<8x32xf32>
    %9 = arith.addf %6, %8 : vector<8x32xf32>
    %10 = arith.truncf %9 : vector<8x32xf32> to vector<8x32xbf16>
    %c0_7 = arith.constant 0 : index
    %c0_8 = arith.constant 0 : index
    %11 = vector.load %arg14[%c0_7, %c0_8] : memref<8x32xbf16, #tpu.memory_space<vmem>>, vector<8x32xbf16>
    %c0_9 = arith.constant 0 : index
    %c0_10 = arith.constant 0 : index
    %12 = vector.load %arg15[%c0_9, %c0_10] : memref<8x32xbf16, #tpu.memory_space<vmem>>, vector<8x32xbf16>
    %13 = vector.extract_strided_slice %10 {offsets = [0, 0], sizes = [8, 8], strides = [1, 1]} : vector<8x32xbf16> to vector<8x8xbf16>
    %14 = vector.extract_strided_slice %11 {offsets = [0, 0], sizes = [8, 8], strides = [1, 1]} : vector<8x32xbf16> to vector<8x8xbf16>
    %15 = vector.extract_strided_slice %12 {offsets = [0, 0], sizes = [8, 8], strides = [1, 1]} : vector<8x32xbf16> to vector<8x8xbf16>
    %cst_11 = arith.constant dense<0.000000e+00> : vector<8x8xf32>
    %16 = tpu.matmul %13, %14, %cst_11 {dimension_numbers = #tpu.dot_dimension_numbers<[1], [1], [0], [0], [0, 0, 1, 0], [], []>} : vector<8x8xbf16>, vector<8x8xbf16>, vector<8x8xf32> -> vector<8x8xf32>
    %cst_12 = arith.constant dense<0xFF800000> : vector<8xf32>
    %17 = vector.multi_reduction <maximumf>, %16, %cst_12 [1] : vector<8x8xf32> to vector<8xf32>
    %18 = vector.shape_cast %17 : vector<8xf32> to vector<8x1xf32>
    %19 = vector.broadcast %18 : vector<8x1xf32> to vector<8x8xf32>
    %20 = arith.subf %16, %19 : vector<8x8xf32>
    %21 = math.exp %20 : vector<8x8xf32>
    %cst_13 = arith.constant dense<0.000000e+00> : vector<8xf32>
    %22 = vector.multi_reduction <add>, %21, %cst_13 [1] : vector<8x8xf32> to vector<8xf32>
    %23 = vector.shape_cast %22 : vector<8xf32> to vector<8x1xf32>
    %24 = tpu.reciprocal %23 {approx = true} : vector<8x1xf32> -> vector<8x1xf32>
    %25 = vector.broadcast %24 : vector<8x1xf32> to vector<8x8xf32>
    %26 = arith.mulf %21, %25 : vector<8x8xf32>
    %27 = arith.truncf %26 : vector<8x8xf32> to vector<8x8xbf16>
    %cst_14 = arith.constant dense<0.000000e+00> : vector<8x8xf32>
    %28 = tpu.matmul %27, %15, %cst_14 {dimension_numbers = #tpu.dot_dimension_numbers<[1], [0], [0], [1], [0, 0, 1, 1], [], []>} : vector<8x8xbf16>, vector<8x8xbf16>, vector<8x8xf32> -> vector<8x8xf32>
    %29 = arith.truncf %28 : vector<8x8xf32> to vector<8x8xbf16>
    %c0_15 = arith.constant 0 : index
    %c0_16 = arith.constant 0 : index
    %30 = vector.load %arg16[%c0_15, %c0_16] : memref<8x32xbf16, #tpu.memory_space<vmem>>, vector<8x8xbf16>
    tpu.vector_store %arg16[%c0_15, %c0_16], %29 {strides = array<i32>} : memref<8x32xbf16, #tpu.memory_space<vmem>>, vector<8x8xbf16>,
    %31 = vector.extract_strided_slice %10 {offsets = [0, 8], sizes = [8, 8], strides = [1, 1]} : vector<8x32xbf16> to vector<8x8xbf16>
    %32 = vector.extract_strided_slice %11 {offsets = [0, 8], sizes = [8, 8], strides = [1, 1]} : vector<8x32xbf16> to vector<8x8xbf16>
    %33 = vector.extract_strided_slice %12 {offsets = [0, 8], sizes = [8, 8], strides = [1, 1]} : vector<8x32xbf16> to vector<8x8xbf16>
    %cst_17 = arith.constant dense<0.000000e+00> : vector<8x8xf32>
    %34 = tpu.matmul %31, %32, %cst_17 {dimension_numbers = #tpu.dot_dimension_numbers<[1], [1], [0], [0], [0, 0, 1, 0], [], []>} : vector<8x8xbf16>, vector<8x8xbf16>, vector<8x8xf32> -> vector<8x8xf32>
    %cst_18 = arith.constant dense<0xFF800000> : vector<8xf32>
    %35 = vector.multi_reduction <maximumf>, %34, %cst_18 [1] : vector<8x8xf32> to vector<8xf32>
    %36 = vector.shape_cast %35 : vector<8xf32> to vector<8x1xf32>
    %37 = vector.broadcast %36 : vector<8x1xf32> to vector<8x8xf32>
    %38 = arith.subf %34, %37 : vector<8x8xf32>
    %39 = math.exp %38 : vector<8x8xf32>
    %cst_19 = arith.constant dense<0.000000e+00> : vector<8xf32>
    %40 = vector.multi_reduction <add>, %39, %cst_19 [1] : vector<8x8xf32> to vector<8xf32>
    %41 = vector.shape_cast %40 : vector<8xf32> to vector<8x1xf32>
    %42 = tpu.reciprocal %41 {approx = true} : vector<8x1xf32> -> vector<8x1xf32>
    %43 = vector.broadcast %42 : vector<8x1xf32> to vector<8x8xf32>
    %44 = arith.mulf %39, %43 : vector<8x8xf32>
    %45 = arith.truncf %44 : vector<8x8xf32> to vector<8x8xbf16>
    %cst_20 = arith.constant dense<0.000000e+00> : vector<8x8xf32>
    %46 = tpu.matmul %45, %33, %cst_20 {dimension_numbers = #tpu.dot_dimension_numbers<[1], [0], [0], [1], [0, 0, 1, 1], [], []>} : vector<8x8xbf16>, vector<8x8xbf16>, vector<8x8xf32> -> vector<8x8xf32>
    %47 = arith.truncf %46 : vector<8x8xf32> to vector<8x8xbf16>
    %c0_21 = arith.constant 0 : index
    %c8 = arith.constant 8 : index
    %48 = vector.load %arg16[%c0_21, %c8] : memref<8x32xbf16, #tpu.memory_space<vmem>>, vector<8x8xbf16>
    tpu.vector_store %arg16[%c0_21, %c8], %47 {strides = array<i32>} : memref<8x32xbf16, #tpu.memory_space<vmem>>, vector<8x8xbf16>,
    %49 = vector.extract_strided_slice %10 {offsets = [0, 16], sizes = [8, 8], strides = [1, 1]} : vector<8x32xbf16> to vector<8x8xbf16>
    %50 = vector.extract_strided_slice %11 {offsets = [0, 16], sizes = [8, 8], strides = [1, 1]} : vector<8x32xbf16> to vector<8x8xbf16>
    %51 = vector.extract_strided_slice %12 {offsets = [0, 16], sizes = [8, 8], strides = [1, 1]} : vector<8x32xbf16> to vector<8x8xbf16>
    %cst_22 = arith.constant dense<0.000000e+00> : vector<8x8xf32>
    %52 = tpu.matmul %49, %50, %cst_22 {dimension_numbers = #tpu.dot_dimension_numbers<[1], [1], [0], [0], [0, 0, 1, 0], [], []>} : vector<8x8xbf16>, vector<8x8xbf16>, vector<8x8xf32> -> vector<8x8xf32>
    %cst_23 = arith.constant dense<0xFF800000> : vector<8xf32>
    %53 = vector.multi_reduction <maximumf>, %52, %cst_23 [1] : vector<8x8xf32> to vector<8xf32>
    %54 = vector.shape_cast %53 : vector<8xf32> to vector<8x1xf32>
    %55 = vector.broadcast %54 : vector<8x1xf32> to vector<8x8xf32>
    %56 = arith.subf %52, %55 : vector<8x8xf32>
    %57 = math.exp %56 : vector<8x8xf32>
    %cst_24 = arith.constant dense<0.000000e+00> : vector<8xf32>
    %58 = vector.multi_reduction <add>, %57, %cst_24 [1] : vector<8x8xf32> to vector<8xf32>
    %59 = vector.shape_cast %58 : vector<8xf32> to vector<8x1xf32>
    %60 = tpu.reciprocal %59 {approx = true} : vector<8x1xf32> -> vector<8x1xf32>
    %61 = vector.broadcast %60 : vector<8x1xf32> to vector<8x8xf32>
    %62 = arith.mulf %57, %61 : vector<8x8xf32>
    %63 = arith.truncf %62 : vector<8x8xf32> to vector<8x8xbf16>
    %cst_25 = arith.constant dense<0.000000e+00> : vector<8x8xf32>
    %64 = tpu.matmul %63, %51, %cst_25 {dimension_numbers = #tpu.dot_dimension_numbers<[1], [0], [0], [1], [0, 0, 1, 1], [], []>} : vector<8x8xbf16>, vector<8x8xbf16>, vector<8x8xf32> -> vector<8x8xf32>
    %65 = arith.truncf %64 : vector<8x8xf32> to vector<8x8xbf16>
    %c0_26 = arith.constant 0 : index
    %c16 = arith.constant 16 : index
    %66 = vector.load %arg16[%c0_26, %c16] : memref<8x32xbf16, #tpu.memory_space<vmem>>, vector<8x8xbf16>
    tpu.vector_store %arg16[%c0_26, %c16], %65 {strides = array<i32>} : memref<8x32xbf16, #tpu.memory_space<vmem>>, vector<8x8xbf16>,
    %67 = vector.extract_strided_slice %10 {offsets = [0, 24], sizes = [8, 8], strides = [1, 1]} : vector<8x32xbf16> to vector<8x8xbf16>
    %68 = vector.extract_strided_slice %11 {offsets = [0, 24], sizes = [8, 8], strides = [1, 1]} : vector<8x32xbf16> to vector<8x8xbf16>
    %69 = vector.extract_strided_slice %12 {offsets = [0, 24], sizes = [8, 8], strides = [1, 1]} : vector<8x32xbf16> to vector<8x8xbf16>
    %cst_27 = arith.constant dense<0.000000e+00> : vector<8x8xf32>
    %70 = tpu.matmul %67, %68, %cst_27 {dimension_numbers = #tpu.dot_dimension_numbers<[1], [1], [0], [0], [0, 0, 1, 0], [], []>} : vector<8x8xbf16>, vector<8x8xbf16>, vector<8x8xf32> -> vector<8x8xf32>
    %cst_28 = arith.constant dense<0xFF800000> : vector<8xf32>
    %71 = vector.multi_reduction <maximumf>, %70, %cst_28 [1] : vector<8x8xf32> to vector<8xf32>
    %72 = vector.shape_cast %71 : vector<8xf32> to vector<8x1xf32>
    %73 = vector.broadcast %72 : vector<8x1xf32> to vector<8x8xf32>
    %74 = arith.subf %70, %73 : vector<8x8xf32>
    %75 = math.exp %74 : vector<8x8xf32>
    %cst_29 = arith.constant dense<0.000000e+00> : vector<8xf32>
    %76 = vector.multi_reduction <add>, %75, %cst_29 [1] : vector<8x8xf32> to vector<8xf32>
    %77 = vector.shape_cast %76 : vector<8xf32> to vector<8x1xf32>
    %78 = tpu.reciprocal %77 {approx = true} : vector<8x1xf32> -> vector<8x1xf32>
    %79 = vector.broadcast %78 : vector<8x1xf32> to vector<8x8xf32>
    %80 = arith.mulf %75, %79 : vector<8x8xf32>
    %81 = arith.truncf %80 : vector<8x8xf32> to vector<8x8xbf16>
    %cst_30 = arith.constant dense<0.000000e+00> : vector<8x8xf32>
    %82 = tpu.matmul %81, %69, %cst_30 {dimension_numbers = #tpu.dot_dimension_numbers<[1], [0], [0], [1], [0, 0, 1, 1], [], []>} : vector<8x8xbf16>, vector<8x8xbf16>, vector<8x8xf32> -> vector<8x8xf32>
    %83 = arith.truncf %82 : vector<8x8xf32> to vector<8x8xbf16>
    %c0_31 = arith.constant 0 : index
    %c24 = arith.constant 24 : index
    %84 = vector.load %arg16[%c0_31, %c24] : memref<8x32xbf16, #tpu.memory_space<vmem>>, vector<8x8xbf16>
    tpu.vector_store %arg16[%c0_31, %c24], %83 {strides = array<i32>} : memref<8x32xbf16, #tpu.memory_space<vmem>>, vector<8x8xbf16>,
    %c0_32 = arith.constant 0 : index
    %c0_33 = arith.constant 0 : index
    %85 = vector.load %arg16[%c0_32, %c0_33] : memref<8x32xbf16, #tpu.memory_space<vmem>>, vector<8x32xbf16>
    %c0_34 = arith.constant 0 : index
    %c0_35 = arith.constant 0 : index
    %86 = vector.load %arg8[%c0_34, %c0_35] : memref<32x32xbf16, #tpu.memory_space<vmem>>, vector<32x32xbf16>
    %cst_36 = arith.constant dense<0.000000e+00> : vector<8x32xf32>
    %87 = tpu.matmul %85, %86, %cst_36 {dimension_numbers = #tpu.dot_dimension_numbers<[1], [0], [0], [1], [0, 0, 1, 1], [], []>} : vector<8x32xbf16>, vector<32x32xbf16>, vector<8x32xf32> -> vector<8x32xf32>
    %c0_37 = arith.constant 0 : index
    %c0_38 = arith.constant 0 : index
    %88 = vector.load %arg12[%c0_37, %c0_38] : memref<1x32xf32, #tpu.memory_space<vmem>>, vector<1x32xf32>
    %89 = vector.broadcast %88 : vector<1x32xf32> to vector<8x32xf32>
    %90 = arith.addf %87, %89 : vector<8x32xf32>
    %91 = arith.truncf %90 : vector<8x32xf32> to vector<8x32xbf16>
    %c0_39 = arith.constant 0 : index
    %c0_40 = arith.constant 0 : index
    %c0_41 = arith.constant 0 : index
    %92 = vector.load %arg13[%c0_39, %c0_40, %c0_41] : memref<1x8x32xbf16, #tpu.memory_space<vmem>>, vector<1x8x32xbf16>
    %93 = vector.shape_cast %92 : vector<1x8x32xbf16> to vector<8x32xbf16>
    %94 = vector.shape_cast %91 : vector<8x32xbf16> to vector<1x8x32xbf16>
    tpu.vector_store %arg13[%c0_39, %c0_40, %c0_41], %94 {strides = array<i32>} : memref<1x8x32xbf16, #tpu.memory_space<vmem>>, vector<1x8x32xbf16>,
    return
  }
  func.func @transform_0(%arg0: i32, %arg1: i32) -> (i32, i32, i32) {
    %c0_i32 = arith.constant 0 : i32
    %c0_i32_0 = arith.constant 0 : i32
    return %arg0, %arg1, %c0_i32 : i32, i32, i32
  }
  func.func @transform_1(%arg0: i32, %arg1: i32) -> (i32, i32, i32) {
    %c0_i32 = arith.constant 0 : i32
    %c0_i32_0 = arith.constant 0 : i32
    %c0_i32_1 = arith.constant 0 : i32
    return %arg0, %c0_i32, %c0_i32_0 : i32, i32, i32
  }
  func.func @transform_2(%arg0: i32, %arg1: i32) -> (i32, i32, i32) {
    %c0_i32 = arith.constant 0 : i32
    %c0_i32_0 = arith.constant 0 : i32
    %c0_i32_1 = arith.constant 0 : i32
    return %arg0, %c0_i32, %c0_i32_0 : i32, i32, i32
  }
  func.func @transform_3(%arg0: i32, %arg1: i32) -> (i32, i32) {
    %c0_i32 = arith.constant 0 : i32
    %c0_i32_0 = arith.constant 0 : i32
    %c0_i32_1 = arith.constant 0 : i32
    return %c0_i32, %c0_i32_0 : i32, i32
  }
  func.func @transform_4(%arg0: i32, %arg1: i32) -> (i32, i32) {
    %c0_i32 = arith.constant 0 : i32
    %c0_i32_0 = arith.constant 0 : i32
    %c0_i32_1 = arith.constant 0 : i32
    return %c0_i32, %c0_i32_0 : i32, i32
  }
  func.func @transform_5(%arg0: i32, %arg1: i32) -> (i32, i32) {
    %c0_i32 = arith.constant 0 : i32
    %c0_i32_0 = arith.constant 0 : i32
    %c0_i32_1 = arith.constant 0 : i32
    return %c0_i32, %c0_i32_0 : i32, i32
  }
  func.func @transform_6(%arg0: i32, %arg1: i32) -> (i32, i32) {
    %c0_i32 = arith.constant 0 : i32
    %c0_i32_0 = arith.constant 0 : i32
    %c0_i32_1 = arith.constant 0 : i32
    return %c0_i32, %c0_i32_0 : i32, i32
  }
  func.func @transform_7(%arg0: i32, %arg1: i32) -> (i32, i32) {
    %c0_i32 = arith.constant 0 : i32
    %c0_i32_0 = arith.constant 0 : i32
    %c0_i32_1 = arith.constant 0 : i32
    return %c0_i32, %c0_i32_0 : i32, i32
  }
  func.func @transform_8(%arg0: i32, %arg1: i32) -> (i32, i32) {
    %c0_i32 = arith.constant 0 : i32
    %c0_i32_0 = arith.constant 0 : i32
    %c0_i32_1 = arith.constant 0 : i32
    return %c0_i32, %c0_i32_0 : i32, i32
  }
  func.func @transform_9(%arg0: i32, %arg1: i32) -> (i32, i32) {
    %c0_i32 = arith.constant 0 : i32
    %c0_i32_0 = arith.constant 0 : i32
    %c0_i32_1 = arith.constant 0 : i32
    return %c0_i32, %c0_i32_0 : i32, i32
  }
  func.func @transform_10(%arg0: i32, %arg1: i32) -> (i32, i32) {
    %c0_i32 = arith.constant 0 : i32
    %c0_i32_0 = arith.constant 0 : i32
    %c0_i32_1 = arith.constant 0 : i32
    return %c0_i32, %c0_i32_0 : i32, i32
  }
  func.func @transform_11(%arg0: i32, %arg1: i32) -> (i32, i32, i32) {
    %c0_i32 = arith.constant 0 : i32
    %c0_i32_0 = arith.constant 0 : i32
    return %arg0, %arg1, %c0_i32 : i32, i32, i32
  }
}

module attributes {stable_mosaic.version = 11 : i64} {
  func.func @_mha_fused_kernel(%arg0: i32, %arg1: i32, %arg2: memref<1x8x32xbf16, #tpu.memory_space<vmem>>, %arg3: memref<1x8x32xbf16, #tpu.memory_space<vmem>>, %arg4: memref<1x8x32xbf16, #tpu.memory_space<vmem>>, %arg5: memref<32x32xbf16, #tpu.memory_space<vmem>>, %arg6: memref<32x32xbf16, #tpu.memory_space<vmem>>, %arg7: memref<32x32xbf16, #tpu.memory_space<vmem>>, %arg8: memref<32x32xbf16, #tpu.memory_space<vmem>>, %arg9: memref<1x32xf32, #tpu.memory_space<vmem>>, %arg10: memref<1x32xf32, #tpu.memory_space<vmem>>, %arg11: memref<1x32xf32, #tpu.memory_space<vmem>>, %arg12: memref<1x32xf32, #tpu.memory_space<vmem>>, %arg13: memref<1x8x32xbf16, #tpu.memory_space<vmem>>, %arg14: memref<8x32xbf16, #tpu.memory_space<vmem>>, %arg15: memref<8x32xbf16, #tpu.memory_space<vmem>>, %arg16: memref<8x32xbf16, #tpu.memory_space<vmem>>) attributes {dimension_semantics = [#tpu.dimension_semantics<parallel>, #tpu.dimension_semantics<arbitrary>], iteration_bounds = array<i64: 2, 1>, scalar_prefetch = 0 : i64, scratch_operands = 3 : i64, tpu.core_type = #tpu.core_type<tc>, window_params = [{transform_indices = @transform_0, window_bounds = array<i64: 1, 8, 32>}, {transform_indices = @transform_1, window_bounds = array<i64: 1, 8, 32>}, {transform_indices = @transform_2, window_bounds = array<i64: 1, 8, 32>}, {pipeline_mode = #tpu.pipeline_mode<synchronous>, transform_indices = @transform_3, window_bounds = array<i64: 32, 32>}, {pipeline_mode = #tpu.pipeline_mode<synchronous>, transform_indices = @transform_4, window_bounds = array<i64: 32, 32>}, {pipeline_mode = #tpu.pipeline_mode<synchronous>, transform_indices = @transform_5, window_bounds = array<i64: 32, 32>}, {pipeline_mode = #tpu.pipeline_mode<synchronous>, transform_indices = @transform_6, window_bounds = array<i64: 32, 32>}, {pipeline_mode = #tpu.pipeline_mode<synchronous>, transform_indices = @transform_7, window_bounds = array<i64: 1, 32>}, {pipeline_mode = #tpu.pipeline_mode<synchronous>, transform_indices = @transform_8, window_bounds = array<i64: 1, 32>}, {pipeline_mode = #tpu.pipeline_mode<synchronous>, transform_indices = @transform_9, window_bounds = array<i64: 1, 32>}, {pipeline_mode = #tpu.pipeline_mode<synchronous>, transform_indices = @transform_10, window_bounds = array<i64: 1, 32>}, {transform_indices = @transform_11, window_bounds = array<i64: 1, 8, 32>}]} {
    %c0_i32 = arith.constant 0 : i32
    %0 = arith.cmpi eq, %arg1, %c0_i32 : i32
    %1 = arith.extui %0 : i1 to i32
    %c0_i32_0 = arith.constant 0 : i32
    %2 = arith.cmpi ne, %1, %c0_i32_0 : i32
    scf.if %2 {
      %c0_42 = arith.constant 0 : index
      %c0_43 = arith.constant 0 : index
      %c0_44 = arith.constant 0 : index
      %95 = vector.load %arg3[%c0_42, %c0_43, %c0_44] : memref<1x8x32xbf16, #tpu.memory_space<vmem>>, vector<1x8x32xbf16>
      %96 = vector.shape_cast %95 : vector<1x8x32xbf16> to vector<8x32xbf16>
      %c0_45 = arith.constant 0 : index
      %c0_46 = arith.constant 0 : index
      %97 = vector.load %arg6[%c0_45, %c0_46] : memref<32x32xbf16, #tpu.memory_space<vmem>>, vector<32x32xbf16>
      %cst_47 = arith.constant dense<0.000000e+00> : vector<8x32xf32>
      %98 = tpu.matmul %96, %97, %cst_47 {dimension_numbers = #tpu.dot_dimension_numbers<[1], [0], [0], [1], [0, 0, 1, 1], [], []>} : vector<8x32xbf16>, vector<32x32xbf16>, vector<8x32xf32> -> vector<8x32xf32>
      %c0_48 = arith.constant 0 : index
      %c0_49 = arith.constant 0 : index
      %99 = vector.load %arg10[%c0_48, %c0_49] : memref<1x32xf32, #tpu.memory_space<vmem>>, vector<1x32xf32>
      %100 = vector.broadcast %99 : vector<1x32xf32> to vector<8x32xf32>
      %101 = arith.addf %98, %100 : vector<8x32xf32>
      %c0_50 = arith.constant 0 : index
      %c0_51 = arith.constant 0 : index
      %c0_52 = arith.constant 0 : index
      %102 = vector.load %arg4[%c0_50, %c0_51, %c0_52] : memref<1x8x32xbf16, #tpu.memory_space<vmem>>, vector<1x8x32xbf16>
      %103 = vector.shape_cast %102 : vector<1x8x32xbf16> to vector<8x32xbf16>
      %c0_53 = arith.constant 0 : index
      %c0_54 = arith.constant 0 : index
      %104 = vector.load %arg7[%c0_53, %c0_54] : memref<32x32xbf16, #tpu.memory_space<vmem>>, vector<32x32xbf16>
      %cst_55 = arith.constant dense<0.000000e+00> : vector<8x32xf32>
      %105 = tpu.matmul %103, %104, %cst_55 {dimension_numbers = #tpu.dot_dimension_numbers<[1], [0], [0], [1], [0, 0, 1, 1], [], []>} : vector<8x32xbf16>, vector<32x32xbf16>, vector<8x32xf32> -> vector<8x32xf32>
      %c0_56 = arith.constant 0 : index
      %c0_57 = arith.constant 0 : index
      %106 = vector.load %arg11[%c0_56, %c0_57] : memref<1x32xf32, #tpu.memory_space<vmem>>, vector<1x32xf32>
      %107 = vector.broadcast %106 : vector<1x32xf32> to vector<8x32xf32>
      %108 = arith.addf %105, %107 : vector<8x32xf32>
      %109 = arith.truncf %101 : vector<8x32xf32> to vector<8x32xbf16>
      %c0_58 = arith.constant 0 : index
      %c0_59 = arith.constant 0 : index
      %110 = vector.load %arg14[%c0_58, %c0_59] : memref<8x32xbf16, #tpu.memory_space<vmem>>, vector<8x32xbf16>
      tpu.vector_store %arg14[%c0_58, %c0_59], %109 {strides = array<i32>} : memref<8x32xbf16, #tpu.memory_space<vmem>>, vector<8x32xbf16>,
      %111 = arith.truncf %108 : vector<8x32xf32> to vector<8x32xbf16>
      %c0_60 = arith.constant 0 : index
      %c0_61 = arith.constant 0 : index
      %112 = vector.load %arg15[%c0_60, %c0_61] : memref<8x32xbf16, #tpu.memory_space<vmem>>, vector<8x32xbf16>
      tpu.vector_store %arg15[%c0_60, %c0_61], %111 {strides = array<i32>} : memref<8x32xbf16, #tpu.memory_space<vmem>>, vector<8x32xbf16>,
    } else {
    }
    %c0 = arith.constant 0 : index
    %c0_1 = arith.constant 0 : index
    %c0_2 = arith.constant 0 : index
    %3 = vector.load %arg2[%c0, %c0_1, %c0_2] : memref<1x8x32xbf16, #tpu.memory_space<vmem>>, vector<1x8x32xbf16>
    %4 = vector.shape_cast %3 : vector<1x8x32xbf16> to vector<8x32xbf16>
    %c0_3 = arith.constant 0 : index
    %c0_4 = arith.constant 0 : index
    %5 = vector.load %arg5[%c0_3, %c0_4] : memref<32x32xbf16, #tpu.memory_space<vmem>>, vector<32x32xbf16>
    %cst = arith.constant dense<0.000000e+00> : vector<8x32xf32>
    %6 = tpu.matmul %4, %5, %cst {dimension_numbers = #tpu.dot_dimension_numbers<[1], [0], [0], [1], [0, 0, 1, 1], [], []>} : vector<8x32xbf16>, vector<32x32xbf16>, vector<8x32xf32> -> vector<8x32xf32>
    %c0_5 = arith.constant 0 : index
    %c0_6 = arith.constant 0 : index
    %7 = vector.load %arg9[%c0_5, %c0_6] : memref<1x32xf32, #tpu.memory_space<vmem>>, vector<1x32xf32>
    %8 = vector.broadcast %7 : vector<1x32xf32> to vector<8x32xf32>
    %9 = arith.addf %6, %8 : vector<8x32xf32>
    %10 = arith.truncf %9 : vector<8x32xf32> to vector<8x32xbf16>
    %c0_7 = arith.constant 0 : index
    %c0_8 = arith.constant 0 : index
    %11 = vector.load %arg14[%c0_7, %c0_8] : memref<8x32xbf16, #tpu.memory_space<vmem>>, vector<8x32xbf16>
    %c0_9 = arith.constant 0 : index
    %c0_10 = arith.constant 0 : index
    %12 = vector.load %arg15[%c0_9, %c0_10] : memref<8x32xbf16, #tpu.memory_space<vmem>>, vector<8x32xbf16>
    %13 = vector.extract_strided_slice %10 {offsets = [0, 0], sizes = [8, 8], strides = [1, 1]} : vector<8x32xbf16> to vector<8x8xbf16>
    %14 = vector.extract_strided_slice %11 {offsets = [0, 0], sizes = [8, 8], strides = [1, 1]} : vector<8x32xbf16> to vector<8x8xbf16>
    %15 = vector.extract_strided_slice %12 {offsets = [0, 0], sizes = [8, 8], strides = [1, 1]} : vector<8x32xbf16> to vector<8x8xbf16>
    %cst_11 = arith.constant dense<0.000000e+00> : vector<8x8xf32>
    %16 = tpu.matmul %13, %14, %cst_11 {dimension_numbers = #tpu.dot_dimension_numbers<[1], [1], [0], [0], [0, 0, 1, 0], [], []>} : vector<8x8xbf16>, vector<8x8xbf16>, vector<8x8xf32> -> vector<8x8xf32>
    %cst_12 = arith.constant dense<0xFF800000> : vector<8xf32>
    %17 = vector.multi_reduction <maximumf>, %16, %cst_12 [1] : vector<8x8xf32> to vector<8xf32>
    %18 = vector.shape_cast %17 : vector<8xf32> to vector<8x1xf32>
    %19 = vector.broadcast %18 : vector<8x1xf32> to vector<8x8xf32>
    %20 = arith.subf %16, %19 : vector<8x8xf32>
    %21 = math.exp %20 : vector<8x8xf32>
    %cst_13 = arith.constant dense<0.000000e+00> : vector<8xf32>
    %22 = vector.multi_reduction <add>, %21, %cst_13 [1] : vector<8x8xf32> to vector<8xf32>
    %23 = vector.shape_cast %22 : vector<8xf32> to vector<8x1xf32>
    %24 = tpu.reciprocal %23 {approx = true} : vector<8x1xf32> -> vector<8x1xf32>
    %25 = vector.broadcast %24 : vector<8x1xf32> to vector<8x8xf32>
    %26 = arith.mulf %21, %25 : vector<8x8xf32>
    %27 = arith.truncf %26 : vector<8x8xf32> to vector<8x8xbf16>
    %cst_14 = arith.constant dense<0.000000e+00> : vector<8x8xf32>
    %28 = tpu.matmul %27, %15, %cst_14 {dimension_numbers = #tpu.dot_dimension_numbers<[1], [0], [0], [1], [0, 0, 1, 1], [], []>} : vector<8x8xbf16>, vector<8x8xbf16>, vector<8x8xf32> -> vector<8x8xf32>
    %29 = arith.truncf %28 : vector<8x8xf32> to vector<8x8xbf16>
    %c0_15 = arith.constant 0 : index
    %c0_16 = arith.constant 0 : index
    %30 = vector.load %arg16[%c0_15, %c0_16] : memref<8x32xbf16, #tpu.memory_space<vmem>>, vector<8x8xbf16>
    tpu.vector_store %arg16[%c0_15, %c0_16], %29 {strides = array<i32>} : memref<8x32xbf16, #tpu.memory_space<vmem>>, vector<8x8xbf16>,
    %31 = vector.extract_strided_slice %10 {offsets = [0, 8], sizes = [8, 8], strides = [1, 1]} : vector<8x32xbf16> to vector<8x8xbf16>
    %32 = vector.extract_strided_slice %11 {offsets = [0, 8], sizes = [8, 8], strides = [1, 1]} : vector<8x32xbf16> to vector<8x8xbf16>
    %33 = vector.extract_strided_slice %12 {offsets = [0, 8], sizes = [8, 8], strides = [1, 1]} : vector<8x32xbf16> to vector<8x8xbf16>
    %cst_17 = arith.constant dense<0.000000e+00> : vector<8x8xf32>
    %34 = tpu.matmul %31, %32, %cst_17 {dimension_numbers = #tpu.dot_dimension_numbers<[1], [1], [0], [0], [0, 0, 1, 0], [], []>} : vector<8x8xbf16>, vector<8x8xbf16>, vector<8x8xf32> -> vector<8x8xf32>
    %cst_18 = arith.constant dense<0xFF800000> : vector<8xf32>
    %35 = vector.multi_reduction <maximumf>, %34, %cst_18 [1] : vector<8x8xf32> to vector<8xf32>
    %36 = vector.shape_cast %35 : vector<8xf32> to vector<8x1xf32>
    %37 = vector.broadcast %36 : vector<8x1xf32> to vector<8x8xf32>
    %38 = arith.subf %34, %37 : vector<8x8xf32>
    %39 = math.exp %38 : vector<8x8xf32>
    %cst_19 = arith.constant dense<0.000000e+00> : vector<8xf32>
    %40 = vector.multi_reduction <add>, %39, %cst_19 [1] : vector<8x8xf32> to vector<8xf32>
    %41 = vector.shape_cast %40 : vector<8xf32> to vector<8x1xf32>
    %42 = tpu.reciprocal %41 {approx = true} : vector<8x1xf32> -> vector<8x1xf32>
    %43 = vector.broadcast %42 : vector<8x1xf32> to vector<8x8xf32>
    %44 = arith.mulf %39, %43 : vector<8x8xf32>
    %45 = arith.truncf %44 : vector<8x8xf32> to vector<8x8xbf16>
    %cst_20 = arith.constant dense<0.000000e+00> : vector<8x8xf32>
    %46 = tpu.matmul %45, %33, %cst_20 {dimension_numbers = #tpu.dot_dimension_numbers<[1], [0], [0], [1], [0, 0, 1, 1], [], []>} : vector<8x8xbf16>, vector<8x8xbf16>, vector<8x8xf32> -> vector<8x8xf32>
    %47 = arith.truncf %46 : vector<8x8xf32> to vector<8x8xbf16>
    %c0_21 = arith.constant 0 : index
    %c8 = arith.constant 8 : index
    %48 = vector.load %arg16[%c0_21, %c8] : memref<8x32xbf16, #tpu.memory_space<vmem>>, vector<8x8xbf16>
    tpu.vector_store %arg16[%c0_21, %c8], %47 {strides = array<i32>} : memref<8x32xbf16, #tpu.memory_space<vmem>>, vector<8x8xbf16>,
    %49 = vector.extract_strided_slice %10 {offsets = [0, 16], sizes = [8, 8], strides = [1, 1]} : vector<8x32xbf16> to vector<8x8xbf16>
    %50 = vector.extract_strided_slice %11 {offsets = [0, 16], sizes = [8, 8], strides = [1, 1]} : vector<8x32xbf16> to vector<8x8xbf16>
    %51 = vector.extract_strided_slice %12 {offsets = [0, 16], sizes = [8, 8], strides = [1, 1]} : vector<8x32xbf16> to vector<8x8xbf16>
    %cst_22 = arith.constant dense<0.000000e+00> : vector<8x8xf32>
    %52 = tpu.matmul %49, %50, %cst_22 {dimension_numbers = #tpu.dot_dimension_numbers<[1], [1], [0], [0], [0, 0, 1, 0], [], []>} : vector<8x8xbf16>, vector<8x8xbf16>, vector<8x8xf32> -> vector<8x8xf32>
    %cst_23 = arith.constant dense<0xFF800000> : vector<8xf32>
    %53 = vector.multi_reduction <maximumf>, %52, %cst_23 [1] : vector<8x8xf32> to vector<8xf32>
    %54 = vector.shape_cast %53 : vector<8xf32> to vector<8x1xf32>
    %55 = vector.broadcast %54 : vector<8x1xf32> to vector<8x8xf32>
    %56 = arith.subf %52, %55 : vector<8x8xf32>
    %57 = math.exp %56 : vector<8x8xf32>
    %cst_24 = arith.constant dense<0.000000e+00> : vector<8xf32>
    %58 = vector.multi_reduction <add>, %57, %cst_24 [1] : vector<8x8xf32> to vector<8xf32>
    %59 = vector.shape_cast %58 : vector<8xf32> to vector<8x1xf32>
    %60 = tpu.reciprocal %59 {approx = true} : vector<8x1xf32> -> vector<8x1xf32>
    %61 = vector.broadcast %60 : vector<8x1xf32> to vector<8x8xf32>
    %62 = arith.mulf %57, %61 : vector<8x8xf32>
    %63 = arith.truncf %62 : vector<8x8xf32> to vector<8x8xbf16>
    %cst_25 = arith.constant dense<0.000000e+00> : vector<8x8xf32>
    %64 = tpu.matmul %63, %51, %cst_25 {dimension_numbers = #tpu.dot_dimension_numbers<[1], [0], [0], [1], [0, 0, 1, 1], [], []>} : vector<8x8xbf16>, vector<8x8xbf16>, vector<8x8xf32> -> vector<8x8xf32>
    %65 = arith.truncf %64 : vector<8x8xf32> to vector<8x8xbf16>
    %c0_26 = arith.constant 0 : index
    %c16 = arith.constant 16 : index
    %66 = vector.load %arg16[%c0_26, %c16] : memref<8x32xbf16, #tpu.memory_space<vmem>>, vector<8x8xbf16>
    tpu.vector_store %arg16[%c0_26, %c16], %65 {strides = array<i32>} : memref<8x32xbf16, #tpu.memory_space<vmem>>, vector<8x8xbf16>,
    %67 = vector.extract_strided_slice %10 {offsets = [0, 24], sizes = [8, 8], strides = [1, 1]} : vector<8x32xbf16> to vector<8x8xbf16>
    %68 = vector.extract_strided_slice %11 {offsets = [0, 24], sizes = [8, 8], strides = [1, 1]} : vector<8x32xbf16> to vector<8x8xbf16>
    %69 = vector.extract_strided_slice %12 {offsets = [0, 24], sizes = [8, 8], strides = [1, 1]} : vector<8x32xbf16> to vector<8x8xbf16>
    %cst_27 = arith.constant dense<0.000000e+00> : vector<8x8xf32>
    %70 = tpu.matmul %67, %68, %cst_27 {dimension_numbers = #tpu.dot_dimension_numbers<[1], [1], [0], [0], [0, 0, 1, 0], [], []>} : vector<8x8xbf16>, vector<8x8xbf16>, vector<8x8xf32> -> vector<8x8xf32>
    %cst_28 = arith.constant dense<0xFF800000> : vector<8xf32>
    %71 = vector.multi_reduction <maximumf>, %70, %cst_28 [1] : vector<8x8xf32> to vector<8xf32>
    %72 = vector.shape_cast %71 : vector<8xf32> to vector<8x1xf32>
    %73 = vector.broadcast %72 : vector<8x1xf32> to vector<8x8xf32>
    %74 = arith.subf %70, %73 : vector<8x8xf32>
    %75 = math.exp %74 : vector<8x8xf32>
    %cst_29 = arith.constant dense<0.000000e+00> : vector<8xf32>
    %76 = vector.multi_reduction <add>, %75, %cst_29 [1] : vector<8x8xf32> to vector<8xf32>
    %77 = vector.shape_cast %76 : vector<8xf32> to vector<8x1xf32>
    %78 = tpu.reciprocal %77 {approx = true} : vector<8x1xf32> -> vector<8x1xf32>
    %79 = vector.broadcast %78 : vector<8x1xf32> to vector<8x8xf32>
    %80 = arith.mulf %75, %79 : vector<8x8xf32>
    %81 = arith.truncf %80 : vector<8x8xf32> to vector<8x8xbf16>
    %cst_30 = arith.constant dense<0.000000e+00> : vector<8x8xf32>
    %82 = tpu.matmul %81, %69, %cst_30 {dimension_numbers = #tpu.dot_dimension_numbers<[1], [0], [0], [1], [0, 0, 1, 1], [], []>} : vector<8x8xbf16>, vector<8x8xbf16>, vector<8x8xf32> -> vector<8x8xf32>
    %83 = arith.truncf %82 : vector<8x8xf32> to vector<8x8xbf16>
    %c0_31 = arith.constant 0 : index
    %c24 = arith.constant 24 : index
    %84 = vector.load %arg16[%c0_31, %c24] : memref<8x32xbf16, #tpu.memory_space<vmem>>, vector<8x8xbf16>
    tpu.vector_store %arg16[%c0_31, %c24], %83 {strides = array<i32>} : memref<8x32xbf16, #tpu.memory_space<vmem>>, vector<8x8xbf16>,
    %c0_32 = arith.constant 0 : index
    %c0_33 = arith.constant 0 : index
    %85 = vector.load %arg16[%c0_32, %c0_33] : memref<8x32xbf16, #tpu.memory_space<vmem>>, vector<8x32xbf16>
    %c0_34 = arith.constant 0 : index
    %c0_35 = arith.constant 0 : index
    %86 = vector.load %arg8[%c0_34, %c0_35] : memref<32x32xbf16, #tpu.memory_space<vmem>>, vector<32x32xbf16>
    %cst_36 = arith.constant dense<0.000000e+00> : vector<8x32xf32>
    %87 = tpu.matmul %85, %86, %cst_36 {dimension_numbers = #tpu.dot_dimension_numbers<[1], [0], [0], [1], [0, 0, 1, 1], [], []>} : vector<8x32xbf16>, vector<32x32xbf16>, vector<8x32xf32> -> vector<8x32xf32>
    %c0_37 = arith.constant 0 : index
    %c0_38 = arith.constant 0 : index
    %88 = vector.load %arg12[%c0_37, %c0_38] : memref<1x32xf32, #tpu.memory_space<vmem>>, vector<1x32xf32>
    %89 = vector.broadcast %88 : vector<1x32xf32> to vector<8x32xf32>
    %90 = arith.addf %87, %89 : vector<8x32xf32>
    %91 = arith.truncf %90 : vector<8x32xf32> to vector<8x32xbf16>
    %c0_39 = arith.constant 0 : index
    %c0_40 = arith.constant 0 : index
    %c0_41 = arith.constant 0 : index
    %92 = vector.load %arg13[%c0_39, %c0_40, %c0_41] : memref<1x8x32xbf16, #tpu.memory_space<vmem>>, vector<1x8x32xbf16>
    %93 = vector.shape_cast %92 : vector<1x8x32xbf16> to vector<8x32xbf16>
    %94 = vector.shape_cast %91 : vector<8x32xbf16> to vector<1x8x32xbf16>
    tpu.vector_store %arg13[%c0_39, %c0_40, %c0_41], %94 {strides = array<i32>} : memref<1x8x32xbf16, #tpu.memory_space<vmem>>, vector<1x8x32xbf16>,
    return
  }
  func.func @transform_0(%arg0: i32, %arg1: i32) -> (i32, i32, i32) {
    %c0_i32 = arith.constant 0 : i32
    %c0_i32_0 = arith.constant 0 : i32
    return %arg0, %arg1, %c0_i32 : i32, i32, i32
  }
  func.func @transform_1(%arg0: i32, %arg1: i32) -> (i32, i32, i32) {
    %c0_i32 = arith.constant 0 : i32
    %c0_i32_0 = arith.constant 0 : i32
    %c0_i32_1 = arith.constant 0 : i32
    return %arg0, %c0_i32, %c0_i32_0 : i32, i32, i32
  }
  func.func @transform_2(%arg0: i32, %arg1: i32) -> (i32, i32, i32) {
    %c0_i32 = arith.constant 0 : i32
    %c0_i32_0 = arith.constant 0 : i32
    %c0_i32_1 = arith.constant 0 : i32
    return %arg0, %c0_i32, %c0_i32_0 : i32, i32, i32
  }
  func.func @transform_3(%arg0: i32, %arg1: i32) -> (i32, i32) {
    %c0_i32 = arith.constant 0 : i32
    %c0_i32_0 = arith.constant 0 : i32
    %c0_i32_1 = arith.constant 0 : i32
    return %c0_i32, %c0_i32_0 : i32, i32
  }
  func.func @transform_4(%arg0: i32, %arg1: i32) -> (i32, i32) {
    %c0_i32 = arith.constant 0 : i32
    %c0_i32_0 = arith.constant 0 : i32
    %c0_i32_1 = arith.constant 0 : i32
    return %c0_i32, %c0_i32_0 : i32, i32
  }
  func.func @transform_5(%arg0: i32, %arg1: i32) -> (i32, i32) {
    %c0_i32 = arith.constant 0 : i32
    %c0_i32_0 = arith.constant 0 : i32
    %c0_i32_1 = arith.constant 0 : i32
    return %c0_i32, %c0_i32_0 : i32, i32
  }
  func.func @transform_6(%arg0: i32, %arg1: i32) -> (i32, i32) {
    %c0_i32 = arith.constant 0 : i32
    %c0_i32_0 = arith.constant 0 : i32
    %c0_i32_1 = arith.constant 0 : i32
    return %c0_i32, %c0_i32_0 : i32, i32
  }
  func.func @transform_7(%arg0: i32, %arg1: i32) -> (i32, i32) {
    %c0_i32 = arith.constant 0 : i32
    %c0_i32_0 = arith.constant 0 : i32
    %c0_i32_1 = arith.constant 0 : i32
    return %c0_i32, %c0_i32_0 : i32, i32
  }
  func.func @transform_8(%arg0: i32, %arg1: i32) -> (i32, i32) {
    %c0_i32 = arith.constant 0 : i32
    %c0_i32_0 = arith.constant 0 : i32
    %c0_i32_1 = arith.constant 0 : i32
    return %c0_i32, %c0_i32_0 : i32, i32
  }
  func.func @transform_9(%arg0: i32, %arg1: i32) -> (i32, i32) {
    %c0_i32 = arith.constant 0 : i32
    %c0_i32_0 = arith.constant 0 : i32
    %c0_i32_1 = arith.constant 0 : i32
    return %c0_i32, %c0_i32_0 : i32, i32
  }
  func.func @transform_10(%arg0: i32, %arg1: i32) -> (i32, i32) {
    %c0_i32 = arith.constant 0 : i32
    %c0_i32_0 = arith.constant 0 : i32
    %c0_i32_1 = arith.constant 0 : i32
    return %c0_i32, %c0_i32_0 : i32, i32
  }
  func.func @transform_11(%arg0: i32, %arg1: i32) -> (i32, i32, i32) {
    %c0_i32 = arith.constant 0 : i32
    %c0_i32_0 = arith.constant 0 : i32
    return %arg0, %arg1, %c0_i32 : i32, i32, i32
  }
}

</mosaic_0001>

<llo_original>
// kernel: tpu_custom_call.1
$region0: #{tpu_custom_call.1}
  #allocation0 [shape = 'u32[]', space=smem, size = 0x4, offset = 0x4, fixed_abs, tag = 'smem constant byte address 0x4 - core index']
  #allocation1 [shape = 'u32[144,128]{1,0:T(1,128)}', space=vmem, size = 0x12000, scoped, tag = 'internal scratch']
  #allocation2 [shape = 'bf16[8,32]{1,0:T(8,128)(2,1)}', space=vmem, size = 0x800, scoped, tag = 'scratch operand']
  #allocation3 [shape = 'bf16[8,32]{1,0:T(8,128)(2,1)}', space=vmem, size = 0x800, scoped, tag = 'scratch operand']
  #allocation4 [shape = 'bf16[8,32]{1,0:T(8,128)(2,1)}', space=vmem, size = 0x800, scoped, tag = 'scratch operand']
  %s0 = inlined_call_operand.hbm [shape: bf16[2,8,32], index: 0, kind: input, shape index: {}]
  %s1 = inlined_call_operand.hbm [shape: bf16[2,8,32], index: 1, kind: input, shape index: {}]
  %s2 = inlined_call_operand.hbm [shape: bf16[2,8,32], index: 2, kind: input, shape index: {}]
  %s3 = inlined_call_operand.hbm [shape: bf16[32,32], index: 3, kind: input, shape index: {}]
  %s4 = inlined_call_operand.hbm [shape: bf16[32,32], index: 4, kind: input, shape index: {}]
  %s5 = inlined_call_operand.vmem [shape: bf16[32,32], index: 5, kind: input, shape index: {}]
  %s6 = inlined_call_operand.hbm [shape: bf16[32,32], index: 6, kind: input, shape index: {}]
  %s7 = inlined_call_operand.vmem [shape: f32[1,32], index: 7, kind: input, shape index: {}]
  %s8 = inlined_call_operand.vmem [shape: f32[1,32], index: 8, kind: input, shape index: {}]
  %s9 = inlined_call_operand.vmem [shape: f32[1,32], index: 9, kind: input, shape index: {}]
  %s10 = inlined_call_operand.vmem [shape: f32[1,32], index: 10, kind: input, shape index: {}]
  %s11 = inlined_call_operand.hbm [shape: bf16[2,8,32], index: 11, kind: output, shape index: {}]
  %s12 = sld [smem:[#allocation0]]
  $region105: #{tpu_custom_call.1} parent=0
    _
  %s14 = ssub.s32 1, %s12
  %s15 = scalar_select 0, %s14, %s12
  $region1: #{tpu_custom_call.1} parent=0
    #allocation5 [shape = 'u8[4096]{0}', space=vmem, size = 0x1000, scoped, tag = 'input window, operand 0']
    #allocation6 [shape = 's32[2]{0}', space=sflag, size = 0x8, scoped, tag = 'scoped memory for tpu_custom_call.1']
    #allocation7 [shape = 's32[2]{0}', space=sflag, size = 0x8, scoped, tag = 'scoped memory for tpu_custom_call.1']
    #allocation8 [shape = 'u8[2048]{0}', space=vmem, size = 0x800, scoped, tag = 'input window, operand 1, single buffered']
    #allocation9 [shape = 's32[1]{0}', space=sflag, size = 0x4, scoped, tag = 'scoped memory for tpu_custom_call.1']
    #allocation10 [shape = 'u8[2048]{0}', space=vmem, size = 0x800, scoped, tag = 'input window, operand 2, single buffered']
    #allocation11 [shape = 'u8[8192]{0}', space=vmem, size = 0x2000, scoped, tag = 'input window, operand 3, single buffered']
    #allocation12 [shape = 's32[1]{0}', space=sflag, size = 0x4, scoped, tag = 'scoped memory for tpu_custom_call.1']
    #allocation13 [shape = 'u8[8192]{0}', space=vmem, size = 0x2000, scoped, tag = 'input window, operand 4, single buffered']
    #allocation14 [shape = 'u8[8192]{0}', space=vmem, size = 0x2000, scoped, tag = 'input window, operand 6, single buffered']
    #allocation15 [shape = 's32[1]{0}', space=sflag, size = 0x4, scoped, tag = 'scoped memory for tpu_custom_call.1']
    #allocation16 [shape = 'u8[4096]{0}', space=vmem, size = 0x1000, scoped, tag = 'output window, operand 0']
    %16 = vsyncpa [#allocation6], 0
    %s17 = scalar_lea.sflag [#allocation6], 1
    %18 = vsyncpa %s17, 0
    %19 = vsyncpa [#allocation9], 0
    %20 = vsyncpa [#allocation12], 0
    %21 = vsyncpa [#allocation15], 0
    %22 = vsyncpa [#allocation7], 0
    %s23 = scalar_lea.sflag [#allocation7], 1
    %24 = vsyncpa %s23, 0
    loop: start=0, step=1, limit=4
    $region2: #{tpu_custom_call.1} parent=1 // loop_pre_header
      _
    $region3: #{tpu_custom_call.1} parent=1 // loop_header
      %s26 = sphi 0, %s30
      %p27 = scmp.ge.s32.totalorder %s26, 4
      %s33 = sphi 0, %s45
      %s34 = sphi 0, %s41
      %s35 = sphi 0, %s33
      %s36 = sphi 0, %s34
      %s37 = sphi 0, %s35
      %s38 = sphi 0, %s36
      %s50 = sphi 0, %s52
      %s53 = sphi 0, %s50
      %s54 = sphi 0, %s53
      %s70 = sphi 0, %s54
      %s76 = sphi 0, %s78
      %s79 = sphi 0, %s76
      %s80 = sphi 0, %s79
      %s96 = sphi 0, %s80
      %s102 = sphi 0, %s104
      %s105 = sphi 0, %s102
      %s106 = sphi 0, %s105
      %s122 = sphi 0, %s106
      %s126 = sphi 0, %s126
      %s128 = sphi 0, %s126
      %s129 = sphi 0, %s128
      %s143 = sphi 0, %s129
      %s147 = sphi 0, %s147
      %s149 = sphi 0, %s147
      %s150 = sphi 0, %s149
      %s164 = sphi 0, %s150
      %s168 = sphi 0, %s168
      %s170 = sphi 0, %s168
      %s171 = sphi 0, %s170
      %s185 = sphi 0, %s171
      %s189 = sphi 0, %s189
      %s191 = sphi 0, %s189
      %s192 = sphi 0, %s191
      %s206 = sphi 0, %s192
      %s210 = sphi 0, %s210
      %s212 = sphi 0, %s210
      %s213 = sphi 0, %s212
      %s227 = sphi 0, %s213
      %s231 = sphi 0, %s231
      %s233 = sphi 0, %s231
      %s234 = sphi 0, %s233
      %s248 = sphi 0, %s234
      %s252 = sphi 0, %s252
      %s254 = sphi 0, %s252
      %s255 = sphi 0, %s254
      %s269 = sphi 0, %s255
      %s273 = sphi 0, %s273
      %s275 = sphi 0, %s273
      %s276 = sphi 0, %s275
      %s290 = sphi 0, %s276
      %s298 = sphi 0, %s300
      %s301 = sphi 0, %s298
      %s302 = sphi 0, %s301
      %s318 = sphi 0, %s302
    $region4: #{tpu_custom_call.1} parent=1 // loop_header_branch
      %29 = sbr.rel (%p27) target = $region8
    $region5: #{tpu_custom_call.1} parent=1 // loop_body
      %s31 = ssub.s32 %s26, 1
      %s32 = ssub.s32 %s26, 2
      %s39 = sadd.s32 1, %s34
      %p40 = scmp.ge.s32.totalorder %s39, 1
      %s41 = scalar_select %p40, 0, %s39
      %s42 = sadd.s32 1, %s33
      %s43 = scalar_select %p40, %s42, %s33
      %p44 = scmp.ge.s32.totalorder %s43, 2
      %s45 = scalar_select %p44, 0, %s43
      %s46 = ssub.s32 %s33, %s45
      %s47 = ssub.s32 %s34, %s41
      %s48 = sor.u32 %s46, %s47
      %p49 = scmp.eq.s32.totalorder %s48, 0
      %s51 = sadd.s32 %s50, 1
      %s52 = scalar_select %p49, %s50, %s51
      %p55 = pneg %p49
      %p56 = scmp.eq.s32.totalorder %s26, 1
      %p57 = por %p55, %p56
      %p58 = scmp.ne.s32.totalorder %s50, %s53
      %p59 = scmp.eq.s32.totalorder %s26, 0
      %p60 = por %p58, %p59
      %p61 = scmp.ne.s32.totalorder %s50, %s53
      %p62 = scmp.eq.s32.totalorder %s31, 1
      %p63 = por %p61, %p62
      %p64 = scmp.ne.s32.totalorder %s53, %s54
      %p65 = scmp.eq.s32.totalorder %s31, 0
      %p66 = por %p64, %p65
      %p67 = scmp.ne.s32.totalorder %s53, %s54
      %p68 = scmp.eq.s32.totalorder %s32, 1
      %p69 = por %p67, %p68
      %p71 = scmp.ne.s32.totalorder %s54, %s70
      %p72 = scmp.eq.s32.totalorder %s32, 0
      %p73 = por %p71, %p72
      %s74 = ssub.s32 %s33, %s45
      %p75 = scmp.eq.s32.totalorder %s74, 0
      %s77 = sadd.s32 %s76, 1
      %s78 = scalar_select %p75, %s76, %s77
      %p81 = pneg %p75
      %p82 = scmp.eq.s32.totalorder %s26, 1
      %p83 = por %p81, %p82
      %p84 = scmp.ne.s32.totalorder %s76, %s79
      %p85 = scmp.eq.s32.totalorder %s26, 0
      %p86 = por %p84, %p85
      %p87 = scmp.ne.s32.totalorder %s76, %s79
      %p88 = scmp.eq.s32.totalorder %s31, 1
      %p89 = por %p87, %p88
      %p90 = scmp.ne.s32.totalorder %s79, %s80
      %p91 = scmp.eq.s32.totalorder %s31, 0
      %p92 = por %p90, %p91
      %p93 = scmp.ne.s32.totalorder %s79, %s80
      %p94 = scmp.eq.s32.totalorder %s32, 1
      %p95 = por %p93, %p94
      %p97 = scmp.ne.s32.totalorder %s80, %s96
      %p98 = scmp.eq.s32.totalorder %s32, 0
      %p99 = por %p97, %p98
      %s100 = ssub.s32 %s33, %s45
      %p101 = scmp.eq.s32.totalorder %s100, 0
      %s103 = sadd.s32 %s102, 1
      %s104 = scalar_select %p101, %s102, %s103
      %p107 = pneg %p101
      %p108 = scmp.eq.s32.totalorder %s26, 1
      %p109 = por %p107, %p108
      %p110 = scmp.ne.s32.totalorder %s102, %s105
      %p111 = scmp.eq.s32.totalorder %s26, 0
      %p112 = por %p110, %p111
      %p113 = scmp.ne.s32.totalorder %s102, %s105
      %p114 = scmp.eq.s32.totalorder %s31, 1
      %p115 = por %p113, %p114
      %p116 = scmp.ne.s32.totalorder %s105, %s106
      %p117 = scmp.eq.s32.totalorder %s31, 0
      %p118 = por %p116, %p117
      %p119 = scmp.ne.s32.totalorder %s105, %s106
      %p120 = scmp.eq.s32.totalorder %s32, 1
      %p121 = por %p119, %p120
      %p123 = scmp.ne.s32.totalorder %s106, %s122
      %p124 = scmp.eq.s32.totalorder %s32, 0
      %p125 = por %p123, %p124
      %s127 = sadd.s32 %s126, 1
      %p130 = scmp.eq.s32.totalorder %s26, 1
      %p131 = scmp.ne.s32.totalorder %s126, %s128
      %p132 = scmp.eq.s32.totalorder %s26, 0
      %p133 = por %p131, %p132
      %p134 = scmp.ne.s32.totalorder %s126, %s128
      %p135 = scmp.eq.s32.totalorder %s31, 1
      %p136 = por %p134, %p135
      %p137 = scmp.ne.s32.totalorder %s128, %s129
      %p138 = scmp.eq.s32.totalorder %s31, 0
      %p139 = por %p137, %p138
      %p140 = scmp.ne.s32.totalorder %s128, %s129
      %p141 = scmp.eq.s32.totalorder %s32, 1
      %p142 = por %p140, %p141
      %p144 = scmp.ne.s32.totalorder %s129, %s143
      %p145 = scmp.eq.s32.totalorder %s32, 0
      %p146 = por %p144, %p145
      %s148 = sadd.s32 %s147, 1
      %p151 = scmp.eq.s32.totalorder %s26, 1
      %p152 = scmp.ne.s32.totalorder %s147, %s149
      %p153 = scmp.eq.s32.totalorder %s26, 0
      %p154 = por %p152, %p153
      %p155 = scmp.ne.s32.totalorder %s147, %s149
      %p156 = scmp.eq.s32.totalorder %s31, 1
      %p157 = por %p155, %p156
      %p158 = scmp.ne.s32.totalorder %s149, %s150
      %p159 = scmp.eq.s32.totalorder %s31, 0
      %p160 = por %p158, %p159
      %p161 = scmp.ne.s32.totalorder %s149, %s150
      %p162 = scmp.eq.s32.totalorder %s32, 1
      %p163 = por %p161, %p162
      %p165 = scmp.ne.s32.totalorder %s150, %s164
      %p166 = scmp.eq.s32.totalorder %s32, 0
      %p167 = por %p165, %p166
      %s169 = sadd.s32 %s168, 1
      %p172 = scmp.eq.s32.totalorder %s26, 1
      %p173 = scmp.ne.s32.totalorder %s168, %s170
      %p174 = scmp.eq.s32.totalorder %s26, 0
      %p175 = por %p173, %p174
      %p176 = scmp.ne.s32.totalorder %s168, %s170
      %p177 = scmp.eq.s32.totalorder %s31, 1
      %p178 = por %p176, %p177
      %p179 = scmp.ne.s32.totalorder %s170, %s171
      %p180 = scmp.eq.s32.totalorder %s31, 0
      %p181 = por %p179, %p180
      %p182 = scmp.ne.s32.totalorder %s170, %s171
      %p183 = scmp.eq.s32.totalorder %s32, 1
      %p184 = por %p182, %p183
      %p186 = scmp.ne.s32.totalorder %s171, %s185
      %p187 = scmp.eq.s32.totalorder %s32, 0
      %p188 = por %p186, %p187
      %s190 = sadd.s32 %s189, 1
      %p193 = scmp.eq.s32.totalorder %s26, 1
      %p194 = scmp.ne.s32.totalorder %s189, %s191
      %p195 = scmp.eq.s32.totalorder %s26, 0
      %p196 = por %p194, %p195
      %p197 = scmp.ne.s32.totalorder %s189, %s191
      %p198 = scmp.eq.s32.totalorder %s31, 1
      %p199 = por %p197, %p198
      %p200 = scmp.ne.s32.totalorder %s191, %s192
      %p201 = scmp.eq.s32.totalorder %s31, 0
      %p202 = por %p200, %p201
      %p203 = scmp.ne.s32.totalorder %s191, %s192
      %p204 = scmp.eq.s32.totalorder %s32, 1
      %p205 = por %p203, %p204
      %p207 = scmp.ne.s32.totalorder %s192, %s206
      %p208 = scmp.eq.s32.totalorder %s32, 0
      %p209 = por %p207, %p208
      %s211 = sadd.s32 %s210, 1
      %p214 = scmp.eq.s32.totalorder %s26, 1
      %p215 = scmp.ne.s32.totalorder %s210, %s212
      %p216 = scmp.eq.s32.totalorder %s26, 0
      %p217 = por %p215, %p216
      %p218 = scmp.ne.s32.totalorder %s210, %s212
      %p219 = scmp.eq.s32.totalorder %s31, 1
      %p220 = por %p218, %p219
      %p221 = scmp.ne.s32.totalorder %s212, %s213
      %p222 = scmp.eq.s32.totalorder %s31, 0
      %p223 = por %p221, %p222
      %p224 = scmp.ne.s32.totalorder %s212, %s213
      %p225 = scmp.eq.s32.totalorder %s32, 1
      %p226 = por %p224, %p225
      %p228 = scmp.ne.s32.totalorder %s213, %s227
      %p229 = scmp.eq.s32.totalorder %s32, 0
      %p230 = por %p228, %p229
      %s232 = sadd.s32 %s231, 1
      %p235 = scmp.eq.s32.totalorder %s26, 1
      %p236 = scmp.ne.s32.totalorder %s231, %s233
      %p237 = scmp.eq.s32.totalorder %s26, 0
      %p238 = por %p236, %p237
      %p239 = scmp.ne.s32.totalorder %s231, %s233
      %p240 = scmp.eq.s32.totalorder %s31, 1
      %p241 = por %p239, %p240
      %p242 = scmp.ne.s32.totalorder %s233, %s234
      %p243 = scmp.eq.s32.totalorder %s31, 0
      %p244 = por %p242, %p243
      %p245 = scmp.ne.s32.totalorder %s233, %s234
      %p246 = scmp.eq.s32.totalorder %s32, 1
      %p247 = por %p245, %p246
      %p249 = scmp.ne.s32.totalorder %s234, %s248
      %p250 = scmp.eq.s32.totalorder %s32, 0
      %p251 = por %p249, %p250
      %s253 = sadd.s32 %s252, 1
      %p256 = scmp.eq.s32.totalorder %s26, 1
      %p257 = scmp.ne.s32.totalorder %s252, %s254
      %p258 = scmp.eq.s32.totalorder %s26, 0
      %p259 = por %p257, %p258
      %p260 = scmp.ne.s32.totalorder %s252, %s254
      %p261 = scmp.eq.s32.totalorder %s31, 1
      %p262 = por %p260, %p261
      %p263 = scmp.ne.s32.totalorder %s254, %s255
      %p264 = scmp.eq.s32.totalorder %s31, 0
      %p265 = por %p263, %p264
      %p266 = scmp.ne.s32.totalorder %s254, %s255
      %p267 = scmp.eq.s32.totalorder %s32, 1
      %p268 = por %p266, %p267
      %p270 = scmp.ne.s32.totalorder %s255, %s269
      %p271 = scmp.eq.s32.totalorder %s32, 0
      %p272 = por %p270, %p271
      %s274 = sadd.s32 %s273, 1
      %p277 = scmp.eq.s32.totalorder %s26, 1
      %p278 = scmp.ne.s32.totalorder %s273, %s275
      %p279 = scmp.eq.s32.totalorder %s26, 0
      %p280 = por %p278, %p279
      %p281 = scmp.ne.s32.totalorder %s273, %s275
      %p282 = scmp.eq.s32.totalorder %s31, 1
      %p283 = por %p281, %p282
      %p284 = scmp.ne.s32.totalorder %s275, %s276
      %p285 = scmp.eq.s32.totalorder %s31, 0
      %p286 = por %p284, %p285
      %p287 = scmp.ne.s32.totalorder %s275, %s276
      %p288 = scmp.eq.s32.totalorder %s32, 1
      %p289 = por %p287, %p288
      %p291 = scmp.ne.s32.totalorder %s276, %s290
      %p292 = scmp.eq.s32.totalorder %s32, 0
      %p293 = por %p291, %p292
      %s294 = ssub.s32 %s33, %s45
      %s295 = ssub.s32 %s34, %s41
      %s296 = sor.u32 %s294, %s295
      %p297 = scmp.eq.s32.totalorder %s296, 0
      %s299 = sadd.s32 %s298, 1
      %s300 = scalar_select %p297, %s298, %s299
      %p303 = pneg %p297
      %p304 = scmp.eq.s32.totalorder %s26, 1
      %p305 = por %p303, %p304
      %p306 = scmp.ne.s32.totalorder %s298, %s301
      %p307 = scmp.eq.s32.totalorder %s26, 0
      %p308 = por %p306, %p307
      %p309 = scmp.ne.s32.totalorder %s298, %s301
      %p310 = scmp.eq.s32.totalorder %s31, 1
      %p311 = por %p309, %p310
      %p312 = scmp.ne.s32.totalorder %s301, %s302
      %p313 = scmp.eq.s32.totalorder %s31, 0
      %p314 = por %p312, %p313
      %p315 = scmp.ne.s32.totalorder %s301, %s302
      %p316 = scmp.eq.s32.totalorder %s32, 1
      %p317 = por %p315, %p316
      %p319 = scmp.ne.s32.totalorder %s302, %s318
      %p320 = scmp.eq.s32.totalorder %s32, 0
      %p321 = por %p319, %p320
      %p322 = scmp.le.s32.totalorder 1, %s26
      %p323 = scmp.lt.s32.totalorder %s26, 3
      %p324 = pnand %p322, %p323
      %p325 = pneg %p324
      // Predicated region
      $region9: #{tpu_custom_call.1} parent=5 // pred_check
        _
      $region10: #{tpu_custom_call.1} parent=5 // pred_check_branch
        %327 = sbr.rel (%p324) target = $region12
      $region11: #{tpu_custom_call.1} parent=5 // pred_region
        %s328 = ssub.s32 %s26, 1
        // Predicated region
        $region13: #{tpu_custom_call.1} parent=11 // pred_check
          %p329 = pneg %p92
        $region14: #{tpu_custom_call.1} parent=11 // pred_check_branch
          %331 = sbr.rel (%p329) target = $region16
        $region15: #{tpu_custom_call.1} parent=11 // pred_region
          %s333 = ssub.s32 64, 64
          %334 = vsyncadd [#allocation9], %s333
          %s335 = smul.addr %s35, 64
          %s336 = scalar_lea.hbm %s1, %s335
          %s338 = sshll.u32 [#allocation8], 4
          %s339 = int_to_ptr.vmem [resolvable:$true] %s338
          %341 = dma.hbm_to_vmem [thread:$0]  %s336, 64, %s339, [#allocation9]
        $region16: #{tpu_custom_call.1} parent=11 // pred_fallthru
          _
        // Predicated region
        $region17: #{tpu_custom_call.1} parent=11 // pred_check
          %p342 = pneg %p118
        $region18: #{tpu_custom_call.1} parent=11 // pred_check_branch
          %344 = sbr.rel (%p342) target = $region20
        $region19: #{tpu_custom_call.1} parent=11 // pred_region
          %s346 = ssub.s32 64, 64
          %347 = vsyncadd [#allocation9], %s346
          %s348 = smul.addr %s35, 64
          %s349 = scalar_lea.hbm %s2, %s348
          %s351 = sshll.u32 [#allocation10], 4
          %s352 = int_to_ptr.vmem [resolvable:$true] %s351
          %354 = dma.hbm_to_vmem [thread:$0]  %s349, 64, %s352, [#allocation9]
        $region20: #{tpu_custom_call.1} parent=11 // pred_fallthru
          _
        // Predicated region
        $region21: #{tpu_custom_call.1} parent=11 // pred_check
          %p355 = pneg %p139
        $region22: #{tpu_custom_call.1} parent=11 // pred_check_branch
          %357 = sbr.rel (%p355) target = $region24
        $region23: #{tpu_custom_call.1} parent=11 // pred_region
          %s359 = ssub.s32 256, 256
          %360 = vsyncadd [#allocation12], %s359
          %s361 = sshll.u32 [#allocation11], 4
          %s362 = int_to_ptr.vmem [resolvable:$true] %s361
          %367 = dma.hbm_to_vmem [thread:$0]  %s3, 256, %s362, [#allocation12], 64, 64, 4
        $region24: #{tpu_custom_call.1} parent=11 // pred_fallthru
          _
        // Predicated region
        $region25: #{tpu_custom_call.1} parent=11 // pred_check
          %p368 = pneg %p160
        $region26: #{tpu_custom_call.1} parent=11 // pred_check_branch
          %370 = sbr.rel (%p368) target = $region28
        $region27: #{tpu_custom_call.1} parent=11 // pred_region
          %s372 = ssub.s32 256, 256
          %373 = vsyncadd [#allocation12], %s372
          %s374 = sshll.u32 [#allocation13], 4
          %s375 = int_to_ptr.vmem [resolvable:$true] %s374
          %380 = dma.hbm_to_vmem [thread:$0]  %s4, 256, %s375, [#allocation12], 64, 64, 4
        $region28: #{tpu_custom_call.1} parent=11 // pred_fallthru
          _
        // Predicated region
        $region29: #{tpu_custom_call.1} parent=11 // pred_check
          %p381 = pneg %p181
        $region30: #{tpu_custom_call.1} parent=11 // pred_check_branch
          %383 = sbr.rel (%p381) target = $region32
        $region31: #{tpu_custom_call.1} parent=11 // pred_region
          _
        $region32: #{tpu_custom_call.1} parent=11 // pred_fallthru
          _
        // Predicated region
        $region33: #{tpu_custom_call.1} parent=11 // pred_check
          %p384 = pneg %p202
        $region34: #{tpu_custom_call.1} parent=11 // pred_check_branch
          %386 = sbr.rel (%p384) target = $region36
        $region35: #{tpu_custom_call.1} parent=11 // pred_region
          %s388 = ssub.s32 256, 256
          %389 = vsyncadd [#allocation15], %s388
          %s390 = sshll.u32 [#allocation14], 4
          %s391 = int_to_ptr.vmem [resolvable:$true] %s390
          %396 = dma.hbm_to_vmem [thread:$0]  %s6, 256, %s391, [#allocation15], 64, 64, 4
        $region36: #{tpu_custom_call.1} parent=11 // pred_fallthru
          _
        // Predicated region
        $region37: #{tpu_custom_call.1} parent=11 // pred_check
          %p397 = pneg %p223
        $region38: #{tpu_custom_call.1} parent=11 // pred_check_branch
          %399 = sbr.rel (%p397) target = $region40
        $region39: #{tpu_custom_call.1} parent=11 // pred_region
          _
        $region40: #{tpu_custom_call.1} parent=11 // pred_fallthru
          _
        // Predicated region
        $region41: #{tpu_custom_call.1} parent=11 // pred_check
          %p400 = pneg %p244
        $region42: #{tpu_custom_call.1} parent=11 // pred_check_branch
          %402 = sbr.rel (%p400) target = $region44
        $region43: #{tpu_custom_call.1} parent=11 // pred_region
          _
        $region44: #{tpu_custom_call.1} parent=11 // pred_fallthru
          _
        // Predicated region
        $region45: #{tpu_custom_call.1} parent=11 // pred_check
          %p403 = pneg %p265
        $region46: #{tpu_custom_call.1} parent=11 // pred_check_branch
          %405 = sbr.rel (%p403) target = $region48
        $region47: #{tpu_custom_call.1} parent=11 // pred_region
          _
        $region48: #{tpu_custom_call.1} parent=11 // pred_fallthru
          _
        // Predicated region
        $region49: #{tpu_custom_call.1} parent=11 // pred_check
          %p406 = pneg %p286
        $region50: #{tpu_custom_call.1} parent=11 // pred_check_branch
          %408 = sbr.rel (%p406) target = $region52
        $region51: #{tpu_custom_call.1} parent=11 // pred_region
          _
        $region52: #{tpu_custom_call.1} parent=11 // pred_fallthru
          _
      $region12: #{tpu_custom_call.1} parent=5 // pred_fallthru
        _
      %p409 = scmp.lt.s32.totalorder %s26, 2
      // Predicated region
      $region53: #{tpu_custom_call.1} parent=5 // pred_check
        %p410 = pneg %p409
      $region54: #{tpu_custom_call.1} parent=5 // pred_check_branch
        %412 = sbr.rel (%p410) target = $region56
      $region55: #{tpu_custom_call.1} parent=5 // pred_region
        // Predicated region
        $region57: #{tpu_custom_call.1} parent=55 // pred_check
          %p413 = pneg %p60
        $region58: #{tpu_custom_call.1} parent=55 // pred_check_branch
          %415 = sbr.rel (%p413) target = $region60
        $region59: #{tpu_custom_call.1} parent=55 // pred_region
          %s416 = sand.u32 %s50, 1
          %s417 = scalar_lea.sflag [#allocation6], %s416
          %s418 = sand.u32 %s50, 1
          %s419 = smul.addr %s418, 4
          %s420 = scalar_lea.vmem [#allocation5], %s419
          %s422 = ssub.s32 64, 64
          %423 = vsyncadd %s417, %s422
          %s424 = sadd.s32 %s34, %s33
          %s425 = smul.addr %s424, 64
          %s426 = scalar_lea.hbm %s0, %s425
          %s428 = sshll.u32 %s420, 4
          %s429 = int_to_ptr.vmem [resolvable:$true] %s428
          %431 = dma.hbm_to_vmem [thread:$0]  %s426, 64, %s429, %s417
        $region60: #{tpu_custom_call.1} parent=55 // pred_fallthru
          _
      $region56: #{tpu_custom_call.1} parent=5 // pred_fallthru
        _
      %p432 = scmp.le.s32.totalorder 1, %s26
      %p433 = scmp.lt.s32.totalorder %s26, 3
      %p434 = pnand %p432, %p433
      %p435 = pneg %p434
      // Predicated region
      $region61: #{tpu_custom_call.1} parent=5 // pred_check
        _
      $region62: #{tpu_custom_call.1} parent=5 // pred_check_branch
        %437 = sbr.rel (%p434) target = $region64
      $region63: #{tpu_custom_call.1} parent=5 // pred_region
        %s438 = ssub.s32 %s26, 1
        %s439 = sand.u32 %s53, 1
        %s440 = scalar_lea.sflag [#allocation6], %s439
        %s441 = sand.u32 %s53, 1
        %s442 = smul.addr %s441, 4
        %s443 = scalar_lea.vmem [#allocation5], %s442
        // Predicated region
        $region65: #{tpu_custom_call.1} parent=63 // pred_check
          %p444 = pneg %p66
        $region66: #{tpu_custom_call.1} parent=63 // pred_check_branch
          %446 = sbr.rel (%p444) target = $region68
        $region67: #{tpu_custom_call.1} parent=63 // pred_region
          %447 = dma.done %s440, 64
        $region68: #{tpu_custom_call.1} parent=63 // pred_fallthru
          _
        // Predicated region
        $region69: #{tpu_custom_call.1} parent=63 // pred_check
          %p448 = pneg %p92
        $region70: #{tpu_custom_call.1} parent=63 // pred_check_branch
          %450 = sbr.rel (%p448) target = $region72
        $region71: #{tpu_custom_call.1} parent=63 // pred_region
          %451 = dma.done [#allocation9], 64
        $region72: #{tpu_custom_call.1} parent=63 // pred_fallthru
          _
        // Predicated region
        $region73: #{tpu_custom_call.1} parent=63 // pred_check
          %p452 = pneg %p118
        $region74: #{tpu_custom_call.1} parent=63 // pred_check_branch
          %454 = sbr.rel (%p452) target = $region76
        $region75: #{tpu_custom_call.1} parent=63 // pred_region
          %455 = dma.done [#allocation9], 64
        $region76: #{tpu_custom_call.1} parent=63 // pred_fallthru
          _
        // Predicated region
        $region77: #{tpu_custom_call.1} parent=63 // pred_check
          %p456 = pneg %p139
        $region78: #{tpu_custom_call.1} parent=63 // pred_check_branch
          %458 = sbr.rel (%p456) target = $region80
        $region79: #{tpu_custom_call.1} parent=63 // pred_region
          %459 = dma.done [#allocation12], 256
        $region80: #{tpu_custom_call.1} parent=63 // pred_fallthru
          _
        // Predicated region
        $region81: #{tpu_custom_call.1} parent=63 // pred_check
          %p460 = pneg %p160
        $region82: #{tpu_custom_call.1} parent=63 // pred_check_branch
          %462 = sbr.rel (%p460) target = $region84
        $region83: #{tpu_custom_call.1} parent=63 // pred_region
          %463 = dma.done [#allocation12], 256
        $region84: #{tpu_custom_call.1} parent=63 // pred_fallthru
          _
        // Predicated region
        $region85: #{tpu_custom_call.1} parent=63 // pred_check
          %p464 = pneg %p202
        $region86: #{tpu_custom_call.1} parent=63 // pred_check_branch
          %466 = sbr.rel (%p464) target = $region88
        $region87: #{tpu_custom_call.1} parent=63 // pred_region
          %467 = dma.done [#allocation15], 256
        $region88: #{tpu_custom_call.1} parent=63 // pred_fallthru
          _
        %s468 = sand.u32 %s53, 1
        %s469 = scalar_lea.sflag [#allocation6], %s468
        %s470 = sand.u32 %s53, 1
        %s471 = smul.addr %s470, 4
        %s472 = scalar_lea.vmem [#allocation5], %s471
        %p473 = pneg %p66
        %p474 = pneg %p63
        %p475 = pneg %p92
        %p476 = pneg %p89
        %p477 = pneg %p118
        %p478 = pneg %p115
        %p479 = pneg %p139
        %p480 = pneg %p136
        %p481 = pneg %p160
        %p482 = pneg %p157
        %p483 = pneg %p181
        %p484 = pneg %p178
        %p485 = pneg %p202
        %p486 = pneg %p199
        %p487 = pneg %p223
        %p488 = pneg %p220
        %p489 = pneg %p244
        %p490 = pneg %p241
        %p491 = pneg %p265
        %p492 = pneg %p262
        %p493 = pneg %p286
        %p494 = pneg %p283
        %p495 = pneg %p314
        %p496 = pneg %p311
        %s497 = sand.u32 %s301, 1
        %s498 = scalar_lea.sflag [#allocation7], %s497
        %s499 = sand.u32 %s301, 1
        %s500 = smul.addr %s499, 4
        %s501 = scalar_lea.vmem [#allocation16], %s500
        %p503 = scmp.eq.s32.totalorder %s36, 0
        // Predicated region
        $region89: #{tpu_custom_call.1} parent=63 // pred_check
          %p504 = pneg %p503
        $region90: #{tpu_custom_call.1} parent=63 // pred_check_branch
          %506 = sbr.rel (%p504) target = $region92
        $region91: #{tpu_custom_call.1} parent=63 // pred_region
          %v507 = vld [vmem:[#allocation8] sm:$0xf]
          %v508 = vld [vmem:[#allocation13] sm:$0xf]
          %v509 = vld [vmem:[#allocation13 + $0x4] sm:$0xf]
          %v510 = vld [vmem:[#allocation13 + $0x8] sm:$0xf]
          %v511 = vld [vmem:[#allocation13 + $0xc] sm:$0xf]
          %v512 = vld [vmem:[%s8] sm:$0x1]
          %v514 = vlaneseq
          %v515 = vshrl.u32 %v514, 7
          %v516 = vsub.s32 0, %v515
          %v517 = vrot.slane %v512, %v516
          %v523 = vunpack.c.l.b16 %v508
          %v524 = vunpack.c.l.b16 %v509
          %v525 = vunpack.c.l.b16 %v510
          %v526 = vunpack.c.l.b16 %v511
          %v527 = vpack.c.b16 %v524, %v523
          %v528 = vpack.c.b16 %v526, %v525
          %vm531 = vcmask 261120
          %v533 = vsel %vm531, %v507, 0
          %535 = vmatprep.subr.bf16.mxu0 0
          %536 = vmatpush1.bf16.msra.mxu0 %v527
          %537 = vmatprep.subr.bf16.mxu0 0
          %538 = vmatpush1.bf16.msra.mxu0 %v528
          %539 = vmatprep.subr.bf16.mxu0 0
          %540 = vmatpush1.bf16.msra.mxu0 0
          %541 = vmatprep.subr.bf16.mxu0 0
          %542 = vmatpush1.bf16.msra.mxu0 0
          %543 = vmatprep.subr.bf16.mxu0 0
          %544 = vmatpush1.bf16.msra.mxu0 0
          %545 = vmatprep.subr.bf16.mxu0 0
          %546 = vmatpush1.bf16.msra.mxu0 0
          %547 = vmatprep.subr.bf16.mxu0 0
          %548 = vmatpush1.bf16.msra.mxu0 0
          %549 = vmatprep.subr.bf16.mxu0 0
          %550 = vmatpush1.bf16.msra.mxu0 0
          %551 = vmatprep.subr.bf16.mxu0 0
          %552 = vmatpush1.bf16.msra.mxu0 0
          %553 = vmatprep.subr.bf16.mxu0 0
          %554 = vmatpush1.bf16.msra.mxu0 0
          %555 = vmatprep.subr.bf16.mxu0 0
          %556 = vmatpush1.bf16.msra.mxu0 0
          %557 = vmatprep.subr.bf16.mxu0 0
          %558 = vmatpush1.bf16.msra.mxu0 0
          %559 = vmatprep.subr.bf16.mxu0 0
          %560 = vmatpush1.bf16.msra.mxu0 0
          %561 = vmatprep.subr.bf16.mxu0 0
          %562 = vmatpush1.bf16.msra.mxu0 0
          %563 = vmatprep.subr.bf16.mxu0 0
          %564 = vmatpush1.bf16.msra.mxu0 0
          %565 = vmatprep.subr.bf16.mxu0 0
          %566 = vmatpush1.bf16.msra.mxu0 0
          %567 = vmatprep.mubr.bf16.mxu0 0
          %568 = vmatmul.mubr.bf16.gmra.mrb[0].mxu0 %v533
          %v569 = vpop.f32.mrb[0].mxu0
          %v570 = vadd.f32 %v517, %v569
          %v571 = vpop.f32.mrb[0].mxu0
          %v572 = vpop.f32.mrb[0].mxu0
          %v573 = vpop.f32.mrb[0].mxu0
          %574 = vdwg.mxu0
          %v575 = vld [vmem:[#allocation10] sm:$0xf]
          %v576 = vld [vmem:[%s5] sm:$0xf]
          %v577 = vld [vmem:[%s5 + $0x4] sm:$0xf]
          %v578 = vld [vmem:[%s5 + $0x8] sm:$0xf]
          %v579 = vld [vmem:[%s5 + $0xc] sm:$0xf]
          %v580 = vld [vmem:[%s9] sm:$0x1]
          %v582 = vlaneseq
          %v583 = vshrl.u32 %v582, 7
          %v584 = vsub.s32 0, %v583
          %v585 = vrot.slane %v580, %v584
          %v591 = vunpack.c.l.b16 %v576
          %v592 = vunpack.c.l.b16 %v577
          %v593 = vunpack.c.l.b16 %v578
          %v594 = vunpack.c.l.b16 %v579
          %v595 = vpack.c.b16 %v592, %v591
          %v596 = vpack.c.b16 %v594, %v593
          %v600 = vsel %vm531, %v575, 0
          %602 = vmatprep.subr.bf16.mxu0 0
          %603 = vmatpush1.bf16.msra.mxu0 %v595
          %604 = vmatprep.subr.bf16.mxu0 0
          %605 = vmatpush1.bf16.msra.mxu0 %v596
          %606 = vmatprep.subr.bf16.mxu0 0
          %607 = vmatpush1.bf16.msra.mxu0 0
          %608 = vmatprep.subr.bf16.mxu0 0
          %609 = vmatpush1.bf16.msra.mxu0 0
          %610 = vmatprep.subr.bf16.mxu0 0
          %611 = vmatpush1.bf16.msra.mxu0 0
          %612 = vmatprep.subr.bf16.mxu0 0
          %613 = vmatpush1.bf16.msra.mxu0 0
          %614 = vmatprep.subr.bf16.mxu0 0
          %615 = vmatpush1.bf16.msra.mxu0 0
          %616 = vmatprep.subr.bf16.mxu0 0
          %617 = vmatpush1.bf16.msra.mxu0 0
          %618 = vmatprep.subr.bf16.mxu0 0
          %619 = vmatpush1.bf16.msra.mxu0 0
          %620 = vmatprep.subr.bf16.mxu0 0
          %621 = vmatpush1.bf16.msra.mxu0 0
          %622 = vmatprep.subr.bf16.mxu0 0
          %623 = vmatpush1.bf16.msra.mxu0 0
          %624 = vmatprep.subr.bf16.mxu0 0
          %625 = vmatpush1.bf16.msra.mxu0 0
          %626 = vmatprep.subr.bf16.mxu0 0
          %627 = vmatpush1.bf16.msra.mxu0 0
          %628 = vmatprep.subr.bf16.mxu0 0
          %629 = vmatpush1.bf16.msra.mxu0 0
          %630 = vmatprep.subr.bf16.mxu0 0
          %631 = vmatpush1.bf16.msra.mxu0 0
          %632 = vmatprep.subr.bf16.mxu0 0
          %633 = vmatpush1.bf16.msra.mxu0 0
          %634 = vmatprep.mubr.bf16.mxu0 0
          %635 = vmatmul.mubr.bf16.gmra.mrb[0].mxu0 %v600
          %v636 = vpop.f32.mrb[0].mxu0
          %v637 = vadd.f32 %v585, %v636
          %v638 = vpop.f32.mrb[0].mxu0
          %v639 = vpop.f32.mrb[0].mxu0
          %v640 = vpop.f32.mrb[0].mxu0
          %641 = vdwg.mxu0
          %v642 = vpack.c.bf16 %v570, %v570
          %vm643 = vcmask 257024
          %644 = vst.msk [vmem:[#allocation2] sm:$0xf] %vm643, %v642
          %v645 = vpack.c.bf16 %v637, %v637
          %646 = vst.msk [vmem:[#allocation3] sm:$0xf] %vm643, %v645
        $region92: #{tpu_custom_call.1} parent=63 // pred_fallthru
          _
        %v647 = vld [vmem:[%s443] sm:$0xf]
        %v648 = vld [vmem:[#allocation11] sm:$0xf]
        %v649 = vld [vmem:[#allocation11 + $0x4] sm:$0xf]
        %v650 = vld [vmem:[#allocation11 + $0x8] sm:$0xf]
        %v651 = vld [vmem:[#allocation11 + $0xc] sm:$0xf]
        %v652 = vld [vmem:[%s7] sm:$0x1]
        %v654 = vlaneseq
        %v655 = vshrl.u32 %v654, 7
        %v656 = vsub.s32 0, %v655
        %v657 = vrot.slane %v652, %v656
        %v663 = vunpack.c.l.b16 %v648
        %v664 = vunpack.c.l.b16 %v649
        %v665 = vunpack.c.l.b16 %v650
        %v666 = vunpack.c.l.b16 %v651
        %v667 = vpack.c.b16 %v664, %v663
        %v668 = vpack.c.b16 %v666, %v665
        %vm671 = vcmask 261120
        %v673 = vsel %vm671, %v647, 0
        %675 = vmatprep.subr.bf16.mxu0 0
        %676 = vmatpush1.bf16.msra.mxu0 %v667
        %677 = vmatprep.subr.bf16.mxu0 0
        %678 = vmatpush1.bf16.msra.mxu0 %v668
        %679 = vmatprep.subr.bf16.mxu0 0
        %680 = vmatpush1.bf16.msra.mxu0 0
        %681 = vmatprep.subr.bf16.mxu0 0
        %682 = vmatpush1.bf16.msra.mxu0 0
        %683 = vmatprep.subr.bf16.mxu0 0
        %684 = vmatpush1.bf16.msra.mxu0 0
        %685 = vmatprep.subr.bf16.mxu0 0
        %686 = vmatpush1.bf16.msra.mxu0 0
        %687 = vmatprep.subr.bf16.mxu0 0
        %688 = vmatpush1.bf16.msra.mxu0 0
        %689 = vmatprep.subr.bf16.mxu0 0
        %690 = vmatpush1.bf16.msra.mxu0 0
        %691 = vmatprep.subr.bf16.mxu0 0
        %692 = vmatpush1.bf16.msra.mxu0 0
        %693 = vmatprep.subr.bf16.mxu0 0
        %694 = vmatpush1.bf16.msra.mxu0 0
        %695 = vmatprep.subr.bf16.mxu0 0
        %696 = vmatpush1.bf16.msra.mxu0 0
        %697 = vmatprep.subr.bf16.mxu0 0
        %698 = vmatpush1.bf16.msra.mxu0 0
        %699 = vmatprep.subr.bf16.mxu0 0
        %700 = vmatpush1.bf16.msra.mxu0 0
        %701 = vmatprep.subr.bf16.mxu0 0
        %702 = vmatpush1.bf16.msra.mxu0 0
        %703 = vmatprep.subr.bf16.mxu0 0
        %704 = vmatpush1.bf16.msra.mxu0 0
        %705 = vmatprep.subr.bf16.mxu0 0
        %706 = vmatpush1.bf16.msra.mxu0 0
        %707 = vmatprep.mubr.bf16.mxu0 0
        %708 = vmatmul.mubr.bf16.gmra.mrb[0].mxu0 %v673
        %v709 = vpop.f32.mrb[0].mxu0
        %v710 = vadd.f32 %v657, %v709
        %v711 = vpop.f32.mrb[0].mxu0
        %v712 = vpop.f32.mrb[0].mxu0
        %v713 = vpop.f32.mrb[0].mxu0
        %714 = vdwg.mxu0
        %v715 = vpack.c.bf16 %v710, %v710
        %v716 = vld [vmem:[#allocation2] sm:$0xf]
        %v717 = vld [vmem:[#allocation3] sm:$0xf]
        %vm718 = vcmask 64512
        %v720 = vsel %vm718, %v715, 0
        %v723 = vsel %vm718, %v716, 0
        %725 = vmatprep.subr.bf16.mxu0 0
        %726 = vmatpush1.bf16.xpose.msra.mxu0 %v723
        %727 = vmatprep.subr.bf16.mxu0 0
        %728 = vmatpush1.bf16.xpose.msra.mxu0 0
        %729 = vmatprep.subr.bf16.mxu0 0
        %730 = vmatpush1.bf16.xpose.msra.mxu0 0
        %731 = vmatprep.subr.bf16.mxu0 0
        %732 = vmatpush1.bf16.xpose.msra.mxu0 0
        %733 = vmatprep.subr.bf16.mxu0 0
        %734 = vmatpush1.bf16.xpose.msra.mxu0 0
        %735 = vmatprep.subr.bf16.mxu0 0
        %736 = vmatpush1.bf16.xpose.msra.mxu0 0
        %737 = vmatprep.subr.bf16.mxu0 0
        %738 = vmatpush1.bf16.xpose.msra.mxu0 0
        %739 = vmatprep.subr.bf16.mxu0 0
        %740 = vmatpush1.bf16.xpose.msra.mxu0 0
        %741 = vmatprep.subr.bf16.mxu0 0
        %742 = vmatpush1.bf16.xpose.msra.mxu0 0
        %743 = vmatprep.subr.bf16.mxu0 0
        %744 = vmatpush1.bf16.xpose.msra.mxu0 0
        %745 = vmatprep.subr.bf16.mxu0 0
        %746 = vmatpush1.bf16.xpose.msra.mxu0 0
        %747 = vmatprep.subr.bf16.mxu0 0
        %748 = vmatpush1.bf16.xpose.msra.mxu0 0
        %749 = vmatprep.subr.bf16.mxu0 0
        %750 = vmatpush1.bf16.xpose.msra.mxu0 0
        %751 = vmatprep.subr.bf16.mxu0 0
        %752 = vmatpush1.bf16.xpose.msra.mxu0 0
        %753 = vmatprep.subr.bf16.mxu0 0
        %754 = vmatpush1.bf16.xpose.msra.mxu0 0
        %755 = vmatprep.subr.bf16.mxu0 0
        %756 = vmatpush1.bf16.xpose.msra.mxu0 0
        %757 = vmatprep.mubr.bf16.mxu0 0
        %758 = vmatmul.mubr.bf16.gmra.mrb[0].mxu0 %v720
        %v759 = vpop.f32.mrb[0].mxu0
        %v760 = vadd.f32 0.0, %v759
        %v761 = vpop.f32.mrb[0].mxu0
        %v762 = vpop.f32.mrb[0].mxu0
        %v763 = vpop.f32.mrb[0].mxu0
        %764 = vdwg.mxu0
        %v765 = vsel %vm718, %v760, -inf
        %766 = vmax.xlane.f32.xlu0 %v765
        %v767 = vpop.xlane.xlu0 %766
        %v768 = vsub.f32 %v760, %v767
        %v769 = vmul.f32 %v768, 1.442695
        %v770 = vpow.pop %v769
        %v771 = vsel %vm718, %v770, 0.0
        %772 = vadd.xlane.f32.xlu0 %v771
        %v773 = vpop.xlane.xlu0 %772
        %v774 = vrcp.pop %v773
        %v775 = vmul.f32 %v770, %v774
        %v776 = vpack.c.bf16 %v775, %v775
        %v778 = vsel %vm718, %v776, 0
        %vm780 = vcmask 1043456
        %v782 = vsel %vm780, %v717, 0
        %784 = vmatprep.subr.bf16.mxu0 0
        %785 = vmatpush1.bf16.msra.mxu0 %v782
        %786 = vmatprep.subr.bf16.mxu0 0
        %787 = vmatpush1.bf16.msra.mxu0 0
        %788 = vmatprep.subr.bf16.mxu0 0
        %789 = vmatpush1.bf16.msra.mxu0 0
        %790 = vmatprep.subr.bf16.mxu0 0
        %791 = vmatpush1.bf16.msra.mxu0 0
        %792 = vmatprep.subr.bf16.mxu0 0
        %793 = vmatpush1.bf16.msra.mxu0 0
        %794 = vmatprep.subr.bf16.mxu0 0
        %795 = vmatpush1.bf16.msra.mxu0 0
        %796 = vmatprep.subr.bf16.mxu0 0
        %797 = vmatpush1.bf16.msra.mxu0 0
        %798 = vmatprep.subr.bf16.mxu0 0
        %799 = vmatpush1.bf16.msra.mxu0 0
        %800 = vmatprep.subr.bf16.mxu0 0
        %801 = vmatpush1.bf16.msra.mxu0 0
        %802 = vmatprep.subr.bf16.mxu0 0
        %803 = vmatpush1.bf16.msra.mxu0 0
        %804 = vmatprep.subr.bf16.mxu0 0
        %805 = vmatpush1.bf16.msra.mxu0 0
        %806 = vmatprep.subr.bf16.mxu0 0
        %807 = vmatpush1.bf16.msra.mxu0 0
        %808 = vmatprep.subr.bf16.mxu0 0
        %809 = vmatpush1.bf16.msra.mxu0 0
        %810 = vmatprep.subr.bf16.mxu0 0
        %811 = vmatpush1.bf16.msra.mxu0 0
        %812 = vmatprep.subr.bf16.mxu0 0
        %813 = vmatpush1.bf16.msra.mxu0 0
        %814 = vmatprep.subr.bf16.mxu0 0
        %815 = vmatpush1.bf16.msra.mxu0 0
        %816 = vmatprep.mubr.bf16.mxu0 0
        %817 = vmatmul.mubr.bf16.gmra.mrb[0].mxu0 %v778
        %v818 = vpop.f32.mrb[0].mxu0
        %v819 = vadd.f32 0.0, %v818
        %v820 = vpop.f32.mrb[0].mxu0
        %v821 = vpop.f32.mrb[0].mxu0
        %v822 = vpop.f32.mrb[0].mxu0
        %823 = vdwg.mxu0
        %v824 = vpack.c.bf16 %v819, %v819
        %vm825 = vcmask 60416
        %826 = vst.msk [vmem:[#allocation4] sm:$0xf] %vm825, %v824
        %828 = vrot.lane.b32.xlu0 %v715, 120
        %v829 = vpop.permute.xlu0 %828
        %v831 = vunpack.c.l.b16 %v716
        %v832 = vpack.c.b16 %v831, %v831
        %833 = vrot.lane.b32.xlu0 %v832, 120
        %v834 = vpop.permute.xlu0 %833
        %v836 = vsel %vm718, %v829, 0
        %v839 = vsel %vm718, %v834, 0
        %841 = vmatprep.subr.bf16.mxu0 0
        %842 = vmatpush1.bf16.xpose.msra.mxu0 %v839
        %843 = vmatprep.subr.bf16.mxu0 0
        %844 = vmatpush1.bf16.xpose.msra.mxu0 0
        %845 = vmatprep.subr.bf16.mxu0 0
        %846 = vmatpush1.bf16.xpose.msra.mxu0 0
        %847 = vmatprep.subr.bf16.mxu0 0
        %848 = vmatpush1.bf16.xpose.msra.mxu0 0
        %849 = vmatprep.subr.bf16.mxu0 0
        %850 = vmatpush1.bf16.xpose.msra.mxu0 0
        %851 = vmatprep.subr.bf16.mxu0 0
        %852 = vmatpush1.bf16.xpose.msra.mxu0 0
        %853 = vmatprep.subr.bf16.mxu0 0
        %854 = vmatpush1.bf16.xpose.msra.mxu0 0
        %855 = vmatprep.subr.bf16.mxu0 0
        %856 = vmatpush1.bf16.xpose.msra.mxu0 0
        %857 = vmatprep.subr.bf16.mxu0 0
        %858 = vmatpush1.bf16.xpose.msra.mxu0 0
        %859 = vmatprep.subr.bf16.mxu0 0
        %860 = vmatpush1.bf16.xpose.msra.mxu0 0
        %861 = vmatprep.subr.bf16.mxu0 0
        %862 = vmatpush1.bf16.xpose.msra.mxu0 0
        %863 = vmatprep.subr.bf16.mxu0 0
        %864 = vmatpush1.bf16.xpose.msra.mxu0 0
        %865 = vmatprep.subr.bf16.mxu0 0
        %866 = vmatpush1.bf16.xpose.msra.mxu0 0
        %867 = vmatprep.subr.bf16.mxu0 0
        %868 = vmatpush1.bf16.xpose.msra.mxu0 0
        %869 = vmatprep.subr.bf16.mxu0 0
        %870 = vmatpush1.bf16.xpose.msra.mxu0 0
        %871 = vmatprep.subr.bf16.mxu0 0
        %872 = vmatpush1.bf16.xpose.msra.mxu0 0
        %873 = vmatprep.mubr.bf16.mxu0 0
        %874 = vmatmul.mubr.bf16.gmra.mrb[0].mxu0 %v836
        %v875 = vpop.f32.mrb[0].mxu0
        %v876 = vadd.f32 0.0, %v875
        %v877 = vpop.f32.mrb[0].mxu0
        %v878 = vpop.f32.mrb[0].mxu0
        %v879 = vpop.f32.mrb[0].mxu0
        %880 = vdwg.mxu0
        %v881 = vsel %vm718, %v876, -inf
        %882 = vmax.xlane.f32.xlu0 %v881
        %v883 = vpop.xlane.xlu0 %882
        %v884 = vsub.f32 %v876, %v883
        %v885 = vmul.f32 %v884, 1.442695
        %v886 = vpow.pop %v885
        %v887 = vsel %vm718, %v886, 0.0
        %888 = vadd.xlane.f32.xlu0 %v887
        %v889 = vpop.xlane.xlu0 %888
        %v890 = vrcp.pop %v889
        %v891 = vmul.f32 %v886, %v890
        %v892 = vpack.c.bf16 %v891, %v891
        %v894 = vunpack.c.l.b16 %v717
        %v895 = vpack.c.b16 %v894, %v894
        %896 = vrot.lane.b32.xlu0 %v895, 120
        %v897 = vpop.permute.xlu0 %896
        %v899 = vsel %vm718, %v892, 0
        %v902 = vsel %vm780, %v897, 0
        %904 = vmatprep.subr.bf16.mxu0 0
        %905 = vmatpush1.bf16.msra.mxu0 %v902
        %906 = vmatprep.subr.bf16.mxu0 0
        %907 = vmatpush1.bf16.msra.mxu0 0
        %908 = vmatprep.subr.bf16.mxu0 0
        %909 = vmatpush1.bf16.msra.mxu0 0
        %910 = vmatprep.subr.bf16.mxu0 0
        %911 = vmatpush1.bf16.msra.mxu0 0
        %912 = vmatprep.subr.bf16.mxu0 0
        %913 = vmatpush1.bf16.msra.mxu0 0
        %914 = vmatprep.subr.bf16.mxu0 0
        %915 = vmatpush1.bf16.msra.mxu0 0
        %916 = vmatprep.subr.bf16.mxu0 0
        %917 = vmatpush1.bf16.msra.mxu0 0
        %918 = vmatprep.subr.bf16.mxu0 0
        %919 = vmatpush1.bf16.msra.mxu0 0
        %920 = vmatprep.subr.bf16.mxu0 0
        %921 = vmatpush1.bf16.msra.mxu0 0
        %922 = vmatprep.subr.bf16.mxu0 0
        %923 = vmatpush1.bf16.msra.mxu0 0
        %924 = vmatprep.subr.bf16.mxu0 0
        %925 = vmatpush1.bf16.msra.mxu0 0
        %926 = vmatprep.subr.bf16.mxu0 0
        %927 = vmatpush1.bf16.msra.mxu0 0
        %928 = vmatprep.subr.bf16.mxu0 0
        %929 = vmatpush1.bf16.msra.mxu0 0
        %930 = vmatprep.subr.bf16.mxu0 0
        %931 = vmatpush1.bf16.msra.mxu0 0
        %932 = vmatprep.subr.bf16.mxu0 0
        %933 = vmatpush1.bf16.msra.mxu0 0
        %934 = vmatprep.subr.bf16.mxu0 0
        %935 = vmatpush1.bf16.msra.mxu0 0
        %936 = vmatprep.mubr.bf16.mxu0 0
        %937 = vmatmul.mubr.bf16.gmra.mrb[0].mxu0 %v899
        %v938 = vpop.f32.mrb[0].mxu0
        %v939 = vadd.f32 0.0, %v938
        %v940 = vpop.f32.mrb[0].mxu0
        %v941 = vpop.f32.mrb[0].mxu0
        %v942 = vpop.f32.mrb[0].mxu0
        %943 = vdwg.mxu0
        %v944 = vpack.c.bf16 %v939, %v939
        %v946 = vunpack.c.l.b16 %v944
        %v947 = vpack.c.b16 %v946, %v946
        %948 = vrot.lane.b32.xlu0 %v947, 8
        %v949 = vpop.permute.xlu0 %948
        %vm951 = vcmask 126016
        %952 = vst.msk [vmem:[#allocation4] sm:$0xf] %vm951, %v949
        %953 = vrot.lane.b32.xlu0 %v715, 112
        %v954 = vpop.permute.xlu0 %953
        %955 = vrot.lane.b32.xlu0 %v832, 112
        %v956 = vpop.permute.xlu0 %955
        %v958 = vsel %vm718, %v954, 0
        %v961 = vsel %vm718, %v956, 0
        %963 = vmatprep.subr.bf16.mxu0 0
        %964 = vmatpush1.bf16.xpose.msra.mxu0 %v961
        %965 = vmatprep.subr.bf16.mxu0 0
        %966 = vmatpush1.bf16.xpose.msra.mxu0 0
        %967 = vmatprep.subr.bf16.mxu0 0
        %968 = vmatpush1.bf16.xpose.msra.mxu0 0
        %969 = vmatprep.subr.bf16.mxu0 0
        %970 = vmatpush1.bf16.xpose.msra.mxu0 0
        %971 = vmatprep.subr.bf16.mxu0 0
        %972 = vmatpush1.bf16.xpose.msra.mxu0 0
        %973 = vmatprep.subr.bf16.mxu0 0
        %974 = vmatpush1.bf16.xpose.msra.mxu0 0
        %975 = vmatprep.subr.bf16.mxu0 0
        %976 = vmatpush1.bf16.xpose.msra.mxu0 0
        %977 = vmatprep.subr.bf16.mxu0 0
        %978 = vmatpush1.bf16.xpose.msra.mxu0 0
        %979 = vmatprep.subr.bf16.mxu0 0
        %980 = vmatpush1.bf16.xpose.msra.mxu0 0
        %981 = vmatprep.subr.bf16.mxu0 0
        %982 = vmatpush1.bf16.xpose.msra.mxu0 0
        %983 = vmatprep.subr.bf16.mxu0 0
        %984 = vmatpush1.bf16.xpose.msra.mxu0 0
        %985 = vmatprep.subr.bf16.mxu0 0
        %986 = vmatpush1.bf16.xpose.msra.mxu0 0
        %987 = vmatprep.subr.bf16.mxu0 0
        %988 = vmatpush1.bf16.xpose.msra.mxu0 0
        %989 = vmatprep.subr.bf16.mxu0 0
        %990 = vmatpush1.bf16.xpose.msra.mxu0 0
        %991 = vmatprep.subr.bf16.mxu0 0
        %992 = vmatpush1.bf16.xpose.msra.mxu0 0
        %993 = vmatprep.subr.bf16.mxu0 0
        %994 = vmatpush1.bf16.xpose.msra.mxu0 0
        %995 = vmatprep.mubr.bf16.mxu0 0
        %996 = vmatmul.mubr.bf16.gmra.mrb[0].mxu0 %v958
        %v997 = vpop.f32.mrb[0].mxu0
        %v998 = vadd.f32 0.0, %v997
        %v999 = vpop.f32.mrb[0].mxu0
        %v1000 = vpop.f32.mrb[0].mxu0
        %v1001 = vpop.f32.mrb[0].mxu0
        %1002 = vdwg.mxu0
        %v1003 = vsel %vm718, %v998, -inf
        %1004 = vmax.xlane.f32.xlu0 %v1003
        %v1005 = vpop.xlane.xlu0 %1004
        %v1006 = vsub.f32 %v998, %v1005
        %v1007 = vmul.f32 %v1006, 1.442695
        %v1008 = vpow.pop %v1007
        %v1009 = vsel %vm718, %v1008, 0.0
        %1010 = vadd.xlane.f32.xlu0 %v1009
        %v1011 = vpop.xlane.xlu0 %1010
        %v1012 = vrcp.pop %v1011
        %v1013 = vmul.f32 %v1008, %v1012
        %v1014 = vpack.c.bf16 %v1013, %v1013
        %1015 = vrot.lane.b32.xlu0 %v895, 112
        %v1016 = vpop.permute.xlu0 %1015
        %v1018 = vsel %vm718, %v1014, 0
        %v1021 = vsel %vm780, %v1016, 0
        %1023 = vmatprep.subr.bf16.mxu0 0
        %1024 = vmatpush1.bf16.msra.mxu0 %v1021
        %1025 = vmatprep.subr.bf16.mxu0 0
        %1026 = vmatpush1.bf16.msra.mxu0 0
        %1027 = vmatprep.subr.bf16.mxu0 0
        %1028 = vmatpush1.bf16.msra.mxu0 0
        %1029 = vmatprep.subr.bf16.mxu0 0
        %1030 = vmatpush1.bf16.msra.mxu0 0
        %1031 = vmatprep.subr.bf16.mxu0 0
        %1032 = vmatpush1.bf16.msra.mxu0 0
        %1033 = vmatprep.subr.bf16.mxu0 0
        %1034 = vmatpush1.bf16.msra.mxu0 0
        %1035 = vmatprep.subr.bf16.mxu0 0
        %1036 = vmatpush1.bf16.msra.mxu0 0
        %1037 = vmatprep.subr.bf16.mxu0 0
        %1038 = vmatpush1.bf16.msra.mxu0 0
        %1039 = vmatprep.subr.bf16.mxu0 0
        %1040 = vmatpush1.bf16.msra.mxu0 0
        %1041 = vmatprep.subr.bf16.mxu0 0
        %1042 = vmatpush1.bf16.msra.mxu0 0
        %1043 = vmatprep.subr.bf16.mxu0 0
        %1044 = vmatpush1.bf16.msra.mxu0 0
        %1045 = vmatprep.subr.bf16.mxu0 0
        %1046 = vmatpush1.bf16.msra.mxu0 0
        %1047 = vmatprep.subr.bf16.mxu0 0
        %1048 = vmatpush1.bf16.msra.mxu0 0
        %1049 = vmatprep.subr.bf16.mxu0 0
        %1050 = vmatpush1.bf16.msra.mxu0 0
        %1051 = vmatprep.subr.bf16.mxu0 0
        %1052 = vmatpush1.bf16.msra.mxu0 0
        %1053 = vmatprep.subr.bf16.mxu0 0
        %1054 = vmatpush1.bf16.msra.mxu0 0
        %1055 = vmatprep.mubr.bf16.mxu0 0
        %1056 = vmatmul.mubr.bf16.gmra.mrb[0].mxu0 %v1018
        %v1057 = vpop.f32.mrb[0].mxu0
        %v1058 = vadd.f32 0.0, %v1057
        %v1059 = vpop.f32.mrb[0].mxu0
        %v1060 = vpop.f32.mrb[0].mxu0
        %v1061 = vpop.f32.mrb[0].mxu0
        %1062 = vdwg.mxu0
        %v1063 = vpack.c.bf16 %v1058, %v1058
        %v1065 = vunpack.c.l.b16 %v1063
        %v1066 = vpack.c.b16 %v1065, %v1065
        %1067 = vrot.lane.b32.xlu0 %v1066, 16
        %v1068 = vpop.permute.xlu0 %1067
        %vm1070 = vcmask 191616
        %1071 = vst.msk [vmem:[#allocation4] sm:$0xf] %vm1070, %v1068
        %1072 = vrot.lane.b32.xlu0 %v715, 104
        %v1073 = vpop.permute.xlu0 %1072
        %1074 = vrot.lane.b32.xlu0 %v832, 104
        %v1075 = vpop.permute.xlu0 %1074
        %v1077 = vsel %vm718, %v1073, 0
        %v1080 = vsel %vm718, %v1075, 0
        %1082 = vmatprep.subr.bf16.mxu0 0
        %1083 = vmatpush1.bf16.xpose.msra.mxu0 %v1080
        %1084 = vmatprep.subr.bf16.mxu0 0
        %1085 = vmatpush1.bf16.xpose.msra.mxu0 0
        %1086 = vmatprep.subr.bf16.mxu0 0
        %1087 = vmatpush1.bf16.xpose.msra.mxu0 0
        %1088 = vmatprep.subr.bf16.mxu0 0
        %1089 = vmatpush1.bf16.xpose.msra.mxu0 0
        %1090 = vmatprep.subr.bf16.mxu0 0
        %1091 = vmatpush1.bf16.xpose.msra.mxu0 0
        %1092 = vmatprep.subr.bf16.mxu0 0
        %1093 = vmatpush1.bf16.xpose.msra.mxu0 0
        %1094 = vmatprep.subr.bf16.mxu0 0
        %1095 = vmatpush1.bf16.xpose.msra.mxu0 0
        %1096 = vmatprep.subr.bf16.mxu0 0
        %1097 = vmatpush1.bf16.xpose.msra.mxu0 0
        %1098 = vmatprep.subr.bf16.mxu0 0
        %1099 = vmatpush1.bf16.xpose.msra.mxu0 0
        %1100 = vmatprep.subr.bf16.mxu0 0
        %1101 = vmatpush1.bf16.xpose.msra.mxu0 0
        %1102 = vmatprep.subr.bf16.mxu0 0
        %1103 = vmatpush1.bf16.xpose.msra.mxu0 0
        %1104 = vmatprep.subr.bf16.mxu0 0
        %1105 = vmatpush1.bf16.xpose.msra.mxu0 0
        %1106 = vmatprep.subr.bf16.mxu0 0
        %1107 = vmatpush1.bf16.xpose.msra.mxu0 0
        %1108 = vmatprep.subr.bf16.mxu0 0
        %1109 = vmatpush1.bf16.xpose.msra.mxu0 0
        %1110 = vmatprep.subr.bf16.mxu0 0
        %1111 = vmatpush1.bf16.xpose.msra.mxu0 0
        %1112 = vmatprep.subr.bf16.mxu0 0
        %1113 = vmatpush1.bf16.xpose.msra.mxu0 0
        %1114 = vmatprep.mubr.bf16.mxu0 0
        %1115 = vmatmul.mubr.bf16.gmra.mrb[0].mxu0 %v1077
        %v1116 = vpop.f32.mrb[0].mxu0
        %v1117 = vadd.f32 0.0, %v1116
        %v1118 = vpop.f32.mrb[0].mxu0
        %v1119 = vpop.f32.mrb[0].mxu0
        %v1120 = vpop.f32.mrb[0].mxu0
        %1121 = vdwg.mxu0
        %v1122 = vsel %vm718, %v1117, -inf
        %1123 = vmax.xlane.f32.xlu0 %v1122
        %v1124 = vpop.xlane.xlu0 %1123
        %v1125 = vsub.f32 %v1117, %v1124
        %v1126 = vmul.f32 %v1125, 1.442695
        %v1127 = vpow.pop %v1126
        %v1128 = vsel %vm718, %v1127, 0.0
        %1129 = vadd.xlane.f32.xlu0 %v1128
        %v1130 = vpop.xlane.xlu0 %1129
        %v1131 = vrcp.pop %v1130
        %v1132 = vmul.f32 %v1127, %v1131
        %v1133 = vpack.c.bf16 %v1132, %v1132
        %1134 = vrot.lane.b32.xlu0 %v895, 104
        %v1135 = vpop.permute.xlu0 %1134
        %v1137 = vsel %vm718, %v1133, 0
        %v1140 = vsel %vm780, %v1135, 0
        %1142 = vmatprep.subr.bf16.mxu0 0
        %1143 = vmatpush1.bf16.msra.mxu0 %v1140
        %1144 = vmatprep.subr.bf16.mxu0 0
        %1145 = vmatpush1.bf16.msra.mxu0 0
        %1146 = vmatprep.subr.bf16.mxu0 0
        %1147 = vmatpush1.bf16.msra.mxu0 0
        %1148 = vmatprep.subr.bf16.mxu0 0
        %1149 = vmatpush1.bf16.msra.mxu0 0
        %1150 = vmatprep.subr.bf16.mxu0 0
        %1151 = vmatpush1.bf16.msra.mxu0 0
        %1152 = vmatprep.subr.bf16.mxu0 0
        %1153 = vmatpush1.bf16.msra.mxu0 0
        %1154 = vmatprep.subr.bf16.mxu0 0
        %1155 = vmatpush1.bf16.msra.mxu0 0
        %1156 = vmatprep.subr.bf16.mxu0 0
        %1157 = vmatpush1.bf16.msra.mxu0 0
        %1158 = vmatprep.subr.bf16.mxu0 0
        %1159 = vmatpush1.bf16.msra.mxu0 0
        %1160 = vmatprep.subr.bf16.mxu0 0
        %1161 = vmatpush1.bf16.msra.mxu0 0
        %1162 = vmatprep.subr.bf16.mxu0 0
        %1163 = vmatpush1.bf16.msra.mxu0 0
        %1164 = vmatprep.subr.bf16.mxu0 0
        %1165 = vmatpush1.bf16.msra.mxu0 0
        %1166 = vmatprep.subr.bf16.mxu0 0
        %1167 = vmatpush1.bf16.msra.mxu0 0
        %1168 = vmatprep.subr.bf16.mxu0 0
        %1169 = vmatpush1.bf16.msra.mxu0 0
        %1170 = vmatprep.subr.bf16.mxu0 0
        %1171 = vmatpush1.bf16.msra.mxu0 0
        %1172 = vmatprep.subr.bf16.mxu0 0
        %1173 = vmatpush1.bf16.msra.mxu0 0
        %1174 = vmatprep.mubr.bf16.mxu0 0
        %1175 = vmatmul.mubr.bf16.gmra.mrb[0].mxu0 %v1137
        %v1176 = vpop.f32.mrb[0].mxu0
        %v1177 = vadd.f32 0.0, %v1176
        %v1178 = vpop.f32.mrb[0].mxu0
        %v1179 = vpop.f32.mrb[0].mxu0
        %v1180 = vpop.f32.mrb[0].mxu0
        %1181 = vdwg.mxu0
        %v1182 = vpack.c.bf16 %v1177, %v1177
        %v1184 = vunpack.c.l.b16 %v1182
        %v1185 = vpack.c.b16 %v1184, %v1184
        %1186 = vrot.lane.b32.xlu0 %v1185, 24
        %v1187 = vpop.permute.xlu0 %1186
        %vm1189 = vcmask 257216
        %1190 = vst.msk [vmem:[#allocation4] sm:$0xf] %vm1189, %v1187
        %v1191 = vld [vmem:[#allocation4] sm:$0xf]
        %v1192 = vld [vmem:[#allocation14] sm:$0xf]
        %v1193 = vld [vmem:[#allocation14 + $0x4] sm:$0xf]
        %v1194 = vld [vmem:[#allocation14 + $0x8] sm:$0xf]
        %v1195 = vld [vmem:[#allocation14 + $0xc] sm:$0xf]
        %v1196 = vld [vmem:[%s10] sm:$0x1]
        %v1198 = vlaneseq
        %v1199 = vshrl.u32 %v1198, 7
        %v1200 = vsub.s32 0, %v1199
        %v1201 = vrot.slane %v1196, %v1200
        %v1207 = vunpack.c.l.b16 %v1192
        %v1208 = vunpack.c.l.b16 %v1193
        %v1209 = vunpack.c.l.b16 %v1194
        %v1210 = vunpack.c.l.b16 %v1195
        %v1211 = vpack.c.b16 %v1208, %v1207
        %v1212 = vpack.c.b16 %v1210, %v1209
        %v1216 = vsel %vm671, %v1191, 0
        %1218 = vmatprep.subr.bf16.mxu0 0
        %1219 = vmatpush1.bf16.msra.mxu0 %v1211
        %1220 = vmatprep.subr.bf16.mxu0 0
        %1221 = vmatpush1.bf16.msra.mxu0 %v1212
        %1222 = vmatprep.subr.bf16.mxu0 0
        %1223 = vmatpush1.bf16.msra.mxu0 0
        %1224 = vmatprep.subr.bf16.mxu0 0
        %1225 = vmatpush1.bf16.msra.mxu0 0
        %1226 = vmatprep.subr.bf16.mxu0 0
        %1227 = vmatpush1.bf16.msra.mxu0 0
        %1228 = vmatprep.subr.bf16.mxu0 0
        %1229 = vmatpush1.bf16.msra.mxu0 0
        %1230 = vmatprep.subr.bf16.mxu0 0
        %1231 = vmatpush1.bf16.msra.mxu0 0
        %1232 = vmatprep.subr.bf16.mxu0 0
        %1233 = vmatpush1.bf16.msra.mxu0 0
        %1234 = vmatprep.subr.bf16.mxu0 0
        %1235 = vmatpush1.bf16.msra.mxu0 0
        %1236 = vmatprep.subr.bf16.mxu0 0
        %1237 = vmatpush1.bf16.msra.mxu0 0
        %1238 = vmatprep.subr.bf16.mxu0 0
        %1239 = vmatpush1.bf16.msra.mxu0 0
        %1240 = vmatprep.subr.bf16.mxu0 0
        %1241 = vmatpush1.bf16.msra.mxu0 0
        %1242 = vmatprep.subr.bf16.mxu0 0
        %1243 = vmatpush1.bf16.msra.mxu0 0
        %1244 = vmatprep.subr.bf16.mxu0 0
        %1245 = vmatpush1.bf16.msra.mxu0 0
        %1246 = vmatprep.subr.bf16.mxu0 0
        %1247 = vmatpush1.bf16.msra.mxu0 0
        %1248 = vmatprep.subr.bf16.mxu0 0
        %1249 = vmatpush1.bf16.msra.mxu0 0
        %1250 = vmatprep.mubr.bf16.mxu0 0
        %1251 = vmatmul.mubr.bf16.gmra.mrb[0].mxu0 %v1216
        %v1252 = vpop.f32.mrb[0].mxu0
        %v1253 = vadd.f32 %v1201, %v1252
        %v1254 = vpop.f32.mrb[0].mxu0
        %v1255 = vpop.f32.mrb[0].mxu0
        %v1256 = vpop.f32.mrb[0].mxu0
        %1257 = vdwg.mxu0
        %v1258 = vpack.c.bf16 %v1253, %v1253
        %vm1259 = vcmask 257024
        %1260 = vst.msk [vmem:[%s501] sm:$0xf] %vm1259, %v1258
        %s1261 = sand.u32 %s301, 1
        %s1262 = scalar_lea.sflag [#allocation7], %s1261
        %s1263 = sand.u32 %s301, 1
        %s1264 = smul.addr %s1263, 4
        %s1265 = scalar_lea.vmem [#allocation16], %s1264
        // Predicated region
        $region93: #{tpu_custom_call.1} parent=63 // pred_check
          %p1266 = pneg %p311
        $region94: #{tpu_custom_call.1} parent=63 // pred_check_branch
          %1268 = sbr.rel (%p1266) target = $region96
        $region95: #{tpu_custom_call.1} parent=63 // pred_region
          %s1270 = ssub.s32 64, 64
          %1271 = vsyncadd %s1262, %s1270
          %s1272 = sadd.s32 %s36, %s35
          %s1273 = smul.addr %s1272, 64
          %s1274 = scalar_lea.hbm %s11, %s1273
          %s1276 = sshll.u32 %s1265, 4
          %s1277 = int_to_ptr.vmem [resolvable:$true] %s1276
          %1279 = dma.vmem_to_hbm [thread:$0]  %s1277, 64, %s1274, %s1262
        $region96: #{tpu_custom_call.1} parent=63 // pred_fallthru
          _
      $region64: #{tpu_custom_call.1} parent=5 // pred_fallthru
        _
      %p1280 = scmp.le.s32.totalorder 2, %s26
      // Predicated region
      $region97: #{tpu_custom_call.1} parent=5 // pred_check
        %p1281 = pneg %p1280
      $region98: #{tpu_custom_call.1} parent=5 // pred_check_branch
        %1283 = sbr.rel (%p1281) target = $region100
      $region99: #{tpu_custom_call.1} parent=5 // pred_region
        %s1284 = ssub.s32 %s26, 2
        // Predicated region
        $region101: #{tpu_custom_call.1} parent=99 // pred_check
          %p1285 = pneg %p317
        $region102: #{tpu_custom_call.1} parent=99 // pred_check_branch
          %1287 = sbr.rel (%p1285) target = $region104
        $region103: #{tpu_custom_call.1} parent=99 // pred_region
          %s1288 = sand.u32 %s302, 1
          %s1289 = scalar_lea.sflag [#allocation7], %s1288
          %s1290 = sand.u32 %s302, 1
          %s1291 = smul.addr %s1290, 4
          %s1292 = scalar_lea.vmem [#allocation16], %s1291
          %1293 = dma.done %s1289, 64
        $region104: #{tpu_custom_call.1} parent=99 // pred_fallthru
          _
      $region100: #{tpu_custom_call.1} parent=5 // pred_fallthru
        _
    $region6: #{tpu_custom_call.1} parent=1 // loop_footer
      %s30 = sadd.s32 1, %s26
    $region7: #{tpu_custom_call.1} parent=1 // loop_footer_branch
      %25 = sbr.rel target = $region3
    $region8: #{tpu_custom_call.1} parent=1 // loop_exit
      _
    %1294 = vsyncpa [#allocation6], 1
    %s1295 = scalar_lea.sflag [#allocation6], 1
    %1296 = vsyncpa %s1295, 1
    %1297 = vsyncpa [#allocation9], 1
    %1298 = vsyncpa [#allocation12], 1
    %1299 = vsyncpa [#allocation15], 1
    %1300 = vsyncpa [#allocation7], 1
    %s1301 = scalar_lea.sflag [#allocation7], 1
    %1302 = vsyncpa %s1301, 1

// kernel: tpu_custom_call.1
$region0: #{tpu_custom_call.1}
  #allocation0 [shape = 'u32[]', space=smem, size = 0x4, offset = 0x4, fixed_abs, tag = 'smem constant byte address 0x4 - core index']
  #allocation1 [shape = 'u32[144,128]{1,0:T(1,128)}', space=vmem, size = 0x12000, scoped, tag = 'internal scratch']
  #allocation2 [shape = 'bf16[8,32]{1,0:T(8,128)(2,1)}', space=vmem, size = 0x800, scoped, tag = 'scratch operand']
  #allocation3 [shape = 'bf16[8,32]{1,0:T(8,128)(2,1)}', space=vmem, size = 0x800, scoped, tag = 'scratch operand']
  #allocation4 [shape = 'bf16[8,32]{1,0:T(8,128)(2,1)}', space=vmem, size = 0x800, scoped, tag = 'scratch operand']
  %s0 = inlined_call_operand.hbm [shape: bf16[2,8,32], index: 0, kind: input, shape index: {}]
  %s1 = inlined_call_operand.hbm [shape: bf16[2,8,32], index: 1, kind: input, shape index: {}]
  %s2 = inlined_call_operand.hbm [shape: bf16[2,8,32], index: 2, kind: input, shape index: {}]
  %s3 = inlined_call_operand.hbm [shape: bf16[32,32], index: 3, kind: input, shape index: {}]
  %s4 = inlined_call_operand.hbm [shape: bf16[32,32], index: 4, kind: input, shape index: {}]
  %s5 = inlined_call_operand.vmem [shape: bf16[32,32], index: 5, kind: input, shape index: {}]
  %s6 = inlined_call_operand.hbm [shape: bf16[32,32], index: 6, kind: input, shape index: {}]
  %s7 = inlined_call_operand.vmem [shape: f32[1,32], index: 7, kind: input, shape index: {}]
  %s8 = inlined_call_operand.vmem [shape: f32[1,32], index: 8, kind: input, shape index: {}]
  %s9 = inlined_call_operand.vmem [shape: f32[1,32], index: 9, kind: input, shape index: {}]
  %s10 = inlined_call_operand.vmem [shape: f32[1,32], index: 10, kind: input, shape index: {}]
  %s11 = inlined_call_operand.hbm [shape: bf16[2,8,32], index: 11, kind: output, shape index: {}]
  %s12 = sld [smem:[#allocation0]]
  $region105: #{tpu_custom_call.1} parent=0
    _
  %s14 = ssub.s32 1, %s12
  %s15 = scalar_select 0, %s14, %s12
  $region1: #{tpu_custom_call.1} parent=0
    #allocation5 [shape = 'u8[4096]{0}', space=vmem, size = 0x1000, scoped, tag = 'input window, operand 0']
    #allocation6 [shape = 's32[2]{0}', space=sflag, size = 0x8, scoped, tag = 'scoped memory for tpu_custom_call.1']
    #allocation7 [shape = 's32[2]{0}', space=sflag, size = 0x8, scoped, tag = 'scoped memory for tpu_custom_call.1']
    #allocation8 [shape = 'u8[4096]{0}', space=vmem, size = 0x1000, scoped, tag = 'input window, operand 1']
    #allocation9 [shape = 's32[2]{0}', space=sflag, size = 0x8, scoped, tag = 'scoped memory for tpu_custom_call.1']
    #allocation10 [shape = 'u8[4096]{0}', space=vmem, size = 0x1000, scoped, tag = 'input window, operand 2']
    #allocation11 [shape = 'u8[8192]{0}', space=vmem, size = 0x2000, scoped, tag = 'input window, operand 3, single buffered']
    #allocation12 [shape = 's32[1]{0}', space=sflag, size = 0x4, scoped, tag = 'scoped memory for tpu_custom_call.1']
    #allocation13 [shape = 'u8[8192]{0}', space=vmem, size = 0x2000, scoped, tag = 'input window, operand 4, single buffered']
    #allocation14 [shape = 'u8[8192]{0}', space=vmem, size = 0x2000, scoped, tag = 'input window, operand 6, single buffered']
    #allocation15 [shape = 's32[1]{0}', space=sflag, size = 0x4, scoped, tag = 'scoped memory for tpu_custom_call.1']
    #allocation16 [shape = 'u8[4096]{0}', space=vmem, size = 0x1000, scoped, tag = 'output window, operand 0']
    %16 = vsyncpa [#allocation6], 0
    %s17 = scalar_lea.sflag [#allocation6], 1
    %18 = vsyncpa %s17, 0
    %19 = vsyncpa [#allocation9], 0
    %s20 = scalar_lea.sflag [#allocation9], 1
    %21 = vsyncpa %s20, 0
    %22 = vsyncpa [#allocation12], 0
    %23 = vsyncpa [#allocation15], 0
    %24 = vsyncpa [#allocation7], 0
    %s25 = scalar_lea.sflag [#allocation7], 1
    %26 = vsyncpa %s25, 0
    loop: start=0, step=1, limit=4
    $region2: #{tpu_custom_call.1} parent=1 // loop_pre_header
      _
    $region3: #{tpu_custom_call.1} parent=1 // loop_header
      %s28 = sphi 0, %s32
      %p29 = scmp.ge.s32.totalorder %s28, 4
      %s35 = sphi 0, %s47
      %s36 = sphi 0, %s43
      %s37 = sphi 0, %s35
      %s38 = sphi 0, %s36
      %s39 = sphi 0, %s37
      %s40 = sphi 0, %s38
      %s52 = sphi 0, %s54
      %s55 = sphi 0, %s52
      %s56 = sphi 0, %s55
      %s72 = sphi 0, %s56
      %s78 = sphi 0, %s80
      %s81 = sphi 0, %s78
      %s82 = sphi 0, %s81
      %s98 = sphi 0, %s82
      %s104 = sphi 0, %s106
      %s107 = sphi 0, %s104
      %s108 = sphi 0, %s107
      %s124 = sphi 0, %s108
      %s128 = sphi 0, %s128
      %s130 = sphi 0, %s128
      %s131 = sphi 0, %s130
      %s145 = sphi 0, %s131
      %s149 = sphi 0, %s149
      %s151 = sphi 0, %s149
      %s152 = sphi 0, %s151
      %s166 = sphi 0, %s152
      %s170 = sphi 0, %s170
      %s172 = sphi 0, %s170
      %s173 = sphi 0, %s172
      %s187 = sphi 0, %s173
      %s191 = sphi 0, %s191
      %s193 = sphi 0, %s191
      %s194 = sphi 0, %s193
      %s208 = sphi 0, %s194
      %s212 = sphi 0, %s212
      %s214 = sphi 0, %s212
      %s215 = sphi 0, %s214
      %s229 = sphi 0, %s215
      %s233 = sphi 0, %s233
      %s235 = sphi 0, %s233
      %s236 = sphi 0, %s235
      %s250 = sphi 0, %s236
      %s254 = sphi 0, %s254
      %s256 = sphi 0, %s254
      %s257 = sphi 0, %s256
      %s271 = sphi 0, %s257
      %s275 = sphi 0, %s275
      %s277 = sphi 0, %s275
      %s278 = sphi 0, %s277
      %s292 = sphi 0, %s278
      %s300 = sphi 0, %s302
      %s303 = sphi 0, %s300
      %s304 = sphi 0, %s303
      %s320 = sphi 0, %s304
    $region4: #{tpu_custom_call.1} parent=1 // loop_header_branch
      %31 = sbr.rel (%p29) target = $region8
    $region5: #{tpu_custom_call.1} parent=1 // loop_body
      %s33 = ssub.s32 %s28, 1
      %s34 = ssub.s32 %s28, 2
      %s41 = sadd.s32 1, %s36
      %p42 = scmp.ge.s32.totalorder %s41, 1
      %s43 = scalar_select %p42, 0, %s41
      %s44 = sadd.s32 1, %s35
      %s45 = scalar_select %p42, %s44, %s35
      %p46 = scmp.ge.s32.totalorder %s45, 2
      %s47 = scalar_select %p46, 0, %s45
      %s48 = ssub.s32 %s35, %s47
      %s49 = ssub.s32 %s36, %s43
      %s50 = sor.u32 %s48, %s49
      %p51 = scmp.eq.s32.totalorder %s50, 0
      %s53 = sadd.s32 %s52, 1
      %s54 = scalar_select %p51, %s52, %s53
      %p57 = pneg %p51
      %p58 = scmp.eq.s32.totalorder %s28, 1
      %p59 = por %p57, %p58
      %p60 = scmp.ne.s32.totalorder %s52, %s55
      %p61 = scmp.eq.s32.totalorder %s28, 0
      %p62 = por %p60, %p61
      %p63 = scmp.ne.s32.totalorder %s52, %s55
      %p64 = scmp.eq.s32.totalorder %s33, 1
      %p65 = por %p63, %p64
      %p66 = scmp.ne.s32.totalorder %s55, %s56
      %p67 = scmp.eq.s32.totalorder %s33, 0
      %p68 = por %p66, %p67
      %p69 = scmp.ne.s32.totalorder %s55, %s56
      %p70 = scmp.eq.s32.totalorder %s34, 1
      %p71 = por %p69, %p70
      %p73 = scmp.ne.s32.totalorder %s56, %s72
      %p74 = scmp.eq.s32.totalorder %s34, 0
      %p75 = por %p73, %p74
      %s76 = ssub.s32 %s35, %s47
      %p77 = scmp.eq.s32.totalorder %s76, 0
      %s79 = sadd.s32 %s78, 1
      %s80 = scalar_select %p77, %s78, %s79
      %p83 = pneg %p77
      %p84 = scmp.eq.s32.totalorder %s28, 1
      %p85 = por %p83, %p84
      %p86 = scmp.ne.s32.totalorder %s78, %s81
      %p87 = scmp.eq.s32.totalorder %s28, 0
      %p88 = por %p86, %p87
      %p89 = scmp.ne.s32.totalorder %s78, %s81
      %p90 = scmp.eq.s32.totalorder %s33, 1
      %p91 = por %p89, %p90
      %p92 = scmp.ne.s32.totalorder %s81, %s82
      %p93 = scmp.eq.s32.totalorder %s33, 0
      %p94 = por %p92, %p93
      %p95 = scmp.ne.s32.totalorder %s81, %s82
      %p96 = scmp.eq.s32.totalorder %s34, 1
      %p97 = por %p95, %p96
      %p99 = scmp.ne.s32.totalorder %s82, %s98
      %p100 = scmp.eq.s32.totalorder %s34, 0
      %p101 = por %p99, %p100
      %s102 = ssub.s32 %s35, %s47
      %p103 = scmp.eq.s32.totalorder %s102, 0
      %s105 = sadd.s32 %s104, 1
      %s106 = scalar_select %p103, %s104, %s105
      %p109 = pneg %p103
      %p110 = scmp.eq.s32.totalorder %s28, 1
      %p111 = por %p109, %p110
      %p112 = scmp.ne.s32.totalorder %s104, %s107
      %p113 = scmp.eq.s32.totalorder %s28, 0
      %p114 = por %p112, %p113
      %p115 = scmp.ne.s32.totalorder %s104, %s107
      %p116 = scmp.eq.s32.totalorder %s33, 1
      %p117 = por %p115, %p116
      %p118 = scmp.ne.s32.totalorder %s107, %s108
      %p119 = scmp.eq.s32.totalorder %s33, 0
      %p120 = por %p118, %p119
      %p121 = scmp.ne.s32.totalorder %s107, %s108
      %p122 = scmp.eq.s32.totalorder %s34, 1
      %p123 = por %p121, %p122
      %p125 = scmp.ne.s32.totalorder %s108, %s124
      %p126 = scmp.eq.s32.totalorder %s34, 0
      %p127 = por %p125, %p126
      %s129 = sadd.s32 %s128, 1
      %p132 = scmp.eq.s32.totalorder %s28, 1
      %p133 = scmp.ne.s32.totalorder %s128, %s130
      %p134 = scmp.eq.s32.totalorder %s28, 0
      %p135 = por %p133, %p134
      %p136 = scmp.ne.s32.totalorder %s128, %s130
      %p137 = scmp.eq.s32.totalorder %s33, 1
      %p138 = por %p136, %p137
      %p139 = scmp.ne.s32.totalorder %s130, %s131
      %p140 = scmp.eq.s32.totalorder %s33, 0
      %p141 = por %p139, %p140
      %p142 = scmp.ne.s32.totalorder %s130, %s131
      %p143 = scmp.eq.s32.totalorder %s34, 1
      %p144 = por %p142, %p143
      %p146 = scmp.ne.s32.totalorder %s131, %s145
      %p147 = scmp.eq.s32.totalorder %s34, 0
      %p148 = por %p146, %p147
      %s150 = sadd.s32 %s149, 1
      %p153 = scmp.eq.s32.totalorder %s28, 1
      %p154 = scmp.ne.s32.totalorder %s149, %s151
      %p155 = scmp.eq.s32.totalorder %s28, 0
      %p156 = por %p154, %p155
      %p157 = scmp.ne.s32.totalorder %s149, %s151
      %p158 = scmp.eq.s32.totalorder %s33, 1
      %p159 = por %p157, %p158
      %p160 = scmp.ne.s32.totalorder %s151, %s152
      %p161 = scmp.eq.s32.totalorder %s33, 0
      %p162 = por %p160, %p161
      %p163 = scmp.ne.s32.totalorder %s151, %s152
      %p164 = scmp.eq.s32.totalorder %s34, 1
      %p165 = por %p163, %p164
      %p167 = scmp.ne.s32.totalorder %s152, %s166
      %p168 = scmp.eq.s32.totalorder %s34, 0
      %p169 = por %p167, %p168
      %s171 = sadd.s32 %s170, 1
      %p174 = scmp.eq.s32.totalorder %s28, 1
      %p175 = scmp.ne.s32.totalorder %s170, %s172
      %p176 = scmp.eq.s32.totalorder %s28, 0
      %p177 = por %p175, %p176
      %p178 = scmp.ne.s32.totalorder %s170, %s172
      %p179 = scmp.eq.s32.totalorder %s33, 1
      %p180 = por %p178, %p179
      %p181 = scmp.ne.s32.totalorder %s172, %s173
      %p182 = scmp.eq.s32.totalorder %s33, 0
      %p183 = por %p181, %p182
      %p184 = scmp.ne.s32.totalorder %s172, %s173
      %p185 = scmp.eq.s32.totalorder %s34, 1
      %p186 = por %p184, %p185
      %p188 = scmp.ne.s32.totalorder %s173, %s187
      %p189 = scmp.eq.s32.totalorder %s34, 0
      %p190 = por %p188, %p189
      %s192 = sadd.s32 %s191, 1
      %p195 = scmp.eq.s32.totalorder %s28, 1
      %p196 = scmp.ne.s32.totalorder %s191, %s193
      %p197 = scmp.eq.s32.totalorder %s28, 0
      %p198 = por %p196, %p197
      %p199 = scmp.ne.s32.totalorder %s191, %s193
      %p200 = scmp.eq.s32.totalorder %s33, 1
      %p201 = por %p199, %p200
      %p202 = scmp.ne.s32.totalorder %s193, %s194
      %p203 = scmp.eq.s32.totalorder %s33, 0
      %p204 = por %p202, %p203
      %p205 = scmp.ne.s32.totalorder %s193, %s194
      %p206 = scmp.eq.s32.totalorder %s34, 1
      %p207 = por %p205, %p206
      %p209 = scmp.ne.s32.totalorder %s194, %s208
      %p210 = scmp.eq.s32.totalorder %s34, 0
      %p211 = por %p209, %p210
      %s213 = sadd.s32 %s212, 1
      %p216 = scmp.eq.s32.totalorder %s28, 1
      %p217 = scmp.ne.s32.totalorder %s212, %s214
      %p218 = scmp.eq.s32.totalorder %s28, 0
      %p219 = por %p217, %p218
      %p220 = scmp.ne.s32.totalorder %s212, %s214
      %p221 = scmp.eq.s32.totalorder %s33, 1
      %p222 = por %p220, %p221
      %p223 = scmp.ne.s32.totalorder %s214, %s215
      %p224 = scmp.eq.s32.totalorder %s33, 0
      %p225 = por %p223, %p224
      %p226 = scmp.ne.s32.totalorder %s214, %s215
      %p227 = scmp.eq.s32.totalorder %s34, 1
      %p228 = por %p226, %p227
      %p230 = scmp.ne.s32.totalorder %s215, %s229
      %p231 = scmp.eq.s32.totalorder %s34, 0
      %p232 = por %p230, %p231
      %s234 = sadd.s32 %s233, 1
      %p237 = scmp.eq.s32.totalorder %s28, 1
      %p238 = scmp.ne.s32.totalorder %s233, %s235
      %p239 = scmp.eq.s32.totalorder %s28, 0
      %p240 = por %p238, %p239
      %p241 = scmp.ne.s32.totalorder %s233, %s235
      %p242 = scmp.eq.s32.totalorder %s33, 1
      %p243 = por %p241, %p242
      %p244 = scmp.ne.s32.totalorder %s235, %s236
      %p245 = scmp.eq.s32.totalorder %s33, 0
      %p246 = por %p244, %p245
      %p247 = scmp.ne.s32.totalorder %s235, %s236
      %p248 = scmp.eq.s32.totalorder %s34, 1
      %p249 = por %p247, %p248
      %p251 = scmp.ne.s32.totalorder %s236, %s250
      %p252 = scmp.eq.s32.totalorder %s34, 0
      %p253 = por %p251, %p252
      %s255 = sadd.s32 %s254, 1
      %p258 = scmp.eq.s32.totalorder %s28, 1
      %p259 = scmp.ne.s32.totalorder %s254, %s256
      %p260 = scmp.eq.s32.totalorder %s28, 0
      %p261 = por %p259, %p260
      %p262 = scmp.ne.s32.totalorder %s254, %s256
      %p263 = scmp.eq.s32.totalorder %s33, 1
      %p264 = por %p262, %p263
      %p265 = scmp.ne.s32.totalorder %s256, %s257
      %p266 = scmp.eq.s32.totalorder %s33, 0
      %p267 = por %p265, %p266
      %p268 = scmp.ne.s32.totalorder %s256, %s257
      %p269 = scmp.eq.s32.totalorder %s34, 1
      %p270 = por %p268, %p269
      %p272 = scmp.ne.s32.totalorder %s257, %s271
      %p273 = scmp.eq.s32.totalorder %s34, 0
      %p274 = por %p272, %p273
      %s276 = sadd.s32 %s275, 1
      %p279 = scmp.eq.s32.totalorder %s28, 1
      %p280 = scmp.ne.s32.totalorder %s275, %s277
      %p281 = scmp.eq.s32.totalorder %s28, 0
      %p282 = por %p280, %p281
      %p283 = scmp.ne.s32.totalorder %s275, %s277
      %p284 = scmp.eq.s32.totalorder %s33, 1
      %p285 = por %p283, %p284
      %p286 = scmp.ne.s32.totalorder %s277, %s278
      %p287 = scmp.eq.s32.totalorder %s33, 0
      %p288 = por %p286, %p287
      %p289 = scmp.ne.s32.totalorder %s277, %s278
      %p290 = scmp.eq.s32.totalorder %s34, 1
      %p291 = por %p289, %p290
      %p293 = scmp.ne.s32.totalorder %s278, %s292
      %p294 = scmp.eq.s32.totalorder %s34, 0
      %p295 = por %p293, %p294
      %s296 = ssub.s32 %s35, %s47
      %s297 = ssub.s32 %s36, %s43
      %s298 = sor.u32 %s296, %s297
      %p299 = scmp.eq.s32.totalorder %s298, 0
      %s301 = sadd.s32 %s300, 1
      %s302 = scalar_select %p299, %s300, %s301
      %p305 = pneg %p299
      %p306 = scmp.eq.s32.totalorder %s28, 1
      %p307 = por %p305, %p306
      %p308 = scmp.ne.s32.totalorder %s300, %s303
      %p309 = scmp.eq.s32.totalorder %s28, 0
      %p310 = por %p308, %p309
      %p311 = scmp.ne.s32.totalorder %s300, %s303
      %p312 = scmp.eq.s32.totalorder %s33, 1
      %p313 = por %p311, %p312
      %p314 = scmp.ne.s32.totalorder %s303, %s304
      %p315 = scmp.eq.s32.totalorder %s33, 0
      %p316 = por %p314, %p315
      %p317 = scmp.ne.s32.totalorder %s303, %s304
      %p318 = scmp.eq.s32.totalorder %s34, 1
      %p319 = por %p317, %p318
      %p321 = scmp.ne.s32.totalorder %s304, %s320
      %p322 = scmp.eq.s32.totalorder %s34, 0
      %p323 = por %p321, %p322
      %p324 = scmp.le.s32.totalorder 1, %s28
      %p325 = scmp.lt.s32.totalorder %s28, 3
      %p326 = pnand %p324, %p325
      %p327 = pneg %p326
      // Predicated region
      $region9: #{tpu_custom_call.1} parent=5 // pred_check
        _
      $region10: #{tpu_custom_call.1} parent=5 // pred_check_branch
        %329 = sbr.rel (%p326) target = $region12
      $region11: #{tpu_custom_call.1} parent=5 // pred_region
        %s330 = ssub.s32 %s28, 1
        // Predicated region
        $region13: #{tpu_custom_call.1} parent=11 // pred_check
          %p331 = pneg %p141
        $region14: #{tpu_custom_call.1} parent=11 // pred_check_branch
          %333 = sbr.rel (%p331) target = $region16
        $region15: #{tpu_custom_call.1} parent=11 // pred_region
          %s335 = ssub.s32 256, 256
          %336 = vsyncadd [#allocation12], %s335
          %s337 = sshll.u32 [#allocation11], 4
          %s338 = int_to_ptr.vmem [resolvable:$true] %s337
          %343 = dma.hbm_to_vmem [thread:$0]  %s3, 256, %s338, [#allocation12], 64, 64, 4
        $region16: #{tpu_custom_call.1} parent=11 // pred_fallthru
          _
        // Predicated region
        $region17: #{tpu_custom_call.1} parent=11 // pred_check
          %p344 = pneg %p162
        $region18: #{tpu_custom_call.1} parent=11 // pred_check_branch
          %346 = sbr.rel (%p344) target = $region20
        $region19: #{tpu_custom_call.1} parent=11 // pred_region
          %s348 = ssub.s32 256, 256
          %349 = vsyncadd [#allocation12], %s348
          %s350 = sshll.u32 [#allocation13], 4
          %s351 = int_to_ptr.vmem [resolvable:$true] %s350
          %356 = dma.hbm_to_vmem [thread:$0]  %s4, 256, %s351, [#allocation12], 64, 64, 4
        $region20: #{tpu_custom_call.1} parent=11 // pred_fallthru
          _
        // Predicated region
        $region21: #{tpu_custom_call.1} parent=11 // pred_check
          %p357 = pneg %p183
        $region22: #{tpu_custom_call.1} parent=11 // pred_check_branch
          %359 = sbr.rel (%p357) target = $region24
        $region23: #{tpu_custom_call.1} parent=11 // pred_region
          _
        $region24: #{tpu_custom_call.1} parent=11 // pred_fallthru
          _
        // Predicated region
        $region25: #{tpu_custom_call.1} parent=11 // pred_check
          %p360 = pneg %p204
        $region26: #{tpu_custom_call.1} parent=11 // pred_check_branch
          %362 = sbr.rel (%p360) target = $region28
        $region27: #{tpu_custom_call.1} parent=11 // pred_region
          %s364 = ssub.s32 256, 256
          %365 = vsyncadd [#allocation15], %s364
          %s366 = sshll.u32 [#allocation14], 4
          %s367 = int_to_ptr.vmem [resolvable:$true] %s366
          %372 = dma.hbm_to_vmem [thread:$0]  %s6, 256, %s367, [#allocation15], 64, 64, 4
        $region28: #{tpu_custom_call.1} parent=11 // pred_fallthru
          _
        // Predicated region
        $region29: #{tpu_custom_call.1} parent=11 // pred_check
          %p373 = pneg %p225
        $region30: #{tpu_custom_call.1} parent=11 // pred_check_branch
          %375 = sbr.rel (%p373) target = $region32
        $region31: #{tpu_custom_call.1} parent=11 // pred_region
          _
        $region32: #{tpu_custom_call.1} parent=11 // pred_fallthru
          _
        // Predicated region
        $region33: #{tpu_custom_call.1} parent=11 // pred_check
          %p376 = pneg %p246
        $region34: #{tpu_custom_call.1} parent=11 // pred_check_branch
          %378 = sbr.rel (%p376) target = $region36
        $region35: #{tpu_custom_call.1} parent=11 // pred_region
          _
        $region36: #{tpu_custom_call.1} parent=11 // pred_fallthru
          _
        // Predicated region
        $region37: #{tpu_custom_call.1} parent=11 // pred_check
          %p379 = pneg %p267
        $region38: #{tpu_custom_call.1} parent=11 // pred_check_branch
          %381 = sbr.rel (%p379) target = $region40
        $region39: #{tpu_custom_call.1} parent=11 // pred_region
          _
        $region40: #{tpu_custom_call.1} parent=11 // pred_fallthru
          _
        // Predicated region
        $region41: #{tpu_custom_call.1} parent=11 // pred_check
          %p382 = pneg %p288
        $region42: #{tpu_custom_call.1} parent=11 // pred_check_branch
          %384 = sbr.rel (%p382) target = $region44
        $region43: #{tpu_custom_call.1} parent=11 // pred_region
          _
        $region44: #{tpu_custom_call.1} parent=11 // pred_fallthru
          _
      $region12: #{tpu_custom_call.1} parent=5 // pred_fallthru
        _
      %p385 = scmp.lt.s32.totalorder %s28, 2
      // Predicated region
      $region45: #{tpu_custom_call.1} parent=5 // pred_check
        %p386 = pneg %p385
      $region46: #{tpu_custom_call.1} parent=5 // pred_check_branch
        %388 = sbr.rel (%p386) target = $region48
      $region47: #{tpu_custom_call.1} parent=5 // pred_region
        // Predicated region
        $region49: #{tpu_custom_call.1} parent=47 // pred_check
          %p389 = pneg %p62
        $region50: #{tpu_custom_call.1} parent=47 // pred_check_branch
          %391 = sbr.rel (%p389) target = $region52
        $region51: #{tpu_custom_call.1} parent=47 // pred_region
          %s392 = sand.u32 %s52, 1
          %s393 = scalar_lea.sflag [#allocation6], %s392
          %s394 = sand.u32 %s52, 1
          %s395 = smul.addr %s394, 4
          %s396 = scalar_lea.vmem [#allocation5], %s395
          %s398 = ssub.s32 64, 64
          %399 = vsyncadd %s393, %s398
          %s400 = sadd.s32 %s36, %s35
          %s401 = smul.addr %s400, 64
          %s402 = scalar_lea.hbm %s0, %s401
          %s404 = sshll.u32 %s396, 4
          %s405 = int_to_ptr.vmem [resolvable:$true] %s404
          %407 = dma.hbm_to_vmem [thread:$0]  %s402, 64, %s405, %s393
        $region52: #{tpu_custom_call.1} parent=47 // pred_fallthru
          _
        // Predicated region
        $region53: #{tpu_custom_call.1} parent=47 // pred_check
          %p408 = pneg %p88
        $region54: #{tpu_custom_call.1} parent=47 // pred_check_branch
          %410 = sbr.rel (%p408) target = $region56
        $region55: #{tpu_custom_call.1} parent=47 // pred_region
          %s411 = sand.u32 %s28, 1
          %s412 = scalar_lea.sflag [#allocation9], %s411
          %s413 = sand.u32 %s78, 1
          %s414 = smul.addr %s413, 4
          %s415 = scalar_lea.vmem [#allocation8], %s414
          %s417 = ssub.s32 64, 64
          %418 = vsyncadd %s412, %s417
          %s419 = smul.addr %s35, 64
          %s420 = scalar_lea.hbm %s1, %s419
          %s422 = sshll.u32 %s415, 4
          %s423 = int_to_ptr.vmem [resolvable:$true] %s422
          %425 = dma.hbm_to_vmem [thread:$0]  %s420, 64, %s423, %s412
        $region56: #{tpu_custom_call.1} parent=47 // pred_fallthru
          _
        // Predicated region
        $region57: #{tpu_custom_call.1} parent=47 // pred_check
          %p426 = pneg %p114
        $region58: #{tpu_custom_call.1} parent=47 // pred_check_branch
          %428 = sbr.rel (%p426) target = $region60
        $region59: #{tpu_custom_call.1} parent=47 // pred_region
          %s429 = sand.u32 %s28, 1
          %s430 = scalar_lea.sflag [#allocation9], %s429
          %s431 = sand.u32 %s104, 1
          %s432 = smul.addr %s431, 4
          %s433 = scalar_lea.vmem [#allocation10], %s432
          %s435 = ssub.s32 64, 64
          %436 = vsyncadd %s430, %s435
          %s437 = smul.addr %s35, 64
          %s438 = scalar_lea.hbm %s2, %s437
          %s440 = sshll.u32 %s433, 4
          %s441 = int_to_ptr.vmem [resolvable:$true] %s440
          %443 = dma.hbm_to_vmem [thread:$0]  %s438, 64, %s441, %s430
        $region60: #{tpu_custom_call.1} parent=47 // pred_fallthru
          _
      $region48: #{tpu_custom_call.1} parent=5 // pred_fallthru
        _
      %p444 = scmp.le.s32.totalorder 1, %s28
      %p445 = scmp.lt.s32.totalorder %s28, 3
      %p446 = pnand %p444, %p445
      %p447 = pneg %p446
      // Predicated region
      $region61: #{tpu_custom_call.1} parent=5 // pred_check
        _
      $region62: #{tpu_custom_call.1} parent=5 // pred_check_branch
        %449 = sbr.rel (%p446) target = $region64
      $region63: #{tpu_custom_call.1} parent=5 // pred_region
        %s450 = ssub.s32 %s28, 1
        %s451 = sand.u32 %s55, 1
        %s452 = scalar_lea.sflag [#allocation6], %s451
        %s453 = sand.u32 %s55, 1
        %s454 = smul.addr %s453, 4
        %s455 = scalar_lea.vmem [#allocation5], %s454
        // Predicated region
        $region65: #{tpu_custom_call.1} parent=63 // pred_check
          %p456 = pneg %p68
        $region66: #{tpu_custom_call.1} parent=63 // pred_check_branch
          %458 = sbr.rel (%p456) target = $region68
        $region67: #{tpu_custom_call.1} parent=63 // pred_region
          %459 = dma.done %s452, 64
        $region68: #{tpu_custom_call.1} parent=63 // pred_fallthru
          _
        %s460 = sand.u32 %s33, 1
        %s461 = scalar_lea.sflag [#allocation9], %s460
        %s462 = sand.u32 %s81, 1
        %s463 = smul.addr %s462, 4
        %s464 = scalar_lea.vmem [#allocation8], %s463
        // Predicated region
        $region69: #{tpu_custom_call.1} parent=63 // pred_check
          %p465 = pneg %p94
        $region70: #{tpu_custom_call.1} parent=63 // pred_check_branch
          %467 = sbr.rel (%p465) target = $region72
        $region71: #{tpu_custom_call.1} parent=63 // pred_region
          %468 = dma.done %s461, 64
        $region72: #{tpu_custom_call.1} parent=63 // pred_fallthru
          _
        %s469 = sand.u32 %s33, 1
        %s470 = scalar_lea.sflag [#allocation9], %s469
        %s471 = sand.u32 %s107, 1
        %s472 = smul.addr %s471, 4
        %s473 = scalar_lea.vmem [#allocation10], %s472
        // Predicated region
        $region73: #{tpu_custom_call.1} parent=63 // pred_check
          %p474 = pneg %p120
        $region74: #{tpu_custom_call.1} parent=63 // pred_check_branch
          %476 = sbr.rel (%p474) target = $region76
        $region75: #{tpu_custom_call.1} parent=63 // pred_region
          %477 = dma.done %s470, 64
        $region76: #{tpu_custom_call.1} parent=63 // pred_fallthru
          _
        // Predicated region
        $region77: #{tpu_custom_call.1} parent=63 // pred_check
          %p478 = pneg %p141
        $region78: #{tpu_custom_call.1} parent=63 // pred_check_branch
          %480 = sbr.rel (%p478) target = $region80
        $region79: #{tpu_custom_call.1} parent=63 // pred_region
          %481 = dma.done [#allocation12], 256
        $region80: #{tpu_custom_call.1} parent=63 // pred_fallthru
          _
        // Predicated region
        $region81: #{tpu_custom_call.1} parent=63 // pred_check
          %p482 = pneg %p162
        $region82: #{tpu_custom_call.1} parent=63 // pred_check_branch
          %484 = sbr.rel (%p482) target = $region84
        $region83: #{tpu_custom_call.1} parent=63 // pred_region
          %485 = dma.done [#allocation12], 256
        $region84: #{tpu_custom_call.1} parent=63 // pred_fallthru
          _
        // Predicated region
        $region85: #{tpu_custom_call.1} parent=63 // pred_check
          %p486 = pneg %p204
        $region86: #{tpu_custom_call.1} parent=63 // pred_check_branch
          %488 = sbr.rel (%p486) target = $region88
        $region87: #{tpu_custom_call.1} parent=63 // pred_region
          %489 = dma.done [#allocation15], 256
        $region88: #{tpu_custom_call.1} parent=63 // pred_fallthru
          _
        %s490 = sand.u32 %s55, 1
        %s491 = scalar_lea.sflag [#allocation6], %s490
        %s492 = sand.u32 %s55, 1
        %s493 = smul.addr %s492, 4
        %s494 = scalar_lea.vmem [#allocation5], %s493
        %p495 = pneg %p68
        %p496 = pneg %p65
        %s497 = sand.u32 %s33, 1
        %s498 = scalar_lea.sflag [#allocation9], %s497
        %s499 = sand.u32 %s81, 1
        %s500 = smul.addr %s499, 4
        %s501 = scalar_lea.vmem [#allocation8], %s500
        %p502 = pneg %p94
        %p503 = pneg %p91
        %s504 = sand.u32 %s33, 1
        %s505 = scalar_lea.sflag [#allocation9], %s504
        %s506 = sand.u32 %s107, 1
        %s507 = smul.addr %s506, 4
        %s508 = scalar_lea.vmem [#allocation10], %s507
        %p509 = pneg %p120
        %p510 = pneg %p117
        %p511 = pneg %p141
        %p512 = pneg %p138
        %p513 = pneg %p162
        %p514 = pneg %p159
        %p515 = pneg %p183
        %p516 = pneg %p180
        %p517 = pneg %p204
        %p518 = pneg %p201
        %p519 = pneg %p225
        %p520 = pneg %p222
        %p521 = pneg %p246
        %p522 = pneg %p243
        %p523 = pneg %p267
        %p524 = pneg %p264
        %p525 = pneg %p288
        %p526 = pneg %p285
        %p527 = pneg %p316
        %p528 = pneg %p313
        %s529 = sand.u32 %s303, 1
        %s530 = scalar_lea.sflag [#allocation7], %s529
        %s531 = sand.u32 %s303, 1
        %s532 = smul.addr %s531, 4
        %s533 = scalar_lea.vmem [#allocation16], %s532
        %p535 = scmp.eq.s32.totalorder %s38, 0
        // Predicated region
        $region89: #{tpu_custom_call.1} parent=63 // pred_check
          %p536 = pneg %p535
        $region90: #{tpu_custom_call.1} parent=63 // pred_check_branch
          %538 = sbr.rel (%p536) target = $region92
        $region91: #{tpu_custom_call.1} parent=63 // pred_region
          %v539 = vld [vmem:[%s464] sm:$0xf]
          %v540 = vld [vmem:[#allocation13] sm:$0xf]
          %v541 = vld [vmem:[#allocation13 + $0x4] sm:$0xf]
          %v542 = vld [vmem:[#allocation13 + $0x8] sm:$0xf]
          %v543 = vld [vmem:[#allocation13 + $0xc] sm:$0xf]
          %v544 = vld [vmem:[%s8] sm:$0x1]
          %v546 = vlaneseq
          %v547 = vshrl.u32 %v546, 7
          %v548 = vsub.s32 0, %v547
          %v549 = vrot.slane %v544, %v548
          %v555 = vunpack.c.l.b16 %v540
          %v556 = vunpack.c.l.b16 %v541
          %v557 = vunpack.c.l.b16 %v542
          %v558 = vunpack.c.l.b16 %v543
          %v559 = vpack.c.b16 %v556, %v555
          %v560 = vpack.c.b16 %v558, %v557
          %vm563 = vcmask 261120
          %v565 = vsel %vm563, %v539, 0
          %567 = vmatprep.subr.bf16.mxu0 0
          %568 = vmatpush1.bf16.msra.mxu0 %v559
          %569 = vmatprep.subr.bf16.mxu0 0
          %570 = vmatpush1.bf16.msra.mxu0 %v560
          %571 = vmatprep.subr.bf16.mxu0 0
          %572 = vmatpush1.bf16.msra.mxu0 0
          %573 = vmatprep.subr.bf16.mxu0 0
          %574 = vmatpush1.bf16.msra.mxu0 0
          %575 = vmatprep.subr.bf16.mxu0 0
          %576 = vmatpush1.bf16.msra.mxu0 0
          %577 = vmatprep.subr.bf16.mxu0 0
          %578 = vmatpush1.bf16.msra.mxu0 0
          %579 = vmatprep.subr.bf16.mxu0 0
          %580 = vmatpush1.bf16.msra.mxu0 0
          %581 = vmatprep.subr.bf16.mxu0 0
          %582 = vmatpush1.bf16.msra.mxu0 0
          %583 = vmatprep.subr.bf16.mxu0 0
          %584 = vmatpush1.bf16.msra.mxu0 0
          %585 = vmatprep.subr.bf16.mxu0 0
          %586 = vmatpush1.bf16.msra.mxu0 0
          %587 = vmatprep.subr.bf16.mxu0 0
          %588 = vmatpush1.bf16.msra.mxu0 0
          %589 = vmatprep.subr.bf16.mxu0 0
          %590 = vmatpush1.bf16.msra.mxu0 0
          %591 = vmatprep.subr.bf16.mxu0 0
          %592 = vmatpush1.bf16.msra.mxu0 0
          %593 = vmatprep.subr.bf16.mxu0 0
          %594 = vmatpush1.bf16.msra.mxu0 0
          %595 = vmatprep.subr.bf16.mxu0 0
          %596 = vmatpush1.bf16.msra.mxu0 0
          %597 = vmatprep.subr.bf16.mxu0 0
          %598 = vmatpush1.bf16.msra.mxu0 0
          %599 = vmatprep.mubr.bf16.mxu0 0
          %600 = vmatmul.mubr.bf16.gmra.mrb[0].mxu0 %v565
          %v601 = vpop.f32.mrb[0].mxu0
          %v602 = vadd.f32 %v549, %v601
          %v603 = vpop.f32.mrb[0].mxu0
          %v604 = vpop.f32.mrb[0].mxu0
          %v605 = vpop.f32.mrb[0].mxu0
          %606 = vdwg.mxu0
          %v607 = vld [vmem:[%s473] sm:$0xf]
          %v608 = vld [vmem:[%s5] sm:$0xf]
          %v609 = vld [vmem:[%s5 + $0x4] sm:$0xf]
          %v610 = vld [vmem:[%s5 + $0x8] sm:$0xf]
          %v611 = vld [vmem:[%s5 + $0xc] sm:$0xf]
          %v612 = vld [vmem:[%s9] sm:$0x1]
          %v614 = vlaneseq
          %v615 = vshrl.u32 %v614, 7
          %v616 = vsub.s32 0, %v615
          %v617 = vrot.slane %v612, %v616
          %v623 = vunpack.c.l.b16 %v608
          %v624 = vunpack.c.l.b16 %v609
          %v625 = vunpack.c.l.b16 %v610
          %v626 = vunpack.c.l.b16 %v611
          %v627 = vpack.c.b16 %v624, %v623
          %v628 = vpack.c.b16 %v626, %v625
          %v632 = vsel %vm563, %v607, 0
          %634 = vmatprep.subr.bf16.mxu0 0
          %635 = vmatpush1.bf16.msra.mxu0 %v627
          %636 = vmatprep.subr.bf16.mxu0 0
          %637 = vmatpush1.bf16.msra.mxu0 %v628
          %638 = vmatprep.subr.bf16.mxu0 0
          %639 = vmatpush1.bf16.msra.mxu0 0
          %640 = vmatprep.subr.bf16.mxu0 0
          %641 = vmatpush1.bf16.msra.mxu0 0
          %642 = vmatprep.subr.bf16.mxu0 0
          %643 = vmatpush1.bf16.msra.mxu0 0
          %644 = vmatprep.subr.bf16.mxu0 0
          %645 = vmatpush1.bf16.msra.mxu0 0
          %646 = vmatprep.subr.bf16.mxu0 0
          %647 = vmatpush1.bf16.msra.mxu0 0
          %648 = vmatprep.subr.bf16.mxu0 0
          %649 = vmatpush1.bf16.msra.mxu0 0
          %650 = vmatprep.subr.bf16.mxu0 0
          %651 = vmatpush1.bf16.msra.mxu0 0
          %652 = vmatprep.subr.bf16.mxu0 0
          %653 = vmatpush1.bf16.msra.mxu0 0
          %654 = vmatprep.subr.bf16.mxu0 0
          %655 = vmatpush1.bf16.msra.mxu0 0
          %656 = vmatprep.subr.bf16.mxu0 0
          %657 = vmatpush1.bf16.msra.mxu0 0
          %658 = vmatprep.subr.bf16.mxu0 0
          %659 = vmatpush1.bf16.msra.mxu0 0
          %660 = vmatprep.subr.bf16.mxu0 0
          %661 = vmatpush1.bf16.msra.mxu0 0
          %662 = vmatprep.subr.bf16.mxu0 0
          %663 = vmatpush1.bf16.msra.mxu0 0
          %664 = vmatprep.subr.bf16.mxu0 0
          %665 = vmatpush1.bf16.msra.mxu0 0
          %666 = vmatprep.mubr.bf16.mxu0 0
          %667 = vmatmul.mubr.bf16.gmra.mrb[0].mxu0 %v632
          %v668 = vpop.f32.mrb[0].mxu0
          %v669 = vadd.f32 %v617, %v668
          %v670 = vpop.f32.mrb[0].mxu0
          %v671 = vpop.f32.mrb[0].mxu0
          %v672 = vpop.f32.mrb[0].mxu0
          %673 = vdwg.mxu0
          %v674 = vpack.c.bf16 %v602, %v602
          %vm675 = vcmask 257024
          %676 = vst.msk [vmem:[#allocation2] sm:$0xf] %vm675, %v674
          %v677 = vpack.c.bf16 %v669, %v669
          %678 = vst.msk [vmem:[#allocation3] sm:$0xf] %vm675, %v677
        $region92: #{tpu_custom_call.1} parent=63 // pred_fallthru
          _
        %v679 = vld [vmem:[%s455] sm:$0xf]
        %v680 = vld [vmem:[#allocation11] sm:$0xf]
        %v681 = vld [vmem:[#allocation11 + $0x4] sm:$0xf]
        %v682 = vld [vmem:[#allocation11 + $0x8] sm:$0xf]
        %v683 = vld [vmem:[#allocation11 + $0xc] sm:$0xf]
        %v684 = vld [vmem:[%s7] sm:$0x1]
        %v686 = vlaneseq
        %v687 = vshrl.u32 %v686, 7
        %v688 = vsub.s32 0, %v687
        %v689 = vrot.slane %v684, %v688
        %v695 = vunpack.c.l.b16 %v680
        %v696 = vunpack.c.l.b16 %v681
        %v697 = vunpack.c.l.b16 %v682
        %v698 = vunpack.c.l.b16 %v683
        %v699 = vpack.c.b16 %v696, %v695
        %v700 = vpack.c.b16 %v698, %v697
        %vm703 = vcmask 261120
        %v705 = vsel %vm703, %v679, 0
        %707 = vmatprep.subr.bf16.mxu0 0
        %708 = vmatpush1.bf16.msra.mxu0 %v699
        %709 = vmatprep.subr.bf16.mxu0 0
        %710 = vmatpush1.bf16.msra.mxu0 %v700
        %711 = vmatprep.subr.bf16.mxu0 0
        %712 = vmatpush1.bf16.msra.mxu0 0
        %713 = vmatprep.subr.bf16.mxu0 0
        %714 = vmatpush1.bf16.msra.mxu0 0
        %715 = vmatprep.subr.bf16.mxu0 0
        %716 = vmatpush1.bf16.msra.mxu0 0
        %717 = vmatprep.subr.bf16.mxu0 0
        %718 = vmatpush1.bf16.msra.mxu0 0
        %719 = vmatprep.subr.bf16.mxu0 0
        %720 = vmatpush1.bf16.msra.mxu0 0
        %721 = vmatprep.subr.bf16.mxu0 0
        %722 = vmatpush1.bf16.msra.mxu0 0
        %723 = vmatprep.subr.bf16.mxu0 0
        %724 = vmatpush1.bf16.msra.mxu0 0
        %725 = vmatprep.subr.bf16.mxu0 0
        %726 = vmatpush1.bf16.msra.mxu0 0
        %727 = vmatprep.subr.bf16.mxu0 0
        %728 = vmatpush1.bf16.msra.mxu0 0
        %729 = vmatprep.subr.bf16.mxu0 0
        %730 = vmatpush1.bf16.msra.mxu0 0
        %731 = vmatprep.subr.bf16.mxu0 0
        %732 = vmatpush1.bf16.msra.mxu0 0
        %733 = vmatprep.subr.bf16.mxu0 0
        %734 = vmatpush1.bf16.msra.mxu0 0
        %735 = vmatprep.subr.bf16.mxu0 0
        %736 = vmatpush1.bf16.msra.mxu0 0
        %737 = vmatprep.subr.bf16.mxu0 0
        %738 = vmatpush1.bf16.msra.mxu0 0
        %739 = vmatprep.mubr.bf16.mxu0 0
        %740 = vmatmul.mubr.bf16.gmra.mrb[0].mxu0 %v705
        %v741 = vpop.f32.mrb[0].mxu0
        %v742 = vadd.f32 %v689, %v741
        %v743 = vpop.f32.mrb[0].mxu0
        %v744 = vpop.f32.mrb[0].mxu0
        %v745 = vpop.f32.mrb[0].mxu0
        %746 = vdwg.mxu0
        %v747 = vpack.c.bf16 %v742, %v742
        %v748 = vld [vmem:[#allocation2] sm:$0xf]
        %v749 = vld [vmem:[#allocation3] sm:$0xf]
        %vm750 = vcmask 64512
        %v752 = vsel %vm750, %v747, 0
        %v755 = vsel %vm750, %v748, 0
        %757 = vmatprep.subr.bf16.mxu0 0
        %758 = vmatpush1.bf16.xpose.msra.mxu0 %v755
        %759 = vmatprep.subr.bf16.mxu0 0
        %760 = vmatpush1.bf16.xpose.msra.mxu0 0
        %761 = vmatprep.subr.bf16.mxu0 0
        %762 = vmatpush1.bf16.xpose.msra.mxu0 0
        %763 = vmatprep.subr.bf16.mxu0 0
        %764 = vmatpush1.bf16.xpose.msra.mxu0 0
        %765 = vmatprep.subr.bf16.mxu0 0
        %766 = vmatpush1.bf16.xpose.msra.mxu0 0
        %767 = vmatprep.subr.bf16.mxu0 0
        %768 = vmatpush1.bf16.xpose.msra.mxu0 0
        %769 = vmatprep.subr.bf16.mxu0 0
        %770 = vmatpush1.bf16.xpose.msra.mxu0 0
        %771 = vmatprep.subr.bf16.mxu0 0
        %772 = vmatpush1.bf16.xpose.msra.mxu0 0
        %773 = vmatprep.subr.bf16.mxu0 0
        %774 = vmatpush1.bf16.xpose.msra.mxu0 0
        %775 = vmatprep.subr.bf16.mxu0 0
        %776 = vmatpush1.bf16.xpose.msra.mxu0 0
        %777 = vmatprep.subr.bf16.mxu0 0
        %778 = vmatpush1.bf16.xpose.msra.mxu0 0
        %779 = vmatprep.subr.bf16.mxu0 0
        %780 = vmatpush1.bf16.xpose.msra.mxu0 0
        %781 = vmatprep.subr.bf16.mxu0 0
        %782 = vmatpush1.bf16.xpose.msra.mxu0 0
        %783 = vmatprep.subr.bf16.mxu0 0
        %784 = vmatpush1.bf16.xpose.msra.mxu0 0
        %785 = vmatprep.subr.bf16.mxu0 0
        %786 = vmatpush1.bf16.xpose.msra.mxu0 0
        %787 = vmatprep.subr.bf16.mxu0 0
        %788 = vmatpush1.bf16.xpose.msra.mxu0 0
        %789 = vmatprep.mubr.bf16.mxu0 0
        %790 = vmatmul.mubr.bf16.gmra.mrb[0].mxu0 %v752
        %v791 = vpop.f32.mrb[0].mxu0
        %v792 = vadd.f32 0.0, %v791
        %v793 = vpop.f32.mrb[0].mxu0
        %v794 = vpop.f32.mrb[0].mxu0
        %v795 = vpop.f32.mrb[0].mxu0
        %796 = vdwg.mxu0
        %v797 = vsel %vm750, %v792, -inf
        %798 = vmax.xlane.f32.xlu0 %v797
        %v799 = vpop.xlane.xlu0 %798
        %v800 = vsub.f32 %v792, %v799
        %v801 = vmul.f32 %v800, 1.442695
        %v802 = vpow.pop %v801
        %v803 = vsel %vm750, %v802, 0.0
        %804 = vadd.xlane.f32.xlu0 %v803
        %v805 = vpop.xlane.xlu0 %804
        %v806 = vrcp.pop %v805
        %v807 = vmul.f32 %v802, %v806
        %v808 = vpack.c.bf16 %v807, %v807
        %v810 = vsel %vm750, %v808, 0
        %vm812 = vcmask 1043456
        %v814 = vsel %vm812, %v749, 0
        %816 = vmatprep.subr.bf16.mxu0 0
        %817 = vmatpush1.bf16.msra.mxu0 %v814
        %818 = vmatprep.subr.bf16.mxu0 0
        %819 = vmatpush1.bf16.msra.mxu0 0
        %820 = vmatprep.subr.bf16.mxu0 0
        %821 = vmatpush1.bf16.msra.mxu0 0
        %822 = vmatprep.subr.bf16.mxu0 0
        %823 = vmatpush1.bf16.msra.mxu0 0
        %824 = vmatprep.subr.bf16.mxu0 0
        %825 = vmatpush1.bf16.msra.mxu0 0
        %826 = vmatprep.subr.bf16.mxu0 0
        %827 = vmatpush1.bf16.msra.mxu0 0
        %828 = vmatprep.subr.bf16.mxu0 0
        %829 = vmatpush1.bf16.msra.mxu0 0
        %830 = vmatprep.subr.bf16.mxu0 0
        %831 = vmatpush1.bf16.msra.mxu0 0
        %832 = vmatprep.subr.bf16.mxu0 0
        %833 = vmatpush1.bf16.msra.mxu0 0
        %834 = vmatprep.subr.bf16.mxu0 0
        %835 = vmatpush1.bf16.msra.mxu0 0
        %836 = vmatprep.subr.bf16.mxu0 0
        %837 = vmatpush1.bf16.msra.mxu0 0
        %838 = vmatprep.subr.bf16.mxu0 0
        %839 = vmatpush1.bf16.msra.mxu0 0
        %840 = vmatprep.subr.bf16.mxu0 0
        %841 = vmatpush1.bf16.msra.mxu0 0
        %842 = vmatprep.subr.bf16.mxu0 0
        %843 = vmatpush1.bf16.msra.mxu0 0
        %844 = vmatprep.subr.bf16.mxu0 0
        %845 = vmatpush1.bf16.msra.mxu0 0
        %846 = vmatprep.subr.bf16.mxu0 0
        %847 = vmatpush1.bf16.msra.mxu0 0
        %848 = vmatprep.mubr.bf16.mxu0 0
        %849 = vmatmul.mubr.bf16.gmra.mrb[0].mxu0 %v810
        %v850 = vpop.f32.mrb[0].mxu0
        %v851 = vadd.f32 0.0, %v850
        %v852 = vpop.f32.mrb[0].mxu0
        %v853 = vpop.f32.mrb[0].mxu0
        %v854 = vpop.f32.mrb[0].mxu0
        %855 = vdwg.mxu0
        %v856 = vpack.c.bf16 %v851, %v851
        %vm857 = vcmask 60416
        %858 = vst.msk [vmem:[#allocation4] sm:$0xf] %vm857, %v856
        %860 = vrot.lane.b32.xlu0 %v747, 120
        %v861 = vpop.permute.xlu0 %860
        %v863 = vunpack.c.l.b16 %v748
        %v864 = vpack.c.b16 %v863, %v863
        %865 = vrot.lane.b32.xlu0 %v864, 120
        %v866 = vpop.permute.xlu0 %865
        %v868 = vsel %vm750, %v861, 0
        %v871 = vsel %vm750, %v866, 0
        %873 = vmatprep.subr.bf16.mxu0 0
        %874 = vmatpush1.bf16.xpose.msra.mxu0 %v871
        %875 = vmatprep.subr.bf16.mxu0 0
        %876 = vmatpush1.bf16.xpose.msra.mxu0 0
        %877 = vmatprep.subr.bf16.mxu0 0
        %878 = vmatpush1.bf16.xpose.msra.mxu0 0
        %879 = vmatprep.subr.bf16.mxu0 0
        %880 = vmatpush1.bf16.xpose.msra.mxu0 0
        %881 = vmatprep.subr.bf16.mxu0 0
        %882 = vmatpush1.bf16.xpose.msra.mxu0 0
        %883 = vmatprep.subr.bf16.mxu0 0
        %884 = vmatpush1.bf16.xpose.msra.mxu0 0
        %885 = vmatprep.subr.bf16.mxu0 0
        %886 = vmatpush1.bf16.xpose.msra.mxu0 0
        %887 = vmatprep.subr.bf16.mxu0 0
        %888 = vmatpush1.bf16.xpose.msra.mxu0 0
        %889 = vmatprep.subr.bf16.mxu0 0
        %890 = vmatpush1.bf16.xpose.msra.mxu0 0
        %891 = vmatprep.subr.bf16.mxu0 0
        %892 = vmatpush1.bf16.xpose.msra.mxu0 0
        %893 = vmatprep.subr.bf16.mxu0 0
        %894 = vmatpush1.bf16.xpose.msra.mxu0 0
        %895 = vmatprep.subr.bf16.mxu0 0
        %896 = vmatpush1.bf16.xpose.msra.mxu0 0
        %897 = vmatprep.subr.bf16.mxu0 0
        %898 = vmatpush1.bf16.xpose.msra.mxu0 0
        %899 = vmatprep.subr.bf16.mxu0 0
        %900 = vmatpush1.bf16.xpose.msra.mxu0 0
        %901 = vmatprep.subr.bf16.mxu0 0
        %902 = vmatpush1.bf16.xpose.msra.mxu0 0
        %903 = vmatprep.subr.bf16.mxu0 0
        %904 = vmatpush1.bf16.xpose.msra.mxu0 0
        %905 = vmatprep.mubr.bf16.mxu0 0
        %906 = vmatmul.mubr.bf16.gmra.mrb[0].mxu0 %v868
        %v907 = vpop.f32.mrb[0].mxu0
        %v908 = vadd.f32 0.0, %v907
        %v909 = vpop.f32.mrb[0].mxu0
        %v910 = vpop.f32.mrb[0].mxu0
        %v911 = vpop.f32.mrb[0].mxu0
        %912 = vdwg.mxu0
        %v913 = vsel %vm750, %v908, -inf
        %914 = vmax.xlane.f32.xlu0 %v913
        %v915 = vpop.xlane.xlu0 %914
        %v916 = vsub.f32 %v908, %v915
        %v917 = vmul.f32 %v916, 1.442695
        %v918 = vpow.pop %v917
        %v919 = vsel %vm750, %v918, 0.0
        %920 = vadd.xlane.f32.xlu0 %v919
        %v921 = vpop.xlane.xlu0 %920
        %v922 = vrcp.pop %v921
        %v923 = vmul.f32 %v918, %v922
        %v924 = vpack.c.bf16 %v923, %v923
        %v926 = vunpack.c.l.b16 %v749
        %v927 = vpack.c.b16 %v926, %v926
        %928 = vrot.lane.b32.xlu0 %v927, 120
        %v929 = vpop.permute.xlu0 %928
        %v931 = vsel %vm750, %v924, 0
        %v934 = vsel %vm812, %v929, 0
        %936 = vmatprep.subr.bf16.mxu0 0
        %937 = vmatpush1.bf16.msra.mxu0 %v934
        %938 = vmatprep.subr.bf16.mxu0 0
        %939 = vmatpush1.bf16.msra.mxu0 0
        %940 = vmatprep.subr.bf16.mxu0 0
        %941 = vmatpush1.bf16.msra.mxu0 0
        %942 = vmatprep.subr.bf16.mxu0 0
        %943 = vmatpush1.bf16.msra.mxu0 0
        %944 = vmatprep.subr.bf16.mxu0 0
        %945 = vmatpush1.bf16.msra.mxu0 0
        %946 = vmatprep.subr.bf16.mxu0 0
        %947 = vmatpush1.bf16.msra.mxu0 0
        %948 = vmatprep.subr.bf16.mxu0 0
        %949 = vmatpush1.bf16.msra.mxu0 0
        %950 = vmatprep.subr.bf16.mxu0 0
        %951 = vmatpush1.bf16.msra.mxu0 0
        %952 = vmatprep.subr.bf16.mxu0 0
        %953 = vmatpush1.bf16.msra.mxu0 0
        %954 = vmatprep.subr.bf16.mxu0 0
        %955 = vmatpush1.bf16.msra.mxu0 0
        %956 = vmatprep.subr.bf16.mxu0 0
        %957 = vmatpush1.bf16.msra.mxu0 0
        %958 = vmatprep.subr.bf16.mxu0 0
        %959 = vmatpush1.bf16.msra.mxu0 0
        %960 = vmatprep.subr.bf16.mxu0 0
        %961 = vmatpush1.bf16.msra.mxu0 0
        %962 = vmatprep.subr.bf16.mxu0 0
        %963 = vmatpush1.bf16.msra.mxu0 0
        %964 = vmatprep.subr.bf16.mxu0 0
        %965 = vmatpush1.bf16.msra.mxu0 0
        %966 = vmatprep.subr.bf16.mxu0 0
        %967 = vmatpush1.bf16.msra.mxu0 0
        %968 = vmatprep.mubr.bf16.mxu0 0
        %969 = vmatmul.mubr.bf16.gmra.mrb[0].mxu0 %v931
        %v970 = vpop.f32.mrb[0].mxu0
        %v971 = vadd.f32 0.0, %v970
        %v972 = vpop.f32.mrb[0].mxu0
        %v973 = vpop.f32.mrb[0].mxu0
        %v974 = vpop.f32.mrb[0].mxu0
        %975 = vdwg.mxu0
        %v976 = vpack.c.bf16 %v971, %v971
        %v978 = vunpack.c.l.b16 %v976
        %v979 = vpack.c.b16 %v978, %v978
        %980 = vrot.lane.b32.xlu0 %v979, 8
        %v981 = vpop.permute.xlu0 %980
        %vm983 = vcmask 126016
        %984 = vst.msk [vmem:[#allocation4] sm:$0xf] %vm983, %v981
        %985 = vrot.lane.b32.xlu0 %v747, 112
        %v986 = vpop.permute.xlu0 %985
        %987 = vrot.lane.b32.xlu0 %v864, 112
        %v988 = vpop.permute.xlu0 %987
        %v990 = vsel %vm750, %v986, 0
        %v993 = vsel %vm750, %v988, 0
        %995 = vmatprep.subr.bf16.mxu0 0
        %996 = vmatpush1.bf16.xpose.msra.mxu0 %v993
        %997 = vmatprep.subr.bf16.mxu0 0
        %998 = vmatpush1.bf16.xpose.msra.mxu0 0
        %999 = vmatprep.subr.bf16.mxu0 0
        %1000 = vmatpush1.bf16.xpose.msra.mxu0 0
        %1001 = vmatprep.subr.bf16.mxu0 0
        %1002 = vmatpush1.bf16.xpose.msra.mxu0 0
        %1003 = vmatprep.subr.bf16.mxu0 0
        %1004 = vmatpush1.bf16.xpose.msra.mxu0 0
        %1005 = vmatprep.subr.bf16.mxu0 0
        %1006 = vmatpush1.bf16.xpose.msra.mxu0 0
        %1007 = vmatprep.subr.bf16.mxu0 0
        %1008 = vmatpush1.bf16.xpose.msra.mxu0 0
        %1009 = vmatprep.subr.bf16.mxu0 0
        %1010 = vmatpush1.bf16.xpose.msra.mxu0 0
        %1011 = vmatprep.subr.bf16.mxu0 0
        %1012 = vmatpush1.bf16.xpose.msra.mxu0 0
        %1013 = vmatprep.subr.bf16.mxu0 0
        %1014 = vmatpush1.bf16.xpose.msra.mxu0 0
        %1015 = vmatprep.subr.bf16.mxu0 0
        %1016 = vmatpush1.bf16.xpose.msra.mxu0 0
        %1017 = vmatprep.subr.bf16.mxu0 0
        %1018 = vmatpush1.bf16.xpose.msra.mxu0 0
        %1019 = vmatprep.subr.bf16.mxu0 0
        %1020 = vmatpush1.bf16.xpose.msra.mxu0 0
        %1021 = vmatprep.subr.bf16.mxu0 0
        %1022 = vmatpush1.bf16.xpose.msra.mxu0 0
        %1023 = vmatprep.subr.bf16.mxu0 0
        %1024 = vmatpush1.bf16.xpose.msra.mxu0 0
        %1025 = vmatprep.subr.bf16.mxu0 0
        %1026 = vmatpush1.bf16.xpose.msra.mxu0 0
        %1027 = vmatprep.mubr.bf16.mxu0 0
        %1028 = vmatmul.mubr.bf16.gmra.mrb[0].mxu0 %v990
        %v1029 = vpop.f32.mrb[0].mxu0
        %v1030 = vadd.f32 0.0, %v1029
        %v1031 = vpop.f32.mrb[0].mxu0
        %v1032 = vpop.f32.mrb[0].mxu0
        %v1033 = vpop.f32.mrb[0].mxu0
        %1034 = vdwg.mxu0
        %v1035 = vsel %vm750, %v1030, -inf
        %1036 = vmax.xlane.f32.xlu0 %v1035
        %v1037 = vpop.xlane.xlu0 %1036
        %v1038 = vsub.f32 %v1030, %v1037
        %v1039 = vmul.f32 %v1038, 1.442695
        %v1040 = vpow.pop %v1039
        %v1041 = vsel %vm750, %v1040, 0.0
        %1042 = vadd.xlane.f32.xlu0 %v1041
        %v1043 = vpop.xlane.xlu0 %1042
        %v1044 = vrcp.pop %v1043
        %v1045 = vmul.f32 %v1040, %v1044
        %v1046 = vpack.c.bf16 %v1045, %v1045
        %1047 = vrot.lane.b32.xlu0 %v927, 112
        %v1048 = vpop.permute.xlu0 %1047
        %v1050 = vsel %vm750, %v1046, 0
        %v1053 = vsel %vm812, %v1048, 0
        %1055 = vmatprep.subr.bf16.mxu0 0
        %1056 = vmatpush1.bf16.msra.mxu0 %v1053
        %1057 = vmatprep.subr.bf16.mxu0 0
        %1058 = vmatpush1.bf16.msra.mxu0 0
        %1059 = vmatprep.subr.bf16.mxu0 0
        %1060 = vmatpush1.bf16.msra.mxu0 0
        %1061 = vmatprep.subr.bf16.mxu0 0
        %1062 = vmatpush1.bf16.msra.mxu0 0
        %1063 = vmatprep.subr.bf16.mxu0 0
        %1064 = vmatpush1.bf16.msra.mxu0 0
        %1065 = vmatprep.subr.bf16.mxu0 0
        %1066 = vmatpush1.bf16.msra.mxu0 0
        %1067 = vmatprep.subr.bf16.mxu0 0
        %1068 = vmatpush1.bf16.msra.mxu0 0
        %1069 = vmatprep.subr.bf16.mxu0 0
        %1070 = vmatpush1.bf16.msra.mxu0 0
        %1071 = vmatprep.subr.bf16.mxu0 0
        %1072 = vmatpush1.bf16.msra.mxu0 0
        %1073 = vmatprep.subr.bf16.mxu0 0
        %1074 = vmatpush1.bf16.msra.mxu0 0
        %1075 = vmatprep.subr.bf16.mxu0 0
        %1076 = vmatpush1.bf16.msra.mxu0 0
        %1077 = vmatprep.subr.bf16.mxu0 0
        %1078 = vmatpush1.bf16.msra.mxu0 0
        %1079 = vmatprep.subr.bf16.mxu0 0
        %1080 = vmatpush1.bf16.msra.mxu0 0
        %1081 = vmatprep.subr.bf16.mxu0 0
        %1082 = vmatpush1.bf16.msra.mxu0 0
        %1083 = vmatprep.subr.bf16.mxu0 0
        %1084 = vmatpush1.bf16.msra.mxu0 0
        %1085 = vmatprep.subr.bf16.mxu0 0
        %1086 = vmatpush1.bf16.msra.mxu0 0
        %1087 = vmatprep.mubr.bf16.mxu0 0
        %1088 = vmatmul.mubr.bf16.gmra.mrb[0].mxu0 %v1050
        %v1089 = vpop.f32.mrb[0].mxu0
        %v1090 = vadd.f32 0.0, %v1089
        %v1091 = vpop.f32.mrb[0].mxu0
        %v1092 = vpop.f32.mrb[0].mxu0
        %v1093 = vpop.f32.mrb[0].mxu0
        %1094 = vdwg.mxu0
        %v1095 = vpack.c.bf16 %v1090, %v1090
        %v1097 = vunpack.c.l.b16 %v1095
        %v1098 = vpack.c.b16 %v1097, %v1097
        %1099 = vrot.lane.b32.xlu0 %v1098, 16
        %v1100 = vpop.permute.xlu0 %1099
        %vm1102 = vcmask 191616
        %1103 = vst.msk [vmem:[#allocation4] sm:$0xf] %vm1102, %v1100
        %1104 = vrot.lane.b32.xlu0 %v747, 104
        %v1105 = vpop.permute.xlu0 %1104
        %1106 = vrot.lane.b32.xlu0 %v864, 104
        %v1107 = vpop.permute.xlu0 %1106
        %v1109 = vsel %vm750, %v1105, 0
        %v1112 = vsel %vm750, %v1107, 0
        %1114 = vmatprep.subr.bf16.mxu0 0
        %1115 = vmatpush1.bf16.xpose.msra.mxu0 %v1112
        %1116 = vmatprep.subr.bf16.mxu0 0
        %1117 = vmatpush1.bf16.xpose.msra.mxu0 0
        %1118 = vmatprep.subr.bf16.mxu0 0
        %1119 = vmatpush1.bf16.xpose.msra.mxu0 0
        %1120 = vmatprep.subr.bf16.mxu0 0
        %1121 = vmatpush1.bf16.xpose.msra.mxu0 0
        %1122 = vmatprep.subr.bf16.mxu0 0
        %1123 = vmatpush1.bf16.xpose.msra.mxu0 0
        %1124 = vmatprep.subr.bf16.mxu0 0
        %1125 = vmatpush1.bf16.xpose.msra.mxu0 0
        %1126 = vmatprep.subr.bf16.mxu0 0
        %1127 = vmatpush1.bf16.xpose.msra.mxu0 0
        %1128 = vmatprep.subr.bf16.mxu0 0
        %1129 = vmatpush1.bf16.xpose.msra.mxu0 0
        %1130 = vmatprep.subr.bf16.mxu0 0
        %1131 = vmatpush1.bf16.xpose.msra.mxu0 0
        %1132 = vmatprep.subr.bf16.mxu0 0
        %1133 = vmatpush1.bf16.xpose.msra.mxu0 0
        %1134 = vmatprep.subr.bf16.mxu0 0
        %1135 = vmatpush1.bf16.xpose.msra.mxu0 0
        %1136 = vmatprep.subr.bf16.mxu0 0
        %1137 = vmatpush1.bf16.xpose.msra.mxu0 0
        %1138 = vmatprep.subr.bf16.mxu0 0
        %1139 = vmatpush1.bf16.xpose.msra.mxu0 0
        %1140 = vmatprep.subr.bf16.mxu0 0
        %1141 = vmatpush1.bf16.xpose.msra.mxu0 0
        %1142 = vmatprep.subr.bf16.mxu0 0
        %1143 = vmatpush1.bf16.xpose.msra.mxu0 0
        %1144 = vmatprep.subr.bf16.mxu0 0
        %1145 = vmatpush1.bf16.xpose.msra.mxu0 0
        %1146 = vmatprep.mubr.bf16.mxu0 0
        %1147 = vmatmul.mubr.bf16.gmra.mrb[0].mxu0 %v1109
        %v1148 = vpop.f32.mrb[0].mxu0
        %v1149 = vadd.f32 0.0, %v1148
        %v1150 = vpop.f32.mrb[0].mxu0
        %v1151 = vpop.f32.mrb[0].mxu0
        %v1152 = vpop.f32.mrb[0].mxu0
        %1153 = vdwg.mxu0
        %v1154 = vsel %vm750, %v1149, -inf
        %1155 = vmax.xlane.f32.xlu0 %v1154
        %v1156 = vpop.xlane.xlu0 %1155
        %v1157 = vsub.f32 %v1149, %v1156
        %v1158 = vmul.f32 %v1157, 1.442695
        %v1159 = vpow.pop %v1158
        %v1160 = vsel %vm750, %v1159, 0.0
        %1161 = vadd.xlane.f32.xlu0 %v1160
        %v1162 = vpop.xlane.xlu0 %1161
        %v1163 = vrcp.pop %v1162
        %v1164 = vmul.f32 %v1159, %v1163
        %v1165 = vpack.c.bf16 %v1164, %v1164
        %1166 = vrot.lane.b32.xlu0 %v927, 104
        %v1167 = vpop.permute.xlu0 %1166
        %v1169 = vsel %vm750, %v1165, 0
        %v1172 = vsel %vm812, %v1167, 0
        %1174 = vmatprep.subr.bf16.mxu0 0
        %1175 = vmatpush1.bf16.msra.mxu0 %v1172
        %1176 = vmatprep.subr.bf16.mxu0 0
        %1177 = vmatpush1.bf16.msra.mxu0 0
        %1178 = vmatprep.subr.bf16.mxu0 0
        %1179 = vmatpush1.bf16.msra.mxu0 0
        %1180 = vmatprep.subr.bf16.mxu0 0
        %1181 = vmatpush1.bf16.msra.mxu0 0
        %1182 = vmatprep.subr.bf16.mxu0 0
        %1183 = vmatpush1.bf16.msra.mxu0 0
        %1184 = vmatprep.subr.bf16.mxu0 0
        %1185 = vmatpush1.bf16.msra.mxu0 0
        %1186 = vmatprep.subr.bf16.mxu0 0
        %1187 = vmatpush1.bf16.msra.mxu0 0
        %1188 = vmatprep.subr.bf16.mxu0 0
        %1189 = vmatpush1.bf16.msra.mxu0 0
        %1190 = vmatprep.subr.bf16.mxu0 0
        %1191 = vmatpush1.bf16.msra.mxu0 0
        %1192 = vmatprep.subr.bf16.mxu0 0
        %1193 = vmatpush1.bf16.msra.mxu0 0
        %1194 = vmatprep.subr.bf16.mxu0 0
        %1195 = vmatpush1.bf16.msra.mxu0 0
        %1196 = vmatprep.subr.bf16.mxu0 0
        %1197 = vmatpush1.bf16.msra.mxu0 0
        %1198 = vmatprep.subr.bf16.mxu0 0
        %1199 = vmatpush1.bf16.msra.mxu0 0
        %1200 = vmatprep.subr.bf16.mxu0 0
        %1201 = vmatpush1.bf16.msra.mxu0 0
        %1202 = vmatprep.subr.bf16.mxu0 0
        %1203 = vmatpush1.bf16.msra.mxu0 0
        %1204 = vmatprep.subr.bf16.mxu0 0
        %1205 = vmatpush1.bf16.msra.mxu0 0
        %1206 = vmatprep.mubr.bf16.mxu0 0
        %1207 = vmatmul.mubr.bf16.gmra.mrb[0].mxu0 %v1169
        %v1208 = vpop.f32.mrb[0].mxu0
        %v1209 = vadd.f32 0.0, %v1208
        %v1210 = vpop.f32.mrb[0].mxu0
        %v1211 = vpop.f32.mrb[0].mxu0
        %v1212 = vpop.f32.mrb[0].mxu0
        %1213 = vdwg.mxu0
        %v1214 = vpack.c.bf16 %v1209, %v1209
        %v1216 = vunpack.c.l.b16 %v1214
        %v1217 = vpack.c.b16 %v1216, %v1216
        %1218 = vrot.lane.b32.xlu0 %v1217, 24
        %v1219 = vpop.permute.xlu0 %1218
        %vm1221 = vcmask 257216
        %1222 = vst.msk [vmem:[#allocation4] sm:$0xf] %vm1221, %v1219
        %v1223 = vld [vmem:[#allocation4] sm:$0xf]
        %v1224 = vld [vmem:[#allocation14] sm:$0xf]
        %v1225 = vld [vmem:[#allocation14 + $0x4] sm:$0xf]
        %v1226 = vld [vmem:[#allocation14 + $0x8] sm:$0xf]
        %v1227 = vld [vmem:[#allocation14 + $0xc] sm:$0xf]
        %v1228 = vld [vmem:[%s10] sm:$0x1]
        %v1230 = vlaneseq
        %v1231 = vshrl.u32 %v1230, 7
        %v1232 = vsub.s32 0, %v1231
        %v1233 = vrot.slane %v1228, %v1232
        %v1239 = vunpack.c.l.b16 %v1224
        %v1240 = vunpack.c.l.b16 %v1225
        %v1241 = vunpack.c.l.b16 %v1226
        %v1242 = vunpack.c.l.b16 %v1227
        %v1243 = vpack.c.b16 %v1240, %v1239
        %v1244 = vpack.c.b16 %v1242, %v1241
        %v1248 = vsel %vm703, %v1223, 0
        %1250 = vmatprep.subr.bf16.mxu0 0
        %1251 = vmatpush1.bf16.msra.mxu0 %v1243
        %1252 = vmatprep.subr.bf16.mxu0 0
        %1253 = vmatpush1.bf16.msra.mxu0 %v1244
        %1254 = vmatprep.subr.bf16.mxu0 0
        %1255 = vmatpush1.bf16.msra.mxu0 0
        %1256 = vmatprep.subr.bf16.mxu0 0
        %1257 = vmatpush1.bf16.msra.mxu0 0
        %1258 = vmatprep.subr.bf16.mxu0 0
        %1259 = vmatpush1.bf16.msra.mxu0 0
        %1260 = vmatprep.subr.bf16.mxu0 0
        %1261 = vmatpush1.bf16.msra.mxu0 0
        %1262 = vmatprep.subr.bf16.mxu0 0
        %1263 = vmatpush1.bf16.msra.mxu0 0
        %1264 = vmatprep.subr.bf16.mxu0 0
        %1265 = vmatpush1.bf16.msra.mxu0 0
        %1266 = vmatprep.subr.bf16.mxu0 0
        %1267 = vmatpush1.bf16.msra.mxu0 0
        %1268 = vmatprep.subr.bf16.mxu0 0
        %1269 = vmatpush1.bf16.msra.mxu0 0
        %1270 = vmatprep.subr.bf16.mxu0 0
        %1271 = vmatpush1.bf16.msra.mxu0 0
        %1272 = vmatprep.subr.bf16.mxu0 0
        %1273 = vmatpush1.bf16.msra.mxu0 0
        %1274 = vmatprep.subr.bf16.mxu0 0
        %1275 = vmatpush1.bf16.msra.mxu0 0
        %1276 = vmatprep.subr.bf16.mxu0 0
        %1277 = vmatpush1.bf16.msra.mxu0 0
        %1278 = vmatprep.subr.bf16.mxu0 0
        %1279 = vmatpush1.bf16.msra.mxu0 0
        %1280 = vmatprep.subr.bf16.mxu0 0
        %1281 = vmatpush1.bf16.msra.mxu0 0
        %1282 = vmatprep.mubr.bf16.mxu0 0
        %1283 = vmatmul.mubr.bf16.gmra.mrb[0].mxu0 %v1248
        %v1284 = vpop.f32.mrb[0].mxu0
        %v1285 = vadd.f32 %v1233, %v1284
        %v1286 = vpop.f32.mrb[0].mxu0
        %v1287 = vpop.f32.mrb[0].mxu0
        %v1288 = vpop.f32.mrb[0].mxu0
        %1289 = vdwg.mxu0
        %v1290 = vpack.c.bf16 %v1285, %v1285
        %vm1291 = vcmask 257024
        %1292 = vst.msk [vmem:[%s533] sm:$0xf] %vm1291, %v1290
        %s1293 = sand.u32 %s303, 1
        %s1294 = scalar_lea.sflag [#allocation7], %s1293
        %s1295 = sand.u32 %s303, 1
        %s1296 = smul.addr %s1295, 4
        %s1297 = scalar_lea.vmem [#allocation16], %s1296
        // Predicated region
        $region93: #{tpu_custom_call.1} parent=63 // pred_check
          %p1298 = pneg %p313
        $region94: #{tpu_custom_call.1} parent=63 // pred_check_branch
          %1300 = sbr.rel (%p1298) target = $region96
        $region95: #{tpu_custom_call.1} parent=63 // pred_region
          %s1302 = ssub.s32 64, 64
          %1303 = vsyncadd %s1294, %s1302
          %s1304 = sadd.s32 %s38, %s37
          %s1305 = smul.addr %s1304, 64
          %s1306 = scalar_lea.hbm %s11, %s1305
          %s1308 = sshll.u32 %s1297, 4
          %s1309 = int_to_ptr.vmem [resolvable:$true] %s1308
          %1311 = dma.vmem_to_hbm [thread:$0]  %s1309, 64, %s1306, %s1294
        $region96: #{tpu_custom_call.1} parent=63 // pred_fallthru
          _
      $region64: #{tpu_custom_call.1} parent=5 // pred_fallthru
        _
      %p1312 = scmp.le.s32.totalorder 2, %s28
      // Predicated region
      $region97: #{tpu_custom_call.1} parent=5 // pred_check
        %p1313 = pneg %p1312
      $region98: #{tpu_custom_call.1} parent=5 // pred_check_branch
        %1315 = sbr.rel (%p1313) target = $region100
      $region99: #{tpu_custom_call.1} parent=5 // pred_region
        %s1316 = ssub.s32 %s28, 2
        // Predicated region
        $region101: #{tpu_custom_call.1} parent=99 // pred_check
          %p1317 = pneg %p319
        $region102: #{tpu_custom_call.1} parent=99 // pred_check_branch
          %1319 = sbr.rel (%p1317) target = $region104
        $region103: #{tpu_custom_call.1} parent=99 // pred_region
          %s1320 = sand.u32 %s304, 1
          %s1321 = scalar_lea.sflag [#allocation7], %s1320
          %s1322 = sand.u32 %s304, 1
          %s1323 = smul.addr %s1322, 4
          %s1324 = scalar_lea.vmem [#allocation16], %s1323
          %1325 = dma.done %s1321, 64
        $region104: #{tpu_custom_call.1} parent=99 // pred_fallthru
          _
      $region100: #{tpu_custom_call.1} parent=5 // pred_fallthru
        _
    $region6: #{tpu_custom_call.1} parent=1 // loop_footer
      %s32 = sadd.s32 1, %s28
    $region7: #{tpu_custom_call.1} parent=1 // loop_footer_branch
      %27 = sbr.rel target = $region3
    $region8: #{tpu_custom_call.1} parent=1 // loop_exit
      _
    %1326 = vsyncpa [#allocation6], 1
    %s1327 = scalar_lea.sflag [#allocation6], 1
    %1328 = vsyncpa %s1327, 1
    %1329 = vsyncpa [#allocation9], 1
    %s1330 = scalar_lea.sflag [#allocation9], 1
    %1331 = vsyncpa %s1330, 1
    %1332 = vsyncpa [#allocation12], 1
    %1333 = vsyncpa [#allocation15], 1
    %1334 = vsyncpa [#allocation7], 1
    %s1335 = scalar_lea.sflag [#allocation7], 1
    %1336 = vsyncpa %s1335, 1

</llo_original>
